<compile_context>
chip_gen: v5e
topology: v5e:2x2
jax: 0.10.0
libtpu: 0.0.40
codegen_flags: <defaults>
</compile_context>

<pallas_src>
import functools

import numpy as np

import jax
import jax.numpy as jnp
from jax.experimental import pallas as pl
from jax.experimental.pallas import tpu as pltpu


_VMEM = pl.BlockSpec(memory_space=pltpu.MemorySpace.VMEM)


# ----------------------------------------------------------------------------
# Pallas kernels
# ----------------------------------------------------------------------------

def _conv_pool_relu_kernel(p_ref, wt_ref, b_ref, o_ref, *, m2):
    """Conv2d (im2col matmul) + MaxPool2d(2,2) + ReLU.

    p:  (4*m2, K) patch matrix, rows ordered (pool_offset, n, oh2, ow2),
        columns ordered (cin, kh, kw).
    wt: (K, Cout) pre-transposed conv weight.
    b:  (1, Cout) bias.
    o:  (m2, Cout).
    """
    # One long MXU matmul over all four pooling offsets ...
    y = jnp.dot(p_ref[...], wt_ref[...], preferred_element_type=jnp.float32)
    # ... then max-reduce over the four offset blocks.  Bias is a per-channel
    # constant shift (commutes with max), so it is added after the max; ReLU last.
    m = jnp.maximum(jnp.maximum(y[:m2], y[m2:2 * m2]),
                    jnp.maximum(y[2 * m2:3 * m2], y[3 * m2:]))
    o_ref[...] = jnp.maximum(m + b_ref[...], 0.0)


def _head_kernel(x_ref, g_ref, flag_ref,
                 fc1_wt_ref, fc1_b_ref, fc2_wt_ref, fc2_b_ref,
                 fc3_wt_ref, fc3_b_ref, cent_ref, cent_t_ref,
                 add1_wt_a_ref, add1_wt_b_ref, add1_b_ref,
                 add2_wt_ref, add2_b_ref, o_ref,
                 *, b, inv_tau, beta, hard):
    """Fused post-encoder chain.

    Rows 0..b-1 of x are the x1 stream, rows b..2b-1 are the x2 stream.
    encoder2 (fc1/fc2/fc3) -> discretize (gumbel-softmax over centroid logits,
    project back onto centroids) -> alpha mix -> pair the streams ->
    add MLP -> LogSoftmax(x @ centroids^T).
    """
    def dense(v, wt_ref, bias_ref, relu):
        y = jnp.dot(v, wt_ref[...], preferred_element_type=jnp.float32)
        y = y + bias_ref[...]
        return jnp.maximum(y, 0.0) if relu else y

    # ---- encoder2 ----
    h = dense(x_ref[...], fc1_wt_ref, fc1_b_ref, True)        # (2b, 120)
    h = dense(h, fc2_wt_ref, fc2_b_ref, True)                 # (2b, 84)
    h = dense(h, fc3_wt_ref, fc3_b_ref, False)                # (2b, 84)

    # ---- discretize ----
    # TODO(synk): gumbel_softmax is external/undefined in the source module;
    # implemented as softmax((logits + beta * gumbel_noise) / tau) with an
    # optional hard (forward-only one-hot of the max, ties not broken) variant.
    logits = jnp.dot(h, cent_t_ref[...],
                     preferred_element_type=jnp.float32)      # (2b, 19)
    z = (logits + beta * g_ref[...]) * inv_tau
    z = z - jnp.max(z, axis=-1, keepdims=True)
    e = jnp.exp(z)
    a = e / jnp.sum(e, axis=-1, keepdims=True)
    if hard:
        a = jnp.where(a >= jnp.max(a, axis=-1, keepdims=True), 1.0, 0.0)
    h_d = jnp.dot(a, cent_ref[...],
                  preferred_element_type=jnp.float32)         # (2b, 84)

    # ---- alpha mix: flag==1 -> h + h_d ; flag==0 -> h_d ----
    hm = flag_ref[...] * h + h_d                              # (2b, 84)

    # ---- pair the streams: concat(x1, x2) @ W1 == x1 @ W1a + x2 @ W1b ----
    y = jnp.dot(hm[:b], add1_wt_a_ref[...], preferred_element_type=jnp.float32)
    y = y + jnp.dot(hm[b:], add1_wt_b_ref[...], preferred_element_type=jnp.float32)
    y = jnp.maximum(y + add1_b_ref[...], 0.0)                 # (b, 168)
    y = dense(y, add2_wt_ref, add2_b_ref, True)               # (b, 84)

    # ---- classifier: LogSoftmax(y @ centroids^T, axis=1) ----
    lg = jnp.dot(y, cent_t_ref[...],
                 preferred_element_type=jnp.float32)          # (b, 19)
    lg = lg - jnp.max(lg, axis=-1, keepdims=True)
    o_ref[...] = lg - jnp.log(jnp.sum(jnp.exp(lg), axis=-1, keepdims=True))


# ----------------------------------------------------------------------------
# pallas_call wrappers
# ----------------------------------------------------------------------------

def conv_pool_relu(patches, wt, b):
    m2 = patches.shape[0] // 4
    cout = wt.shape[1]
    return pl.pallas_call(
        functools.partial(_conv_pool_relu_kernel, m2=m2),
        out_shape=jax.ShapeDtypeStruct((m2, cout), jnp.float32),
        in_specs=[_VMEM] * 3,
        out_specs=_VMEM,
    )(patches, wt, b)


def head(x, gumbel, flags, pp, *, tau, beta, hard):
    b = x.shape[0] // 2
    n_cls = pp["cent"].shape[0]
    kernel = functools.partial(_head_kernel, b=b, inv_tau=float(1.0 / tau),
                               beta=float(beta), hard=bool(hard))
    return pl.pallas_call(
        kernel,
        out_shape=jax.ShapeDtypeStruct((b, n_cls), jnp.float32),
        in_specs=[_VMEM] * 16,
        out_specs=_VMEM,
    )(x, gumbel, flags,
      pp["fc1_wt"], pp["fc1_b"], pp["fc2_wt"], pp["fc2_b"],
      pp["fc3_wt"], pp["fc3_b"], pp["cent"], pp["cent_t"],
      pp["add1_wt_a"], pp["add1_wt_b"], pp["add1_b"],
      pp["add2_wt"], pp["add2_b"])


# ----------------------------------------------------------------------------
# Glue: im2col gather indices (static numpy) and parameter prep (run once)
# ----------------------------------------------------------------------------

def _im2col_pool_indices(n, c, h, w, k):
    """Flat gather indices for Conv2d(k) + MaxPool2d(2) patches.

    Source array is (n, h, w, c) channel-last, flattened to 1D.
    Returns int32 (4 * n * oh2 * ow2, c*k*k); rows ordered
    (pool_offset, n, oh2, ow2), columns ordered (cin, kh, kw) to match
    torch conv weight.reshape(Cout, Cin*KH*KW).
    """
    oh2 = (h - k + 1) // 2
    ow2 = (w - k + 1) // 2
    dh = np.array([0, 0, 1, 1]).reshape(4, 1, 1, 1, 1, 1, 1)
    dw = np.array([0, 1, 0, 1]).reshape(4, 1, 1, 1, 1, 1, 1)
    ni = np.arange(n).reshape(1, n, 1, 1, 1, 1, 1)
    yy = np.arange(oh2).reshape(1, 1, oh2, 1, 1, 1, 1)
    xx = np.arange(ow2).reshape(1, 1, 1, ow2, 1, 1, 1)
    ci = np.arange(c).reshape(1, 1, 1, 1, c, 1, 1)
    kh = np.arange(k).reshape(1, 1, 1, 1, 1, k, 1)
    kw = np.arange(k).reshape(1, 1, 1, 1, 1, 1, k)
    iy = 2 * yy + dh + kh
    ix = 2 * xx + dw + kw
    idx = ((ni * h + iy) * w + ix) * c + ci
    idx = np.broadcast_to(idx, (4, n, oh2, ow2, c, k, k))
    return np.ascontiguousarray(idx).reshape(
        4 * n * oh2 * ow2, c * k * k).astype(np.int32)


def prep_params(p):
    """One-time weight prep: transposes, bias reshapes, fc1 column permutation
    (absorbs the torch (c,y,x) flatten vs our (y,x,c) encoder layout), and the
    add1 weight split (absorbs the concat([x1, x2], -1))."""
    fc1_perm = p["fc1_w"].reshape(120, 16, 4, 4).transpose(0, 2, 3, 1).reshape(120, 256)
    return {
        "conv1_wt": p["conv1_w"].reshape(6, 25).T,       # (25, 6)
        "conv1_b": p["conv1_b"].reshape(1, 6),
        "conv2_wt": p["conv2_w"].reshape(16, 150).T,     # (150, 16)
        "conv2_b": p["conv2_b"].reshape(1, 16),
        "fc1_wt": fc1_perm.T, "fc1_b": p["fc1_b"].reshape(1, -1),
        "fc2_wt": p["fc2_w"].T, "fc2_b": p["fc2_b"].reshape(1, -1),
        "fc3_wt": p["fc3_w"].T, "fc3_b": p["fc3_b"].reshape(1, -1),
        "cent": p["centroids"], "cent_t": p["centroids"].T,
        "add1_wt_a": p["add1_w"][:, :84].T,              # (84, 168)
        "add1_wt_b": p["add1_w"][:, 84:].T,              # (84, 168)
        "add1_b": p["add1_b"].reshape(1, -1),
        "add2_wt": p["add2_w"].T, "add2_b": p["add2_b"].reshape(1, -1),
    }


# ----------------------------------------------------------------------------
# Forward pass
# ----------------------------------------------------------------------------

@functools.partial(jax.jit, static_argnames=("tau", "beta", "hard"))
def mnist_net_forward(pp, x1, x2, alpha, tau, beta, hard, key):
    b = x1.shape[0]
    n2 = 2 * b

    # Both streams share the encoder weights: run them as one batch of 2B images.
    x = jnp.concatenate([x1, x2], axis=0).astype(jnp.float32)   # (2B, 1, 28, 28)

    # encoder stage 1: Conv2d(1, 6, 5) + MaxPool2d(2) + ReLU   28x28 -> 12x12
    idx1 = _im2col_pool_indices(n2, 1, 28, 28, 5)               # static constant
    p1 = jnp.take(x.reshape(-1), idx1, axis=0)                  # (4*n2*144, 25)
    h1 = conv_pool_relu(p1, pp["conv1_wt"], pp["conv1_b"])      # (n2*144, 6)

    # encoder stage 2: Conv2d(6, 16, 5) + MaxPool2d(2) + ReLU   12x12 -> 4x4
    # (channel-last layout of h1 is folded directly into the gather indices)
    idx2 = _im2col_pool_indices(n2, 6, 12, 12, 5)               # static constant
    p2 = jnp.take(h1.reshape(-1), idx2, axis=0)                 # (4*n2*16, 150)
    h2 = conv_pool_relu(p2, pp["conv2_wt"], pp["conv2_b"])      # (n2*16, 16)

    # flatten in (y, x, c) order; fc1 weight was pre-permuted to match torch's
    # (c, y, x) .view(-1, 16*4*4) ordering.
    enc = h2.reshape(n2, 16 * 4 * 4)                            # (2B, 256)

    # gumbel noise + alpha-mix flags for the fused head kernel
    kg, kb1, kb2 = jax.random.split(key, 3)
    n_cent = pp["cent"].shape[0]
    u = jax.random.uniform(kg, (n2, n_cent), jnp.float32, 1e-6, 1.0 - 1e-6)
    gumbel = -jnp.log(-jnp.log(u))
    # TODO(synk): torch uses host-side np.random.random() > alpha; replaced by
    # reproducible jax.random draws folded into a 0/1 mix flag per stream.
    r = jnp.stack([jax.random.uniform(kb1, ()), jax.random.uniform(kb2, ())])
    flags = jnp.repeat((r > alpha).astype(jnp.float32)[:, None], b, axis=0)  # (2B, 1)

    return head(enc, gumbel, flags, pp, tau=tau, beta=beta, hard=hard)       # (B, 19)


# ----------------------------------------------------------------------------
# Parameter init + demo
# ----------------------------------------------------------------------------

def init_params(key):
    ks = jax.random.split(key, 16)

    def nrm(k, shape, scale=0.1):
        return (scale * jax.random.normal(k, shape)).astype(jnp.float32)

    return {
        "centroids": nrm(ks[0], (19, 84)),
        "conv1_w": nrm(ks[1], (6, 1, 5, 5)),
        "conv1_b": nrm(ks[2], (6,)),
        "conv2_w": nrm(ks[3], (16, 6, 5, 5)),
        "conv2_b": nrm(ks[4], (16,)),
        "fc1_w": nrm(ks[5], (120, 256)), "fc1_b": nrm(ks[6], (120,)),
        "fc2_w": nrm(ks[7], (84, 120)), "fc2_b": nrm(ks[8], (84,)),
        "fc3_w": nrm(ks[9], (84, 84)), "fc3_b": nrm(ks[10], (84,)),
        "add1_w": nrm(ks[11], (168, 168)), "add1_b": nrm(ks[12], (168,)),
        "add2_w": nrm(ks[13], (84, 168)), "add2_b": nrm(ks[14], (84,)),
    }


if __name__ == "__main__":
    key = jax.random.PRNGKey(0)
    kp, kx1, kx2, kfwd = jax.random.split(key, 4)

    params = init_params(kp)
    prepped = prep_params(params)        # one-time weight prep

    # Spatial size is fixed by the module (16*4*4 flatten => 28x28 input).
    x1 = jax.random.normal(kx1, (2, 1, 28, 28), jnp.float32)
    x2 = jax.random.normal(kx2, (2, 1, 28, 28), jnp.float32)

    out = mnist_net_forward(prepped, x1, x2, 0.5,
                            tau=1.0, beta=1.0, hard=False, key=kfwd)
    out = jax.block_until_ready(out)

    assert out.shape == (2, 19) and out.dtype == jnp.float32
    assert bool(jnp.all(jnp.isfinite(out)))
    # log-softmax rows must exponentiate-sum to 1
    row_sums = jnp.exp(out).sum(axis=1)
    assert bool(jnp.all(jnp.abs(row_sums - 1.0) < 1e-4))
    print("KERNEL_OK")
</pallas_src>

<mosaic_0001>
module attributes {stable_mosaic.version = 11 : i64} {
  func.func @_conv_pool_relu_kernel(%arg0: memref<2304x25xf32, #tpu.memory_space<vmem>>, %arg1: memref<25x6xf32, #tpu.memory_space<vmem>>, %arg2: memref<1x6xf32, #tpu.memory_space<vmem>>, %arg3: memref<576x6xf32, #tpu.memory_space<vmem>>) attributes {dimension_semantics = [], scalar_prefetch = 0 : i64, scratch_operands = 0 : i64, tpu.core_type = #tpu.core_type<tc>} {
    %c0 = arith.constant 0 : index
    %c0_0 = arith.constant 0 : index
    %0 = vector.load %arg0[%c0, %c0_0] : memref<2304x25xf32, #tpu.memory_space<vmem>>, vector<2304x25xf32>
    %c0_1 = arith.constant 0 : index
    %c0_2 = arith.constant 0 : index
    %1 = vector.load %arg1[%c0_1, %c0_2] : memref<25x6xf32, #tpu.memory_space<vmem>>, vector<25x6xf32>
    %cst = arith.constant dense<0.000000e+00> : vector<2304x6xf32>
    %2 = tpu.matmul %0, %1, %cst {dimension_numbers = #tpu.dot_dimension_numbers<[1], [0], [0], [1], [0, 0, 1, 1], [], []>} : vector<2304x25xf32>, vector<25x6xf32>, vector<2304x6xf32> -> vector<2304x6xf32>
    %3 = vector.extract_strided_slice %2 {offsets = [0, 0], sizes = [576, 6], strides = [1, 1]} : vector<2304x6xf32> to vector<576x6xf32>
    %4 = vector.extract_strided_slice %2 {offsets = [576, 0], sizes = [576, 6], strides = [1, 1]} : vector<2304x6xf32> to vector<576x6xf32>
    %5 = arith.maximumf %3, %4 : vector<576x6xf32>
    %6 = vector.extract_strided_slice %2 {offsets = [1152, 0], sizes = [576, 6], strides = [1, 1]} : vector<2304x6xf32> to vector<576x6xf32>
    %7 = vector.extract_strided_slice %2 {offsets = [1728, 0], sizes = [576, 6], strides = [1, 1]} : vector<2304x6xf32> to vector<576x6xf32>
    %8 = arith.maximumf %6, %7 : vector<576x6xf32>
    %9 = arith.maximumf %5, %8 : vector<576x6xf32>
    %c0_3 = arith.constant 0 : index
    %c0_4 = arith.constant 0 : index
    %10 = vector.load %arg2[%c0_3, %c0_4] : memref<1x6xf32, #tpu.memory_space<vmem>>, vector<1x6xf32>
    %11 = vector.broadcast %10 : vector<1x6xf32> to vector<576x6xf32>
    %12 = arith.addf %9, %11 : vector<576x6xf32>
    %cst_5 = arith.constant 0.000000e+00 : f32
    %13 = vector.broadcast %cst_5 : f32 to vector<576x6xf32>
    %14 = arith.maximumf %12, %13 : vector<576x6xf32>
    %c0_6 = arith.constant 0 : index
    %c0_7 = arith.constant 0 : index
    %15 = vector.load %arg3[%c0_6, %c0_7] : memref<576x6xf32, #tpu.memory_space<vmem>>, vector<576x6xf32>
    tpu.vector_store %arg3[%c0_6, %c0_7], %14 {strides = array<i32>} : memref<576x6xf32, #tpu.memory_space<vmem>>, vector<576x6xf32>,
    return
  }
}

module attributes {stable_mosaic.version = 11 : i64} {
  func.func @_conv_pool_relu_kernel(%arg0: memref<256x150xf32, #tpu.memory_space<vmem>>, %arg1: memref<150x16xf32, #tpu.memory_space<vmem>>, %arg2: memref<1x16xf32, #tpu.memory_space<vmem>>, %arg3: memref<64x16xf32, #tpu.memory_space<vmem>>) attributes {dimension_semantics = [], scalar_prefetch = 0 : i64, scratch_operands = 0 : i64, tpu.core_type = #tpu.core_type<tc>} {
    %c0 = arith.constant 0 : index
    %c0_0 = arith.constant 0 : index
    %0 = vector.load %arg0[%c0, %c0_0] : memref<256x150xf32, #tpu.memory_space<vmem>>, vector<256x150xf32>
    %c0_1 = arith.constant 0 : index
    %c0_2 = arith.constant 0 : index
    %1 = vector.load %arg1[%c0_1, %c0_2] : memref<150x16xf32, #tpu.memory_space<vmem>>, vector<150x16xf32>
    %cst = arith.constant dense<0.000000e+00> : vector<256x16xf32>
    %2 = tpu.matmul %0, %1, %cst {dimension_numbers = #tpu.dot_dimension_numbers<[1], [0], [0], [1], [0, 0, 1, 1], [], []>} : vector<256x150xf32>, vector<150x16xf32>, vector<256x16xf32> -> vector<256x16xf32>
    %3 = vector.extract_strided_slice %2 {offsets = [0, 0], sizes = [64, 16], strides = [1, 1]} : vector<256x16xf32> to vector<64x16xf32>
    %4 = vector.extract_strided_slice %2 {offsets = [64, 0], sizes = [64, 16], strides = [1, 1]} : vector<256x16xf32> to vector<64x16xf32>
    %5 = arith.maximumf %3, %4 : vector<64x16xf32>
    %6 = vector.extract_strided_slice %2 {offsets = [128, 0], sizes = [64, 16], strides = [1, 1]} : vector<256x16xf32> to vector<64x16xf32>
    %7 = vector.extract_strided_slice %2 {offsets = [192, 0], sizes = [64, 16], strides = [1, 1]} : vector<256x16xf32> to vector<64x16xf32>
    %8 = arith.maximumf %6, %7 : vector<64x16xf32>
    %9 = arith.maximumf %5, %8 : vector<64x16xf32>
    %c0_3 = arith.constant 0 : index
    %c0_4 = arith.constant 0 : index
    %10 = vector.load %arg2[%c0_3, %c0_4] : memref<1x16xf32, #tpu.memory_space<vmem>>, vector<1x16xf32>
    %11 = vector.broadcast %10 : vector<1x16xf32> to vector<64x16xf32>
    %12 = arith.addf %9, %11 : vector<64x16xf32>
    %cst_5 = arith.constant 0.000000e+00 : f32
    %13 = vector.broadcast %cst_5 : f32 to vector<64x16xf32>
    %14 = arith.maximumf %12, %13 : vector<64x16xf32>
    %c0_6 = arith.constant 0 : index
    %c0_7 = arith.constant 0 : index
    %15 = vector.load %arg3[%c0_6, %c0_7] : memref<64x16xf32, #tpu.memory_space<vmem>>, vector<64x16xf32>
    tpu.vector_store %arg3[%c0_6, %c0_7], %14 {strides = array<i32>} : memref<64x16xf32, #tpu.memory_space<vmem>>, vector<64x16xf32>,
    return
  }
}

module attributes {stable_mosaic.version = 11 : i64} {
  func.func @_head_kernel(%arg0: memref<4x256xf32, #tpu.memory_space<vmem>>, %arg1: memref<4x19xf32, #tpu.memory_space<vmem>>, %arg2: memref<4x1xf32, #tpu.memory_space<vmem>>, %arg3: memref<256x120xf32, #tpu.memory_space<vmem>>, %arg4: memref<1x120xf32, #tpu.memory_space<vmem>>, %arg5: memref<120x84xf32, #tpu.memory_space<vmem>>, %arg6: memref<1x84xf32, #tpu.memory_space<vmem>>, %arg7: memref<84x84xf32, #tpu.memory_space<vmem>>, %arg8: memref<1x84xf32, #tpu.memory_space<vmem>>, %arg9: memref<19x84xf32, #tpu.memory_space<vmem>>, %arg10: memref<84x19xf32, #tpu.memory_space<vmem>>, %arg11: memref<84x168xf32, #tpu.memory_space<vmem>>, %arg12: memref<84x168xf32, #tpu.memory_space<vmem>>, %arg13: memref<1x168xf32, #tpu.memory_space<vmem>>, %arg14: memref<168x84xf32, #tpu.memory_space<vmem>>, %arg15: memref<1x84xf32, #tpu.memory_space<vmem>>, %arg16: memref<2x19xf32, #tpu.memory_space<vmem>>) attributes {dimension_semantics = [], scalar_prefetch = 0 : i64, scratch_operands = 0 : i64, tpu.core_type = #tpu.core_type<tc>} {
    %c0 = arith.constant 0 : index
    %c0_0 = arith.constant 0 : index
    %0 = vector.load %arg0[%c0, %c0_0] : memref<4x256xf32, #tpu.memory_space<vmem>>, vector<4x256xf32>
    %c0_1 = arith.constant 0 : index
    %c0_2 = arith.constant 0 : index
    %1 = vector.load %arg3[%c0_1, %c0_2] : memref<256x120xf32, #tpu.memory_space<vmem>>, vector<256x120xf32>
    %cst = arith.constant dense<0.000000e+00> : vector<4x120xf32>
    %2 = tpu.matmul %0, %1, %cst {dimension_numbers = #tpu.dot_dimension_numbers<[1], [0], [0], [1], [0, 0, 1, 1], [], []>} : vector<4x256xf32>, vector<256x120xf32>, vector<4x120xf32> -> vector<4x120xf32>
    %c0_3 = arith.constant 0 : index
    %c0_4 = arith.constant 0 : index
    %3 = vector.load %arg4[%c0_3, %c0_4] : memref<1x120xf32, #tpu.memory_space<vmem>>, vector<1x120xf32>
    %4 = vector.broadcast %3 : vector<1x120xf32> to vector<4x120xf32>
    %5 = arith.addf %2, %4 : vector<4x120xf32>
    %cst_5 = arith.constant 0.000000e+00 : f32
    %6 = vector.broadcast %cst_5 : f32 to vector<4x120xf32>
    %7 = arith.maximumf %5, %6 : vector<4x120xf32>
    %c0_6 = arith.constant 0 : index
    %c0_7 = arith.constant 0 : index
    %8 = vector.load %arg5[%c0_6, %c0_7] : memref<120x84xf32, #tpu.memory_space<vmem>>, vector<120x84xf32>
    %cst_8 = arith.constant dense<0.000000e+00> : vector<4x84xf32>
    %9 = tpu.matmul %7, %8, %cst_8 {dimension_numbers = #tpu.dot_dimension_numbers<[1], [0], [0], [1], [0, 0, 1, 1], [], []>} : vector<4x120xf32>, vector<120x84xf32>, vector<4x84xf32> -> vector<4x84xf32>
    %c0_9 = arith.constant 0 : index
    %c0_10 = arith.constant 0 : index
    %10 = vector.load %arg6[%c0_9, %c0_10] : memref<1x84xf32, #tpu.memory_space<vmem>>, vector<1x84xf32>
    %11 = vector.broadcast %10 : vector<1x84xf32> to vector<4x84xf32>
    %12 = arith.addf %9, %11 : vector<4x84xf32>
    %cst_11 = arith.constant 0.000000e+00 : f32
    %13 = vector.broadcast %cst_11 : f32 to vector<4x84xf32>
    %14 = arith.maximumf %12, %13 : vector<4x84xf32>
    %c0_12 = arith.constant 0 : index
    %c0_13 = arith.constant 0 : index
    %15 = vector.load %arg7[%c0_12, %c0_13] : memref<84x84xf32, #tpu.memory_space<vmem>>, vector<84x84xf32>
    %cst_14 = arith.constant dense<0.000000e+00> : vector<4x84xf32>
    %16 = tpu.matmul %14, %15, %cst_14 {dimension_numbers = #tpu.dot_dimension_numbers<[1], [0], [0], [1], [0, 0, 1, 1], [], []>} : vector<4x84xf32>, vector<84x84xf32>, vector<4x84xf32> -> vector<4x84xf32>
    %c0_15 = arith.constant 0 : index
    %c0_16 = arith.constant 0 : index
    %17 = vector.load %arg8[%c0_15, %c0_16] : memref<1x84xf32, #tpu.memory_space<vmem>>, vector<1x84xf32>
    %18 = vector.broadcast %17 : vector<1x84xf32> to vector<4x84xf32>
    %19 = arith.addf %16, %18 : vector<4x84xf32>
    %c0_17 = arith.constant 0 : index
    %c0_18 = arith.constant 0 : index
    %20 = vector.load %arg10[%c0_17, %c0_18] : memref<84x19xf32, #tpu.memory_space<vmem>>, vector<84x19xf32>
    %cst_19 = arith.constant dense<0.000000e+00> : vector<4x19xf32>
    %21 = tpu.matmul %19, %20, %cst_19 {dimension_numbers = #tpu.dot_dimension_numbers<[1], [0], [0], [1], [0, 0, 1, 1], [], []>} : vector<4x84xf32>, vector<84x19xf32>, vector<4x19xf32> -> vector<4x19xf32>
    %c0_20 = arith.constant 0 : index
    %c0_21 = arith.constant 0 : index
    %22 = vector.load %arg1[%c0_20, %c0_21] : memref<4x19xf32, #tpu.memory_space<vmem>>, vector<4x19xf32>
    %cst_22 = arith.constant 1.000000e+00 : f32
    %23 = vector.broadcast %cst_22 : f32 to vector<4x19xf32>
    %24 = arith.mulf %23, %22 : vector<4x19xf32>
    %25 = arith.addf %21, %24 : vector<4x19xf32>
    %cst_23 = arith.constant 1.000000e+00 : f32
    %26 = vector.broadcast %cst_23 : f32 to vector<4x19xf32>
    %27 = arith.mulf %25, %26 : vector<4x19xf32>
    %cst_24 = arith.constant dense<0xFF800000> : vector<4xf32>
    %28 = vector.multi_reduction <maximumf>, %27, %cst_24 [1] : vector<4x19xf32> to vector<4xf32>
    %29 = vector.shape_cast %28 : vector<4xf32> to vector<4x1xf32>
    %30 = vector.broadcast %29 : vector<4x1xf32> to vector<4x19xf32>
    %31 = arith.subf %27, %30 : vector<4x19xf32>
    %32 = math.exp %31 : vector<4x19xf32>
    %cst_25 = arith.constant dense<0.000000e+00> : vector<4xf32>
    %33 = vector.multi_reduction <add>, %32, %cst_25 [1] : vector<4x19xf32> to vector<4xf32>
    %34 = vector.shape_cast %33 : vector<4xf32> to vector<4x1xf32>
    %35 = vector.broadcast %34 : vector<4x1xf32> to vector<4x19xf32>
    %36 = arith.divf %32, %35 : vector<4x19xf32>
    %c0_26 = arith.constant 0 : index
    %c0_27 = arith.constant 0 : index
    %37 = vector.load %arg9[%c0_26, %c0_27] : memref<19x84xf32, #tpu.memory_space<vmem>>, vector<19x84xf32>
    %cst_28 = arith.constant dense<0.000000e+00> : vector<4x84xf32>
    %38 = tpu.matmul %36, %37, %cst_28 {dimension_numbers = #tpu.dot_dimension_numbers<[1], [0], [0], [1], [0, 0, 1, 1], [], []>} : vector<4x19xf32>, vector<19x84xf32>, vector<4x84xf32> -> vector<4x84xf32>
    %c0_29 = arith.constant 0 : index
    %c0_30 = arith.constant 0 : index
    %39 = vector.load %arg2[%c0_29, %c0_30] : memref<4x1xf32, #tpu.memory_space<vmem>>, vector<4x1xf32>
    %40 = vector.broadcast %39 : vector<4x1xf32> to vector<4x84xf32>
    %41 = arith.mulf %40, %19 : vector<4x84xf32>
    %42 = arith.addf %41, %38 : vector<4x84xf32>
    %43 = vector.extract_strided_slice %42 {offsets = [0, 0], sizes = [2, 84], strides = [1, 1]} : vector<4x84xf32> to vector<2x84xf32>
    %c0_31 = arith.constant 0 : index
    %c0_32 = arith.constant 0 : index
    %44 = vector.load %arg11[%c0_31, %c0_32] : memref<84x168xf32, #tpu.memory_space<vmem>>, vector<84x168xf32>
    %cst_33 = arith.constant dense<0.000000e+00> : vector<2x168xf32>
    %45 = tpu.matmul %43, %44, %cst_33 {dimension_numbers = #tpu.dot_dimension_numbers<[1], [0], [0], [1], [0, 0, 1, 1], [], []>} : vector<2x84xf32>, vector<84x168xf32>, vector<2x168xf32> -> vector<2x168xf32>
    %46 = vector.extract_strided_slice %42 {offsets = [2, 0], sizes = [2, 84], strides = [1, 1]} : vector<4x84xf32> to vector<2x84xf32>
    %c0_34 = arith.constant 0 : index
    %c0_35 = arith.constant 0 : index
    %47 = vector.load %arg12[%c0_34, %c0_35] : memref<84x168xf32, #tpu.memory_space<vmem>>, vector<84x168xf32>
    %cst_36 = arith.constant dense<0.000000e+00> : vector<2x168xf32>
    %48 = tpu.matmul %46, %47, %cst_36 {dimension_numbers = #tpu.dot_dimension_numbers<[1], [0], [0], [1], [0, 0, 1, 1], [], []>} : vector<2x84xf32>, vector<84x168xf32>, vector<2x168xf32> -> vector<2x168xf32>
    %49 = arith.addf %45, %48 : vector<2x168xf32>
    %c0_37 = arith.constant 0 : index
    %c0_38 = arith.constant 0 : index
    %50 = vector.load %arg13[%c0_37, %c0_38] : memref<1x168xf32, #tpu.memory_space<vmem>>, vector<1x168xf32>
    %51 = vector.broadcast %50 : vector<1x168xf32> to vector<2x168xf32>
    %52 = arith.addf %49, %51 : vector<2x168xf32>
    %cst_39 = arith.constant 0.000000e+00 : f32
    %53 = vector.broadcast %cst_39 : f32 to vector<2x168xf32>
    %54 = arith.maximumf %52, %53 : vector<2x168xf32>
    %c0_40 = arith.constant 0 : index
    %c0_41 = arith.constant 0 : index
    %55 = vector.load %arg14[%c0_40, %c0_41] : memref<168x84xf32, #tpu.memory_space<vmem>>, vector<168x84xf32>
    %cst_42 = arith.constant dense<0.000000e+00> : vector<2x84xf32>
    %56 = tpu.matmul %54, %55, %cst_42 {dimension_numbers = #tpu.dot_dimension_numbers<[1], [0], [0], [1], [0, 0, 1, 1], [], []>} : vector<2x168xf32>, vector<168x84xf32>, vector<2x84xf32> -> vector<2x84xf32>
    %c0_43 = arith.constant 0 : index
    %c0_44 = arith.constant 0 : index
    %57 = vector.load %arg15[%c0_43, %c0_44] : memref<1x84xf32, #tpu.memory_space<vmem>>, vector<1x84xf32>
    %58 = vector.broadcast %57 : vector<1x84xf32> to vector<2x84xf32>
    %59 = arith.addf %56, %58 : vector<2x84xf32>
    %cst_45 = arith.constant 0.000000e+00 : f32
    %60 = vector.broadcast %cst_45 : f32 to vector<2x84xf32>
    %61 = arith.maximumf %59, %60 : vector<2x84xf32>
    %c0_46 = arith.constant 0 : index
    %c0_47 = arith.constant 0 : index
    %62 = vector.load %arg10[%c0_46, %c0_47] : memref<84x19xf32, #tpu.memory_space<vmem>>, vector<84x19xf32>
    %cst_48 = arith.constant dense<0.000000e+00> : vector<2x19xf32>
    %63 = tpu.matmul %61, %62, %cst_48 {dimension_numbers = #tpu.dot_dimension_numbers<[1], [0], [0], [1], [0, 0, 1, 1], [], []>} : vector<2x84xf32>, vector<84x19xf32>, vector<2x19xf32> -> vector<2x19xf32>
    %cst_49 = arith.constant dense<0xFF800000> : vector<2xf32>
    %64 = vector.multi_reduction <maximumf>, %63, %cst_49 [1] : vector<2x19xf32> to vector<2xf32>
    %65 = vector.shape_cast %64 : vector<2xf32> to vector<2x1xf32>
    %66 = vector.broadcast %65 : vector<2x1xf32> to vector<2x19xf32>
    %67 = arith.subf %63, %66 : vector<2x19xf32>
    %68 = math.exp %67 : vector<2x19xf32>
    %cst_50 = arith.constant dense<0.000000e+00> : vector<2xf32>
    %69 = vector.multi_reduction <add>, %68, %cst_50 [1] : vector<2x19xf32> to vector<2xf32>
    %70 = vector.shape_cast %69 : vector<2xf32> to vector<2x1xf32>
    %71 = math.log %70 : vector<2x1xf32>
    %72 = vector.broadcast %71 : vector<2x1xf32> to vector<2x19xf32>
    %73 = arith.subf %67, %72 : vector<2x19xf32>
    %c0_51 = arith.constant 0 : index
    %c0_52 = arith.constant 0 : index
    %74 = vector.load %arg16[%c0_51, %c0_52] : memref<2x19xf32, #tpu.memory_space<vmem>>, vector<2x19xf32>
    tpu.vector_store %arg16[%c0_51, %c0_52], %73 {strides = array<i32>} : memref<2x19xf32, #tpu.memory_space<vmem>>, vector<2x19xf32>,
    return
  }
}

</mosaic_0001>

<llo_original>
// kernel: mnist_net_forward.5
$region0: #{mnist_net_forward.5}
  #allocation0 [shape = 'u32[]', space=smem, size = 0x4, offset = 0x4, fixed_abs, tag = 'smem constant byte address 0x4 - core index']
  #allocation1 [shape = 'u32[72,128]{1,0:T(1,128)}', space=vmem, size = 0x9000, scoped, tag = 'internal scratch']
  %s0 = inlined_call_operand.vmem [shape: f32[2304,25], index: 0, kind: input, shape index: {}]
  %s1 = inlined_call_operand.vmem [shape: f32[25,6], index: 1, kind: input, shape index: {}]
  %s2 = inlined_call_operand.vmem [shape: f32[1,6], index: 2, kind: input, shape index: {}]
  %s3 = inlined_call_operand.vmem [shape: f32[576,6], index: 3, kind: output, shape index: {}]
  %s4 = sld [smem:[#allocation0]]
  $region22: #{mnist_net_forward.5} parent=0
    _
  %s6 = ssub.s32 1, %s4
  %s7 = scalar_select 0, %s6, %s4
  // Predicated region
  $region2: #{mnist_net_forward.5} parent=0 // pred_check
    _
  $region3: #{mnist_net_forward.5} parent=0 // pred_check_branch
    %9 = sbr.rel (0) target = $region5
  $region4: #{mnist_net_forward.5} parent=0 // pred_region
    _
  $region5: #{mnist_net_forward.5} parent=0 // pred_fallthru
    _
  // Predicated region
  $region6: #{mnist_net_forward.5} parent=0 // pred_check
    _
  $region7: #{mnist_net_forward.5} parent=0 // pred_check_branch
    %11 = sbr.rel (0) target = $region9
  $region8: #{mnist_net_forward.5} parent=0 // pred_region
    _
  $region9: #{mnist_net_forward.5} parent=0 // pred_fallthru
    _
  // Predicated region
  $region10: #{mnist_net_forward.5} parent=0 // pred_check
    _
  $region11: #{mnist_net_forward.5} parent=0 // pred_check_branch
    %13 = sbr.rel (0) target = $region13
  $region12: #{mnist_net_forward.5} parent=0 // pred_region
    _
  $region13: #{mnist_net_forward.5} parent=0 // pred_fallthru
    _
  %v14 = vld [vmem:[%s0] sm:$0xff]
  %v15 = vld [vmem:[%s0 + $0x8] sm:$0xff]
  %v16 = vld [vmem:[%s0 + $0x10] sm:$0xff]
  %v17 = vld [vmem:[%s0 + $0x18] sm:$0xff]
  %v18 = vld [vmem:[%s0 + $0x20] sm:$0xff]
  %v19 = vld [vmem:[%s0 + $0x28] sm:$0xff]
  %v20 = vld [vmem:[%s0 + $0x30] sm:$0xff]
  %v21 = vld [vmem:[%s0 + $0x38] sm:$0xff]
  %v22 = vld [vmem:[%s0 + $0x40] sm:$0xff]
  %v23 = vld [vmem:[%s0 + $0x48] sm:$0xff]
  %v24 = vld [vmem:[%s0 + $0x50] sm:$0xff]
  %v25 = vld [vmem:[%s0 + $0x58] sm:$0xff]
  %v26 = vld [vmem:[%s0 + $0x60] sm:$0xff]
  %v27 = vld [vmem:[%s0 + $0x68] sm:$0xff]
  %v28 = vld [vmem:[%s0 + $0x70] sm:$0xff]
  %v29 = vld [vmem:[%s0 + $0x78] sm:$0xff]
  %v30 = vld [vmem:[%s0 + $0x80] sm:$0xff]
  %v31 = vld [vmem:[%s0 + $0x88] sm:$0xff]
  %v32 = vld [vmem:[%s0 + $0x90] sm:$0xff]
  %v33 = vld [vmem:[%s0 + $0x98] sm:$0xff]
  %v34 = vld [vmem:[%s0 + $0xa0] sm:$0xff]
  %v35 = vld [vmem:[%s0 + $0xa8] sm:$0xff]
  %v36 = vld [vmem:[%s0 + $0xb0] sm:$0xff]
  %v37 = vld [vmem:[%s0 + $0xb8] sm:$0xff]
  %v38 = vld [vmem:[%s0 + $0xc0] sm:$0xff]
  %v39 = vld [vmem:[%s0 + $0xc8] sm:$0xff]
  %v40 = vld [vmem:[%s0 + $0xd0] sm:$0xff]
  %v41 = vld [vmem:[%s0 + $0xd8] sm:$0xff]
  %v42 = vld [vmem:[%s0 + $0xe0] sm:$0xff]
  %v43 = vld [vmem:[%s0 + $0xe8] sm:$0xff]
  %v44 = vld [vmem:[%s0 + $0xf0] sm:$0xff]
  %v45 = vld [vmem:[%s0 + $0xf8] sm:$0xff]
  %v46 = vld [vmem:[%s0 + $0x100] sm:$0xff]
  %v47 = vld [vmem:[%s0 + $0x108] sm:$0xff]
  %v48 = vld [vmem:[%s0 + $0x110] sm:$0xff]
  %v49 = vld [vmem:[%s0 + $0x118] sm:$0xff]
  %v50 = vld [vmem:[%s0 + $0x120] sm:$0xff]
  %v51 = vld [vmem:[%s0 + $0x128] sm:$0xff]
  %v52 = vld [vmem:[%s0 + $0x130] sm:$0xff]
  %v53 = vld [vmem:[%s0 + $0x138] sm:$0xff]
  %v54 = vld [vmem:[%s0 + $0x140] sm:$0xff]
  %v55 = vld [vmem:[%s0 + $0x148] sm:$0xff]
  %v56 = vld [vmem:[%s0 + $0x150] sm:$0xff]
  %v57 = vld [vmem:[%s0 + $0x158] sm:$0xff]
  %v58 = vld [vmem:[%s0 + $0x160] sm:$0xff]
  %v59 = vld [vmem:[%s0 + $0x168] sm:$0xff]
  %v60 = vld [vmem:[%s0 + $0x170] sm:$0xff]
  %v61 = vld [vmem:[%s0 + $0x178] sm:$0xff]
  %v62 = vld [vmem:[%s0 + $0x180] sm:$0xff]
  %v63 = vld [vmem:[%s0 + $0x188] sm:$0xff]
  %v64 = vld [vmem:[%s0 + $0x190] sm:$0xff]
  %v65 = vld [vmem:[%s0 + $0x198] sm:$0xff]
  %v66 = vld [vmem:[%s0 + $0x1a0] sm:$0xff]
  %v67 = vld [vmem:[%s0 + $0x1a8] sm:$0xff]
  %v68 = vld [vmem:[%s0 + $0x1b0] sm:$0xff]
  %v69 = vld [vmem:[%s0 + $0x1b8] sm:$0xff]
  %v70 = vld [vmem:[%s0 + $0x1c0] sm:$0xff]
  %v71 = vld [vmem:[%s0 + $0x1c8] sm:$0xff]
  %v72 = vld [vmem:[%s0 + $0x1d0] sm:$0xff]
  %v73 = vld [vmem:[%s0 + $0x1d8] sm:$0xff]
  %v74 = vld [vmem:[%s0 + $0x1e0] sm:$0xff]
  %v75 = vld [vmem:[%s0 + $0x1e8] sm:$0xff]
  %v76 = vld [vmem:[%s0 + $0x1f0] sm:$0xff]
  %v77 = vld [vmem:[%s0 + $0x1f8] sm:$0xff]
  %v78 = vld [vmem:[%s0 + $0x200] sm:$0xff]
  %v79 = vld [vmem:[%s0 + $0x208] sm:$0xff]
  %v80 = vld [vmem:[%s0 + $0x210] sm:$0xff]
  %v81 = vld [vmem:[%s0 + $0x218] sm:$0xff]
  %v82 = vld [vmem:[%s0 + $0x220] sm:$0xff]
  %v83 = vld [vmem:[%s0 + $0x228] sm:$0xff]
  %v84 = vld [vmem:[%s0 + $0x230] sm:$0xff]
  %v85 = vld [vmem:[%s0 + $0x238] sm:$0xff]
  %v86 = vld [vmem:[%s0 + $0x240] sm:$0xff]
  %v87 = vld [vmem:[%s0 + $0x248] sm:$0xff]
  %v88 = vld [vmem:[%s0 + $0x250] sm:$0xff]
  %v89 = vld [vmem:[%s0 + $0x258] sm:$0xff]
  %v90 = vld [vmem:[%s0 + $0x260] sm:$0xff]
  %v91 = vld [vmem:[%s0 + $0x268] sm:$0xff]
  %v92 = vld [vmem:[%s0 + $0x270] sm:$0xff]
  %v93 = vld [vmem:[%s0 + $0x278] sm:$0xff]
  %v94 = vld [vmem:[%s0 + $0x280] sm:$0xff]
  %v95 = vld [vmem:[%s0 + $0x288] sm:$0xff]
  %v96 = vld [vmem:[%s0 + $0x290] sm:$0xff]
  %v97 = vld [vmem:[%s0 + $0x298] sm:$0xff]
  %v98 = vld [vmem:[%s0 + $0x2a0] sm:$0xff]
  %v99 = vld [vmem:[%s0 + $0x2a8] sm:$0xff]
  %v100 = vld [vmem:[%s0 + $0x2b0] sm:$0xff]
  %v101 = vld [vmem:[%s0 + $0x2b8] sm:$0xff]
  %v102 = vld [vmem:[%s0 + $0x2c0] sm:$0xff]
  %v103 = vld [vmem:[%s0 + $0x2c8] sm:$0xff]
  %v104 = vld [vmem:[%s0 + $0x2d0] sm:$0xff]
  %v105 = vld [vmem:[%s0 + $0x2d8] sm:$0xff]
  %v106 = vld [vmem:[%s0 + $0x2e0] sm:$0xff]
  %v107 = vld [vmem:[%s0 + $0x2e8] sm:$0xff]
  %v108 = vld [vmem:[%s0 + $0x2f0] sm:$0xff]
  %v109 = vld [vmem:[%s0 + $0x2f8] sm:$0xff]
  %v110 = vld [vmem:[%s0 + $0x300] sm:$0xff]
  %v111 = vld [vmem:[%s0 + $0x308] sm:$0xff]
  %v112 = vld [vmem:[%s0 + $0x310] sm:$0xff]
  %v113 = vld [vmem:[%s0 + $0x318] sm:$0xff]
  %v114 = vld [vmem:[%s0 + $0x320] sm:$0xff]
  %v115 = vld [vmem:[%s0 + $0x328] sm:$0xff]
  %v116 = vld [vmem:[%s0 + $0x330] sm:$0xff]
  %v117 = vld [vmem:[%s0 + $0x338] sm:$0xff]
  %v118 = vld [vmem:[%s0 + $0x340] sm:$0xff]
  %v119 = vld [vmem:[%s0 + $0x348] sm:$0xff]
  %v120 = vld [vmem:[%s0 + $0x350] sm:$0xff]
  %v121 = vld [vmem:[%s0 + $0x358] sm:$0xff]
  %v122 = vld [vmem:[%s0 + $0x360] sm:$0xff]
  %v123 = vld [vmem:[%s0 + $0x368] sm:$0xff]
  %v124 = vld [vmem:[%s0 + $0x370] sm:$0xff]
  %v125 = vld [vmem:[%s0 + $0x378] sm:$0xff]
  %v126 = vld [vmem:[%s0 + $0x380] sm:$0xff]
  %v127 = vld [vmem:[%s0 + $0x388] sm:$0xff]
  %v128 = vld [vmem:[%s0 + $0x390] sm:$0xff]
  %v129 = vld [vmem:[%s0 + $0x398] sm:$0xff]
  %v130 = vld [vmem:[%s0 + $0x3a0] sm:$0xff]
  %v131 = vld [vmem:[%s0 + $0x3a8] sm:$0xff]
  %v132 = vld [vmem:[%s0 + $0x3b0] sm:$0xff]
  %v133 = vld [vmem:[%s0 + $0x3b8] sm:$0xff]
  %v134 = vld [vmem:[%s0 + $0x3c0] sm:$0xff]
  %v135 = vld [vmem:[%s0 + $0x3c8] sm:$0xff]
  %v136 = vld [vmem:[%s0 + $0x3d0] sm:$0xff]
  %v137 = vld [vmem:[%s0 + $0x3d8] sm:$0xff]
  %v138 = vld [vmem:[%s0 + $0x3e0] sm:$0xff]
  %v139 = vld [vmem:[%s0 + $0x3e8] sm:$0xff]
  %v140 = vld [vmem:[%s0 + $0x3f0] sm:$0xff]
  %v141 = vld [vmem:[%s0 + $0x3f8] sm:$0xff]
  %v142 = vld [vmem:[%s0 + $0x400] sm:$0xff]
  %v143 = vld [vmem:[%s0 + $0x408] sm:$0xff]
  %v144 = vld [vmem:[%s0 + $0x410] sm:$0xff]
  %v145 = vld [vmem:[%s0 + $0x418] sm:$0xff]
  %v146 = vld [vmem:[%s0 + $0x420] sm:$0xff]
  %v147 = vld [vmem:[%s0 + $0x428] sm:$0xff]
  %v148 = vld [vmem:[%s0 + $0x430] sm:$0xff]
  %v149 = vld [vmem:[%s0 + $0x438] sm:$0xff]
  %v150 = vld [vmem:[%s0 + $0x440] sm:$0xff]
  %v151 = vld [vmem:[%s0 + $0x448] sm:$0xff]
  %v152 = vld [vmem:[%s0 + $0x450] sm:$0xff]
  %v153 = vld [vmem:[%s0 + $0x458] sm:$0xff]
  %v154 = vld [vmem:[%s0 + $0x460] sm:$0xff]
  %v155 = vld [vmem:[%s0 + $0x468] sm:$0xff]
  %v156 = vld [vmem:[%s0 + $0x470] sm:$0xff]
  %v157 = vld [vmem:[%s0 + $0x478] sm:$0xff]
  %v158 = vld [vmem:[%s0 + $0x480] sm:$0xff]
  %v159 = vld [vmem:[%s0 + $0x488] sm:$0xff]
  %v160 = vld [vmem:[%s0 + $0x490] sm:$0xff]
  %v161 = vld [vmem:[%s0 + $0x498] sm:$0xff]
  %v162 = vld [vmem:[%s0 + $0x4a0] sm:$0xff]
  %v163 = vld [vmem:[%s0 + $0x4a8] sm:$0xff]
  %v164 = vld [vmem:[%s0 + $0x4b0] sm:$0xff]
  %v165 = vld [vmem:[%s0 + $0x4b8] sm:$0xff]
  %v166 = vld [vmem:[%s0 + $0x4c0] sm:$0xff]
  %v167 = vld [vmem:[%s0 + $0x4c8] sm:$0xff]
  %v168 = vld [vmem:[%s0 + $0x4d0] sm:$0xff]
  %v169 = vld [vmem:[%s0 + $0x4d8] sm:$0xff]
  %v170 = vld [vmem:[%s0 + $0x4e0] sm:$0xff]
  %v171 = vld [vmem:[%s0 + $0x4e8] sm:$0xff]
  %v172 = vld [vmem:[%s0 + $0x4f0] sm:$0xff]
  %v173 = vld [vmem:[%s0 + $0x4f8] sm:$0xff]
  %v174 = vld [vmem:[%s0 + $0x500] sm:$0xff]
  %v175 = vld [vmem:[%s0 + $0x508] sm:$0xff]
  %v176 = vld [vmem:[%s0 + $0x510] sm:$0xff]
  %v177 = vld [vmem:[%s0 + $0x518] sm:$0xff]
  %v178 = vld [vmem:[%s0 + $0x520] sm:$0xff]
  %v179 = vld [vmem:[%s0 + $0x528] sm:$0xff]
  %v180 = vld [vmem:[%s0 + $0x530] sm:$0xff]
  %v181 = vld [vmem:[%s0 + $0x538] sm:$0xff]
  %v182 = vld [vmem:[%s0 + $0x540] sm:$0xff]
  %v183 = vld [vmem:[%s0 + $0x548] sm:$0xff]
  %v184 = vld [vmem:[%s0 + $0x550] sm:$0xff]
  %v185 = vld [vmem:[%s0 + $0x558] sm:$0xff]
  %v186 = vld [vmem:[%s0 + $0x560] sm:$0xff]
  %v187 = vld [vmem:[%s0 + $0x568] sm:$0xff]
  %v188 = vld [vmem:[%s0 + $0x570] sm:$0xff]
  %v189 = vld [vmem:[%s0 + $0x578] sm:$0xff]
  %v190 = vld [vmem:[%s0 + $0x580] sm:$0xff]
  %v191 = vld [vmem:[%s0 + $0x588] sm:$0xff]
  %v192 = vld [vmem:[%s0 + $0x590] sm:$0xff]
  %v193 = vld [vmem:[%s0 + $0x598] sm:$0xff]
  %v194 = vld [vmem:[%s0 + $0x5a0] sm:$0xff]
  %v195 = vld [vmem:[%s0 + $0x5a8] sm:$0xff]
  %v196 = vld [vmem:[%s0 + $0x5b0] sm:$0xff]
  %v197 = vld [vmem:[%s0 + $0x5b8] sm:$0xff]
  %v198 = vld [vmem:[%s0 + $0x5c0] sm:$0xff]
  %v199 = vld [vmem:[%s0 + $0x5c8] sm:$0xff]
  %v200 = vld [vmem:[%s0 + $0x5d0] sm:$0xff]
  %v201 = vld [vmem:[%s0 + $0x5d8] sm:$0xff]
  %v202 = vld [vmem:[%s0 + $0x5e0] sm:$0xff]
  %v203 = vld [vmem:[%s0 + $0x5e8] sm:$0xff]
  %v204 = vld [vmem:[%s0 + $0x5f0] sm:$0xff]
  %v205 = vld [vmem:[%s0 + $0x5f8] sm:$0xff]
  %v206 = vld [vmem:[%s0 + $0x600] sm:$0xff]
  %v207 = vld [vmem:[%s0 + $0x608] sm:$0xff]
  %v208 = vld [vmem:[%s0 + $0x610] sm:$0xff]
  %v209 = vld [vmem:[%s0 + $0x618] sm:$0xff]
  %v210 = vld [vmem:[%s0 + $0x620] sm:$0xff]
  %v211 = vld [vmem:[%s0 + $0x628] sm:$0xff]
  %v212 = vld [vmem:[%s0 + $0x630] sm:$0xff]
  %v213 = vld [vmem:[%s0 + $0x638] sm:$0xff]
  %v214 = vld [vmem:[%s0 + $0x640] sm:$0xff]
  %v215 = vld [vmem:[%s0 + $0x648] sm:$0xff]
  %v216 = vld [vmem:[%s0 + $0x650] sm:$0xff]
  %v217 = vld [vmem:[%s0 + $0x658] sm:$0xff]
  %v218 = vld [vmem:[%s0 + $0x660] sm:$0xff]
  %v219 = vld [vmem:[%s0 + $0x668] sm:$0xff]
  %v220 = vld [vmem:[%s0 + $0x670] sm:$0xff]
  %v221 = vld [vmem:[%s0 + $0x678] sm:$0xff]
  %v222 = vld [vmem:[%s0 + $0x680] sm:$0xff]
  %v223 = vld [vmem:[%s0 + $0x688] sm:$0xff]
  %v224 = vld [vmem:[%s0 + $0x690] sm:$0xff]
  %v225 = vld [vmem:[%s0 + $0x698] sm:$0xff]
  %v226 = vld [vmem:[%s0 + $0x6a0] sm:$0xff]
  %v227 = vld [vmem:[%s0 + $0x6a8] sm:$0xff]
  %v228 = vld [vmem:[%s0 + $0x6b0] sm:$0xff]
  %v229 = vld [vmem:[%s0 + $0x6b8] sm:$0xff]
  %v230 = vld [vmem:[%s0 + $0x6c0] sm:$0xff]
  %v231 = vld [vmem:[%s0 + $0x6c8] sm:$0xff]
  %v232 = vld [vmem:[%s0 + $0x6d0] sm:$0xff]
  %v233 = vld [vmem:[%s0 + $0x6d8] sm:$0xff]
  %v234 = vld [vmem:[%s0 + $0x6e0] sm:$0xff]
  %v235 = vld [vmem:[%s0 + $0x6e8] sm:$0xff]
  %v236 = vld [vmem:[%s0 + $0x6f0] sm:$0xff]
  %v237 = vld [vmem:[%s0 + $0x6f8] sm:$0xff]
  %v238 = vld [vmem:[%s0 + $0x700] sm:$0xff]
  %v239 = vld [vmem:[%s0 + $0x708] sm:$0xff]
  %v240 = vld [vmem:[%s0 + $0x710] sm:$0xff]
  %v241 = vld [vmem:[%s0 + $0x718] sm:$0xff]
  %v242 = vld [vmem:[%s0 + $0x720] sm:$0xff]
  %v243 = vld [vmem:[%s0 + $0x728] sm:$0xff]
  %v244 = vld [vmem:[%s0 + $0x730] sm:$0xff]
  %v245 = vld [vmem:[%s0 + $0x738] sm:$0xff]
  %v246 = vld [vmem:[%s0 + $0x740] sm:$0xff]
  %v247 = vld [vmem:[%s0 + $0x748] sm:$0xff]
  %v248 = vld [vmem:[%s0 + $0x750] sm:$0xff]
  %v249 = vld [vmem:[%s0 + $0x758] sm:$0xff]
  %v250 = vld [vmem:[%s0 + $0x760] sm:$0xff]
  %v251 = vld [vmem:[%s0 + $0x768] sm:$0xff]
  %v252 = vld [vmem:[%s0 + $0x770] sm:$0xff]
  %v253 = vld [vmem:[%s0 + $0x778] sm:$0xff]
  %v254 = vld [vmem:[%s0 + $0x780] sm:$0xff]
  %v255 = vld [vmem:[%s0 + $0x788] sm:$0xff]
  %v256 = vld [vmem:[%s0 + $0x790] sm:$0xff]
  %v257 = vld [vmem:[%s0 + $0x798] sm:$0xff]
  %v258 = vld [vmem:[%s0 + $0x7a0] sm:$0xff]
  %v259 = vld [vmem:[%s0 + $0x7a8] sm:$0xff]
  %v260 = vld [vmem:[%s0 + $0x7b0] sm:$0xff]
  %v261 = vld [vmem:[%s0 + $0x7b8] sm:$0xff]
  %v262 = vld [vmem:[%s0 + $0x7c0] sm:$0xff]
  %v263 = vld [vmem:[%s0 + $0x7c8] sm:$0xff]
  %v264 = vld [vmem:[%s0 + $0x7d0] sm:$0xff]
  %v265 = vld [vmem:[%s0 + $0x7d8] sm:$0xff]
  %v266 = vld [vmem:[%s0 + $0x7e0] sm:$0xff]
  %v267 = vld [vmem:[%s0 + $0x7e8] sm:$0xff]
  %v268 = vld [vmem:[%s0 + $0x7f0] sm:$0xff]
  %v269 = vld [vmem:[%s0 + $0x7f8] sm:$0xff]
  %v270 = vld [vmem:[%s0 + $0x800] sm:$0xff]
  %v271 = vld [vmem:[%s0 + $0x808] sm:$0xff]
  %v272 = vld [vmem:[%s0 + $0x810] sm:$0xff]
  %v273 = vld [vmem:[%s0 + $0x818] sm:$0xff]
  %v274 = vld [vmem:[%s0 + $0x820] sm:$0xff]
  %v275 = vld [vmem:[%s0 + $0x828] sm:$0xff]
  %v276 = vld [vmem:[%s0 + $0x830] sm:$0xff]
  %v277 = vld [vmem:[%s0 + $0x838] sm:$0xff]
  %v278 = vld [vmem:[%s0 + $0x840] sm:$0xff]
  %v279 = vld [vmem:[%s0 + $0x848] sm:$0xff]
  %v280 = vld [vmem:[%s0 + $0x850] sm:$0xff]
  %v281 = vld [vmem:[%s0 + $0x858] sm:$0xff]
  %v282 = vld [vmem:[%s0 + $0x860] sm:$0xff]
  %v283 = vld [vmem:[%s0 + $0x868] sm:$0xff]
  %v284 = vld [vmem:[%s0 + $0x870] sm:$0xff]
  %v285 = vld [vmem:[%s0 + $0x878] sm:$0xff]
  %v286 = vld [vmem:[%s0 + $0x880] sm:$0xff]
  %v287 = vld [vmem:[%s0 + $0x888] sm:$0xff]
  %v288 = vld [vmem:[%s0 + $0x890] sm:$0xff]
  %v289 = vld [vmem:[%s0 + $0x898] sm:$0xff]
  %v290 = vld [vmem:[%s0 + $0x8a0] sm:$0xff]
  %v291 = vld [vmem:[%s0 + $0x8a8] sm:$0xff]
  %v292 = vld [vmem:[%s0 + $0x8b0] sm:$0xff]
  %v293 = vld [vmem:[%s0 + $0x8b8] sm:$0xff]
  %v294 = vld [vmem:[%s0 + $0x8c0] sm:$0xff]
  %v295 = vld [vmem:[%s0 + $0x8c8] sm:$0xff]
  %v296 = vld [vmem:[%s0 + $0x8d0] sm:$0xff]
  %v297 = vld [vmem:[%s0 + $0x8d8] sm:$0xff]
  %v298 = vld [vmem:[%s0 + $0x8e0] sm:$0xff]
  %v299 = vld [vmem:[%s0 + $0x8e8] sm:$0xff]
  %v300 = vld [vmem:[%s0 + $0x8f0] sm:$0xff]
  %v301 = vld [vmem:[%s0 + $0x8f8] sm:$0xff]
  %v302 = vld [vmem:[%s1] sm:$0xff]
  %v303 = vld [vmem:[%s1 + $0x8] sm:$0xff]
  %v304 = vld [vmem:[%s1 + $0x10] sm:$0xff]
  %v305 = vld [vmem:[%s1 + $0x18] sm:$0x1]
  %vm306 = vcmask 203776
  %v308 = vsel %vm306, %v14, 0
  %v311 = vsel %vm306, %v15, 0
  %v314 = vsel %vm306, %v16, 0
  %v317 = vsel %vm306, %v17, 0
  %v320 = vsel %vm306, %v18, 0
  %v323 = vsel %vm306, %v19, 0
  %v326 = vsel %vm306, %v20, 0
  %v329 = vsel %vm306, %v21, 0
  %v332 = vsel %vm306, %v22, 0
  %v335 = vsel %vm306, %v23, 0
  %v338 = vsel %vm306, %v24, 0
  %v341 = vsel %vm306, %v25, 0
  %v344 = vsel %vm306, %v26, 0
  %v347 = vsel %vm306, %v27, 0
  %v350 = vsel %vm306, %v28, 0
  %v353 = vsel %vm306, %v29, 0
  %v356 = vsel %vm306, %v30, 0
  %v359 = vsel %vm306, %v31, 0
  %v362 = vsel %vm306, %v32, 0
  %v365 = vsel %vm306, %v33, 0
  %v368 = vsel %vm306, %v34, 0
  %v371 = vsel %vm306, %v35, 0
  %v374 = vsel %vm306, %v36, 0
  %v377 = vsel %vm306, %v37, 0
  %v380 = vsel %vm306, %v38, 0
  %v383 = vsel %vm306, %v39, 0
  %v386 = vsel %vm306, %v40, 0
  %v389 = vsel %vm306, %v41, 0
  %v392 = vsel %vm306, %v42, 0
  %v395 = vsel %vm306, %v43, 0
  %v398 = vsel %vm306, %v44, 0
  %v401 = vsel %vm306, %v45, 0
  %v404 = vsel %vm306, %v46, 0
  %v407 = vsel %vm306, %v47, 0
  %v410 = vsel %vm306, %v48, 0
  %v413 = vsel %vm306, %v49, 0
  %v416 = vsel %vm306, %v50, 0
  %v419 = vsel %vm306, %v51, 0
  %v422 = vsel %vm306, %v52, 0
  %v425 = vsel %vm306, %v53, 0
  %v428 = vsel %vm306, %v54, 0
  %v431 = vsel %vm306, %v55, 0
  %v434 = vsel %vm306, %v56, 0
  %v437 = vsel %vm306, %v57, 0
  %v440 = vsel %vm306, %v58, 0
  %v443 = vsel %vm306, %v59, 0
  %v446 = vsel %vm306, %v60, 0
  %v449 = vsel %vm306, %v61, 0
  %v452 = vsel %vm306, %v62, 0
  %v455 = vsel %vm306, %v63, 0
  %v458 = vsel %vm306, %v64, 0
  %v461 = vsel %vm306, %v65, 0
  %v464 = vsel %vm306, %v66, 0
  %v467 = vsel %vm306, %v67, 0
  %v470 = vsel %vm306, %v68, 0
  %v473 = vsel %vm306, %v69, 0
  %v476 = vsel %vm306, %v70, 0
  %v479 = vsel %vm306, %v71, 0
  %v482 = vsel %vm306, %v72, 0
  %v485 = vsel %vm306, %v73, 0
  %v488 = vsel %vm306, %v74, 0
  %v491 = vsel %vm306, %v75, 0
  %v494 = vsel %vm306, %v76, 0
  %v497 = vsel %vm306, %v77, 0
  %v500 = vsel %vm306, %v78, 0
  %v503 = vsel %vm306, %v79, 0
  %v506 = vsel %vm306, %v80, 0
  %v509 = vsel %vm306, %v81, 0
  %v512 = vsel %vm306, %v82, 0
  %v515 = vsel %vm306, %v83, 0
  %v518 = vsel %vm306, %v84, 0
  %v521 = vsel %vm306, %v85, 0
  %v524 = vsel %vm306, %v86, 0
  %v527 = vsel %vm306, %v87, 0
  %v530 = vsel %vm306, %v88, 0
  %v533 = vsel %vm306, %v89, 0
  %v536 = vsel %vm306, %v90, 0
  %v539 = vsel %vm306, %v91, 0
  %v542 = vsel %vm306, %v92, 0
  %v545 = vsel %vm306, %v93, 0
  %v548 = vsel %vm306, %v94, 0
  %v551 = vsel %vm306, %v95, 0
  %v554 = vsel %vm306, %v96, 0
  %v557 = vsel %vm306, %v97, 0
  %v560 = vsel %vm306, %v98, 0
  %v563 = vsel %vm306, %v99, 0
  %v566 = vsel %vm306, %v100, 0
  %v569 = vsel %vm306, %v101, 0
  %v572 = vsel %vm306, %v102, 0
  %v575 = vsel %vm306, %v103, 0
  %v578 = vsel %vm306, %v104, 0
  %v581 = vsel %vm306, %v105, 0
  %v584 = vsel %vm306, %v106, 0
  %v587 = vsel %vm306, %v107, 0
  %v590 = vsel %vm306, %v108, 0
  %v593 = vsel %vm306, %v109, 0
  %v596 = vsel %vm306, %v110, 0
  %v599 = vsel %vm306, %v111, 0
  %v602 = vsel %vm306, %v112, 0
  %v605 = vsel %vm306, %v113, 0
  %v608 = vsel %vm306, %v114, 0
  %v611 = vsel %vm306, %v115, 0
  %v614 = vsel %vm306, %v116, 0
  %v617 = vsel %vm306, %v117, 0
  %v620 = vsel %vm306, %v118, 0
  %v623 = vsel %vm306, %v119, 0
  %v626 = vsel %vm306, %v120, 0
  %v629 = vsel %vm306, %v121, 0
  %v632 = vsel %vm306, %v122, 0
  %v635 = vsel %vm306, %v123, 0
  %v638 = vsel %vm306, %v124, 0
  %v641 = vsel %vm306, %v125, 0
  %v644 = vsel %vm306, %v126, 0
  %v647 = vsel %vm306, %v127, 0
  %v650 = vsel %vm306, %v128, 0
  %v653 = vsel %vm306, %v129, 0
  %v656 = vsel %vm306, %v130, 0
  %v659 = vsel %vm306, %v131, 0
  %v662 = vsel %vm306, %v132, 0
  %v665 = vsel %vm306, %v133, 0
  %v668 = vsel %vm306, %v134, 0
  %v671 = vsel %vm306, %v135, 0
  %v674 = vsel %vm306, %v136, 0
  %v677 = vsel %vm306, %v137, 0
  %v680 = vsel %vm306, %v138, 0
  %v683 = vsel %vm306, %v139, 0
  %v686 = vsel %vm306, %v140, 0
  %v689 = vsel %vm306, %v141, 0
  %v692 = vsel %vm306, %v142, 0
  %v695 = vsel %vm306, %v143, 0
  %v698 = vsel %vm306, %v144, 0
  %v701 = vsel %vm306, %v145, 0
  %v704 = vsel %vm306, %v146, 0
  %v707 = vsel %vm306, %v147, 0
  %v710 = vsel %vm306, %v148, 0
  %v713 = vsel %vm306, %v149, 0
  %v716 = vsel %vm306, %v150, 0
  %v719 = vsel %vm306, %v151, 0
  %v722 = vsel %vm306, %v152, 0
  %v725 = vsel %vm306, %v153, 0
  %v728 = vsel %vm306, %v154, 0
  %v731 = vsel %vm306, %v155, 0
  %v734 = vsel %vm306, %v156, 0
  %v737 = vsel %vm306, %v157, 0
  %v740 = vsel %vm306, %v158, 0
  %v743 = vsel %vm306, %v159, 0
  %v746 = vsel %vm306, %v160, 0
  %v749 = vsel %vm306, %v161, 0
  %v752 = vsel %vm306, %v162, 0
  %v755 = vsel %vm306, %v163, 0
  %v758 = vsel %vm306, %v164, 0
  %v761 = vsel %vm306, %v165, 0
  %v764 = vsel %vm306, %v166, 0
  %v767 = vsel %vm306, %v167, 0
  %v770 = vsel %vm306, %v168, 0
  %v773 = vsel %vm306, %v169, 0
  %v776 = vsel %vm306, %v170, 0
  %v779 = vsel %vm306, %v171, 0
  %v782 = vsel %vm306, %v172, 0
  %v785 = vsel %vm306, %v173, 0
  %v788 = vsel %vm306, %v174, 0
  %v791 = vsel %vm306, %v175, 0
  %v794 = vsel %vm306, %v176, 0
  %v797 = vsel %vm306, %v177, 0
  %v800 = vsel %vm306, %v178, 0
  %v803 = vsel %vm306, %v179, 0
  %v806 = vsel %vm306, %v180, 0
  %v809 = vsel %vm306, %v181, 0
  %v812 = vsel %vm306, %v182, 0
  %v815 = vsel %vm306, %v183, 0
  %v818 = vsel %vm306, %v184, 0
  %v821 = vsel %vm306, %v185, 0
  %v824 = vsel %vm306, %v186, 0
  %v827 = vsel %vm306, %v187, 0
  %v830 = vsel %vm306, %v188, 0
  %v833 = vsel %vm306, %v189, 0
  %v836 = vsel %vm306, %v190, 0
  %v839 = vsel %vm306, %v191, 0
  %v842 = vsel %vm306, %v192, 0
  %v845 = vsel %vm306, %v193, 0
  %v848 = vsel %vm306, %v194, 0
  %v851 = vsel %vm306, %v195, 0
  %v854 = vsel %vm306, %v196, 0
  %v857 = vsel %vm306, %v197, 0
  %v860 = vsel %vm306, %v198, 0
  %v863 = vsel %vm306, %v199, 0
  %v866 = vsel %vm306, %v200, 0
  %v869 = vsel %vm306, %v201, 0
  %v872 = vsel %vm306, %v202, 0
  %v875 = vsel %vm306, %v203, 0
  %v878 = vsel %vm306, %v204, 0
  %v881 = vsel %vm306, %v205, 0
  %v884 = vsel %vm306, %v206, 0
  %v887 = vsel %vm306, %v207, 0
  %v890 = vsel %vm306, %v208, 0
  %v893 = vsel %vm306, %v209, 0
  %v896 = vsel %vm306, %v210, 0
  %v899 = vsel %vm306, %v211, 0
  %v902 = vsel %vm306, %v212, 0
  %v905 = vsel %vm306, %v213, 0
  %v908 = vsel %vm306, %v214, 0
  %v911 = vsel %vm306, %v215, 0
  %v914 = vsel %vm306, %v216, 0
  %v917 = vsel %vm306, %v217, 0
  %v920 = vsel %vm306, %v218, 0
  %v923 = vsel %vm306, %v219, 0
  %v926 = vsel %vm306, %v220, 0
  %v929 = vsel %vm306, %v221, 0
  %v932 = vsel %vm306, %v222, 0
  %v935 = vsel %vm306, %v223, 0
  %v938 = vsel %vm306, %v224, 0
  %v941 = vsel %vm306, %v225, 0
  %v944 = vsel %vm306, %v226, 0
  %v947 = vsel %vm306, %v227, 0
  %v950 = vsel %vm306, %v228, 0
  %v953 = vsel %vm306, %v229, 0
  %v956 = vsel %vm306, %v230, 0
  %v959 = vsel %vm306, %v231, 0
  %v962 = vsel %vm306, %v232, 0
  %v965 = vsel %vm306, %v233, 0
  %v968 = vsel %vm306, %v234, 0
  %v971 = vsel %vm306, %v235, 0
  %v974 = vsel %vm306, %v236, 0
  %v977 = vsel %vm306, %v237, 0
  %v980 = vsel %vm306, %v238, 0
  %v983 = vsel %vm306, %v239, 0
  %v986 = vsel %vm306, %v240, 0
  %v989 = vsel %vm306, %v241, 0
  %v992 = vsel %vm306, %v242, 0
  %v995 = vsel %vm306, %v243, 0
  %v998 = vsel %vm306, %v244, 0
  %v1001 = vsel %vm306, %v245, 0
  %v1004 = vsel %vm306, %v246, 0
  %v1007 = vsel %vm306, %v247, 0
  %v1010 = vsel %vm306, %v248, 0
  %v1013 = vsel %vm306, %v249, 0
  %v1016 = vsel %vm306, %v250, 0
  %v1019 = vsel %vm306, %v251, 0
  %v1022 = vsel %vm306, %v252, 0
  %v1025 = vsel %vm306, %v253, 0
  %v1028 = vsel %vm306, %v254, 0
  %v1031 = vsel %vm306, %v255, 0
  %v1034 = vsel %vm306, %v256, 0
  %v1037 = vsel %vm306, %v257, 0
  %v1040 = vsel %vm306, %v258, 0
  %v1043 = vsel %vm306, %v259, 0
  %v1046 = vsel %vm306, %v260, 0
  %v1049 = vsel %vm306, %v261, 0
  %v1052 = vsel %vm306, %v262, 0
  %v1055 = vsel %vm306, %v263, 0
  %v1058 = vsel %vm306, %v264, 0
  %v1061 = vsel %vm306, %v265, 0
  %v1064 = vsel %vm306, %v266, 0
  %v1067 = vsel %vm306, %v267, 0
  %v1070 = vsel %vm306, %v268, 0
  %v1073 = vsel %vm306, %v269, 0
  %v1076 = vsel %vm306, %v270, 0
  %v1079 = vsel %vm306, %v271, 0
  %v1082 = vsel %vm306, %v272, 0
  %v1085 = vsel %vm306, %v273, 0
  %v1088 = vsel %vm306, %v274, 0
  %v1091 = vsel %vm306, %v275, 0
  %v1094 = vsel %vm306, %v276, 0
  %v1097 = vsel %vm306, %v277, 0
  %v1100 = vsel %vm306, %v278, 0
  %v1103 = vsel %vm306, %v279, 0
  %v1106 = vsel %vm306, %v280, 0
  %v1109 = vsel %vm306, %v281, 0
  %v1112 = vsel %vm306, %v282, 0
  %v1115 = vsel %vm306, %v283, 0
  %v1118 = vsel %vm306, %v284, 0
  %v1121 = vsel %vm306, %v285, 0
  %v1124 = vsel %vm306, %v286, 0
  %v1127 = vsel %vm306, %v287, 0
  %v1130 = vsel %vm306, %v288, 0
  %v1133 = vsel %vm306, %v289, 0
  %v1136 = vsel %vm306, %v290, 0
  %v1139 = vsel %vm306, %v291, 0
  %v1142 = vsel %vm306, %v292, 0
  %v1145 = vsel %vm306, %v293, 0
  %v1148 = vsel %vm306, %v294, 0
  %v1151 = vsel %vm306, %v295, 0
  %v1154 = vsel %vm306, %v296, 0
  %v1157 = vsel %vm306, %v297, 0
  %v1160 = vsel %vm306, %v298, 0
  %v1163 = vsel %vm306, %v299, 0
  %v1166 = vsel %vm306, %v300, 0
  %v1169 = vsel %vm306, %v301, 0
  %vm1171 = vcmask 1040384
  %v1173 = vsel %vm1171, %v305, 0
  %1175 = vmatpush.msra.mxu0 0.0
  %1176 = vmatpush.msra.mxu0 0.0
  %1177 = vmatpush.msra.mxu0 0.0
  %1178 = vmatpush.msra.mxu0 0.0
  %1179 = vmatpush.msra.mxu0 0.0
  %1180 = vmatpush.msra.mxu0 0.0
  %1181 = vmatpush.msra.mxu0 0.0
  %1182 = vmatpush.msra.mxu0 0.0
  %1183 = vmatpush.msra.mxu0 0.0
  %1184 = vmatpush.msra.mxu0 0.0
  %1185 = vmatpush.msra.mxu0 0.0
  %1186 = vmatpush.msra.mxu0 0.0
  %1187 = vmatpush.msra.mxu0 %v1173
  %1188 = vmatpush.msra.mxu0 %v304
  %1189 = vmatpush.msra.mxu0 %v303
  %1190 = vmatpush.msra.mxu0 %v302
  %1191 = vmatmul.f32.gmra.mxu0 %v308
  %v1192 = vpop.f32.mrf.mxu0
  %v1193 = vadd.f32 0.0, %v1192
  %1194 = vmatmul.f32.gmra.mxu0 %v311
  %v1195 = vpop.f32.mrf.mxu0
  %v1196 = vadd.f32 0.0, %v1195
  %1197 = vmatmul.f32.gmra.mxu0 %v314
  %v1198 = vpop.f32.mrf.mxu0
  %v1199 = vadd.f32 0.0, %v1198
  %1200 = vmatmul.f32.gmra.mxu0 %v317
  %v1201 = vpop.f32.mrf.mxu0
  %v1202 = vadd.f32 0.0, %v1201
  %1203 = vmatmul.f32.gmra.mxu0 %v320
  %v1204 = vpop.f32.mrf.mxu0
  %v1205 = vadd.f32 0.0, %v1204
  %1206 = vmatmul.f32.gmra.mxu0 %v323
  %v1207 = vpop.f32.mrf.mxu0
  %v1208 = vadd.f32 0.0, %v1207
  %1209 = vmatmul.f32.gmra.mxu0 %v326
  %v1210 = vpop.f32.mrf.mxu0
  %v1211 = vadd.f32 0.0, %v1210
  %1212 = vmatmul.f32.gmra.mxu0 %v329
  %v1213 = vpop.f32.mrf.mxu0
  %v1214 = vadd.f32 0.0, %v1213
  %1215 = vmatmul.f32.gmra.mxu0 %v332
  %v1216 = vpop.f32.mrf.mxu0
  %v1217 = vadd.f32 0.0, %v1216
  %1218 = vmatmul.f32.gmra.mxu0 %v335
  %v1219 = vpop.f32.mrf.mxu0
  %v1220 = vadd.f32 0.0, %v1219
  %1221 = vmatmul.f32.gmra.mxu0 %v338
  %v1222 = vpop.f32.mrf.mxu0
  %v1223 = vadd.f32 0.0, %v1222
  %1224 = vmatmul.f32.gmra.mxu0 %v341
  %v1225 = vpop.f32.mrf.mxu0
  %v1226 = vadd.f32 0.0, %v1225
  %1227 = vmatmul.f32.gmra.mxu0 %v344
  %v1228 = vpop.f32.mrf.mxu0
  %v1229 = vadd.f32 0.0, %v1228
  %1230 = vmatmul.f32.gmra.mxu0 %v347
  %v1231 = vpop.f32.mrf.mxu0
  %v1232 = vadd.f32 0.0, %v1231
  %1233 = vmatmul.f32.gmra.mxu0 %v350
  %v1234 = vpop.f32.mrf.mxu0
  %v1235 = vadd.f32 0.0, %v1234
  %1236 = vmatmul.f32.gmra.mxu0 %v353
  %v1237 = vpop.f32.mrf.mxu0
  %v1238 = vadd.f32 0.0, %v1237
  %1239 = vmatmul.f32.gmra.mxu0 %v356
  %v1240 = vpop.f32.mrf.mxu0
  %v1241 = vadd.f32 0.0, %v1240
  %1242 = vmatmul.f32.gmra.mxu0 %v359
  %v1243 = vpop.f32.mrf.mxu0
  %v1244 = vadd.f32 0.0, %v1243
  %1245 = vmatmul.f32.gmra.mxu0 %v362
  %v1246 = vpop.f32.mrf.mxu0
  %v1247 = vadd.f32 0.0, %v1246
  %1248 = vmatmul.f32.gmra.mxu0 %v365
  %v1249 = vpop.f32.mrf.mxu0
  %v1250 = vadd.f32 0.0, %v1249
  %1251 = vmatmul.f32.gmra.mxu0 %v368
  %v1252 = vpop.f32.mrf.mxu0
  %v1253 = vadd.f32 0.0, %v1252
  %1254 = vmatmul.f32.gmra.mxu0 %v371
  %v1255 = vpop.f32.mrf.mxu0
  %v1256 = vadd.f32 0.0, %v1255
  %1257 = vmatmul.f32.gmra.mxu0 %v374
  %v1258 = vpop.f32.mrf.mxu0
  %v1259 = vadd.f32 0.0, %v1258
  %1260 = vmatmul.f32.gmra.mxu0 %v377
  %v1261 = vpop.f32.mrf.mxu0
  %v1262 = vadd.f32 0.0, %v1261
  %1263 = vmatmul.f32.gmra.mxu0 %v380
  %v1264 = vpop.f32.mrf.mxu0
  %v1265 = vadd.f32 0.0, %v1264
  %1266 = vmatmul.f32.gmra.mxu0 %v383
  %v1267 = vpop.f32.mrf.mxu0
  %v1268 = vadd.f32 0.0, %v1267
  %1269 = vmatmul.f32.gmra.mxu0 %v386
  %v1270 = vpop.f32.mrf.mxu0
  %v1271 = vadd.f32 0.0, %v1270
  %1272 = vmatmul.f32.gmra.mxu0 %v389
  %v1273 = vpop.f32.mrf.mxu0
  %v1274 = vadd.f32 0.0, %v1273
  %1275 = vmatmul.f32.gmra.mxu0 %v392
  %v1276 = vpop.f32.mrf.mxu0
  %v1277 = vadd.f32 0.0, %v1276
  %1278 = vmatmul.f32.gmra.mxu0 %v395
  %v1279 = vpop.f32.mrf.mxu0
  %v1280 = vadd.f32 0.0, %v1279
  %1281 = vmatmul.f32.gmra.mxu0 %v398
  %v1282 = vpop.f32.mrf.mxu0
  %v1283 = vadd.f32 0.0, %v1282
  %1284 = vmatmul.f32.gmra.mxu0 %v401
  %v1285 = vpop.f32.mrf.mxu0
  %v1286 = vadd.f32 0.0, %v1285
  %1287 = vmatmul.f32.gmra.mxu0 %v404
  %v1288 = vpop.f32.mrf.mxu0
  %v1289 = vadd.f32 0.0, %v1288
  %1290 = vmatmul.f32.gmra.mxu0 %v407
  %v1291 = vpop.f32.mrf.mxu0
  %v1292 = vadd.f32 0.0, %v1291
  %1293 = vmatmul.f32.gmra.mxu0 %v410
  %v1294 = vpop.f32.mrf.mxu0
  %v1295 = vadd.f32 0.0, %v1294
  %1296 = vmatmul.f32.gmra.mxu0 %v413
  %v1297 = vpop.f32.mrf.mxu0
  %v1298 = vadd.f32 0.0, %v1297
  %1299 = vmatmul.f32.gmra.mxu0 %v416
  %v1300 = vpop.f32.mrf.mxu0
  %v1301 = vadd.f32 0.0, %v1300
  %1302 = vmatmul.f32.gmra.mxu0 %v419
  %v1303 = vpop.f32.mrf.mxu0
  %v1304 = vadd.f32 0.0, %v1303
  %1305 = vmatmul.f32.gmra.mxu0 %v422
  %v1306 = vpop.f32.mrf.mxu0
  %v1307 = vadd.f32 0.0, %v1306
  %1308 = vmatmul.f32.gmra.mxu0 %v425
  %v1309 = vpop.f32.mrf.mxu0
  %v1310 = vadd.f32 0.0, %v1309
  %1311 = vmatmul.f32.gmra.mxu0 %v428
  %v1312 = vpop.f32.mrf.mxu0
  %v1313 = vadd.f32 0.0, %v1312
  %1314 = vmatmul.f32.gmra.mxu0 %v431
  %v1315 = vpop.f32.mrf.mxu0
  %v1316 = vadd.f32 0.0, %v1315
  %1317 = vmatmul.f32.gmra.mxu0 %v434
  %v1318 = vpop.f32.mrf.mxu0
  %v1319 = vadd.f32 0.0, %v1318
  %1320 = vmatmul.f32.gmra.mxu0 %v437
  %v1321 = vpop.f32.mrf.mxu0
  %v1322 = vadd.f32 0.0, %v1321
  %1323 = vmatmul.f32.gmra.mxu0 %v440
  %v1324 = vpop.f32.mrf.mxu0
  %v1325 = vadd.f32 0.0, %v1324
  %1326 = vmatmul.f32.gmra.mxu0 %v443
  %v1327 = vpop.f32.mrf.mxu0
  %v1328 = vadd.f32 0.0, %v1327
  %1329 = vmatmul.f32.gmra.mxu0 %v446
  %v1330 = vpop.f32.mrf.mxu0
  %v1331 = vadd.f32 0.0, %v1330
  %1332 = vmatmul.f32.gmra.mxu0 %v449
  %v1333 = vpop.f32.mrf.mxu0
  %v1334 = vadd.f32 0.0, %v1333
  %1335 = vmatmul.f32.gmra.mxu0 %v452
  %v1336 = vpop.f32.mrf.mxu0
  %v1337 = vadd.f32 0.0, %v1336
  %1338 = vmatmul.f32.gmra.mxu0 %v455
  %v1339 = vpop.f32.mrf.mxu0
  %v1340 = vadd.f32 0.0, %v1339
  %1341 = vmatmul.f32.gmra.mxu0 %v458
  %v1342 = vpop.f32.mrf.mxu0
  %v1343 = vadd.f32 0.0, %v1342
  %1344 = vmatmul.f32.gmra.mxu0 %v461
  %v1345 = vpop.f32.mrf.mxu0
  %v1346 = vadd.f32 0.0, %v1345
  %1347 = vmatmul.f32.gmra.mxu0 %v464
  %v1348 = vpop.f32.mrf.mxu0
  %v1349 = vadd.f32 0.0, %v1348
  %1350 = vmatmul.f32.gmra.mxu0 %v467
  %v1351 = vpop.f32.mrf.mxu0
  %v1352 = vadd.f32 0.0, %v1351
  %1353 = vmatmul.f32.gmra.mxu0 %v470
  %v1354 = vpop.f32.mrf.mxu0
  %v1355 = vadd.f32 0.0, %v1354
  %1356 = vmatmul.f32.gmra.mxu0 %v473
  %v1357 = vpop.f32.mrf.mxu0
  %v1358 = vadd.f32 0.0, %v1357
  %1359 = vmatmul.f32.gmra.mxu0 %v476
  %v1360 = vpop.f32.mrf.mxu0
  %v1361 = vadd.f32 0.0, %v1360
  %1362 = vmatmul.f32.gmra.mxu0 %v479
  %v1363 = vpop.f32.mrf.mxu0
  %v1364 = vadd.f32 0.0, %v1363
  %1365 = vmatmul.f32.gmra.mxu0 %v482
  %v1366 = vpop.f32.mrf.mxu0
  %v1367 = vadd.f32 0.0, %v1366
  %1368 = vmatmul.f32.gmra.mxu0 %v485
  %v1369 = vpop.f32.mrf.mxu0
  %v1370 = vadd.f32 0.0, %v1369
  %1371 = vmatmul.f32.gmra.mxu0 %v488
  %v1372 = vpop.f32.mrf.mxu0
  %v1373 = vadd.f32 0.0, %v1372
  %1374 = vmatmul.f32.gmra.mxu0 %v491
  %v1375 = vpop.f32.mrf.mxu0
  %v1376 = vadd.f32 0.0, %v1375
  %1377 = vmatmul.f32.gmra.mxu0 %v494
  %v1378 = vpop.f32.mrf.mxu0
  %v1379 = vadd.f32 0.0, %v1378
  %1380 = vmatmul.f32.gmra.mxu0 %v497
  %v1381 = vpop.f32.mrf.mxu0
  %v1382 = vadd.f32 0.0, %v1381
  %1383 = vmatmul.f32.gmra.mxu0 %v500
  %v1384 = vpop.f32.mrf.mxu0
  %v1385 = vadd.f32 0.0, %v1384
  %1386 = vmatmul.f32.gmra.mxu0 %v503
  %v1387 = vpop.f32.mrf.mxu0
  %v1388 = vadd.f32 0.0, %v1387
  %1389 = vmatmul.f32.gmra.mxu0 %v506
  %v1390 = vpop.f32.mrf.mxu0
  %v1391 = vadd.f32 0.0, %v1390
  %1392 = vmatmul.f32.gmra.mxu0 %v509
  %v1393 = vpop.f32.mrf.mxu0
  %v1394 = vadd.f32 0.0, %v1393
  %1395 = vmatmul.f32.gmra.mxu0 %v512
  %v1396 = vpop.f32.mrf.mxu0
  %v1397 = vadd.f32 0.0, %v1396
  %1398 = vmatmul.f32.gmra.mxu0 %v515
  %v1399 = vpop.f32.mrf.mxu0
  %v1400 = vadd.f32 0.0, %v1399
  %1401 = vmatmul.f32.gmra.mxu0 %v518
  %v1402 = vpop.f32.mrf.mxu0
  %v1403 = vadd.f32 0.0, %v1402
  %1404 = vmatmul.f32.gmra.mxu0 %v521
  %v1405 = vpop.f32.mrf.mxu0
  %v1406 = vadd.f32 0.0, %v1405
  %1407 = vmatmul.f32.gmra.mxu0 %v524
  %v1408 = vpop.f32.mrf.mxu0
  %v1409 = vadd.f32 0.0, %v1408
  %1410 = vmatmul.f32.gmra.mxu0 %v527
  %v1411 = vpop.f32.mrf.mxu0
  %v1412 = vadd.f32 0.0, %v1411
  %1413 = vmatmul.f32.gmra.mxu0 %v530
  %v1414 = vpop.f32.mrf.mxu0
  %v1415 = vadd.f32 0.0, %v1414
  %1416 = vmatmul.f32.gmra.mxu0 %v533
  %v1417 = vpop.f32.mrf.mxu0
  %v1418 = vadd.f32 0.0, %v1417
  %1419 = vmatmul.f32.gmra.mxu0 %v536
  %v1420 = vpop.f32.mrf.mxu0
  %v1421 = vadd.f32 0.0, %v1420
  %1422 = vmatmul.f32.gmra.mxu0 %v539
  %v1423 = vpop.f32.mrf.mxu0
  %v1424 = vadd.f32 0.0, %v1423
  %1425 = vmatmul.f32.gmra.mxu0 %v542
  %v1426 = vpop.f32.mrf.mxu0
  %v1427 = vadd.f32 0.0, %v1426
  %1428 = vmatmul.f32.gmra.mxu0 %v545
  %v1429 = vpop.f32.mrf.mxu0
  %v1430 = vadd.f32 0.0, %v1429
  %1431 = vmatmul.f32.gmra.mxu0 %v548
  %v1432 = vpop.f32.mrf.mxu0
  %v1433 = vadd.f32 0.0, %v1432
  %1434 = vmatmul.f32.gmra.mxu0 %v551
  %v1435 = vpop.f32.mrf.mxu0
  %v1436 = vadd.f32 0.0, %v1435
  %1437 = vmatmul.f32.gmra.mxu0 %v554
  %v1438 = vpop.f32.mrf.mxu0
  %v1439 = vadd.f32 0.0, %v1438
  %1440 = vmatmul.f32.gmra.mxu0 %v557
  %v1441 = vpop.f32.mrf.mxu0
  %v1442 = vadd.f32 0.0, %v1441
  %1443 = vmatmul.f32.gmra.mxu0 %v560
  %v1444 = vpop.f32.mrf.mxu0
  %v1445 = vadd.f32 0.0, %v1444
  %1446 = vmatmul.f32.gmra.mxu0 %v563
  %v1447 = vpop.f32.mrf.mxu0
  %v1448 = vadd.f32 0.0, %v1447
  %1449 = vmatmul.f32.gmra.mxu0 %v566
  %v1450 = vpop.f32.mrf.mxu0
  %v1451 = vadd.f32 0.0, %v1450
  %1452 = vmatmul.f32.gmra.mxu0 %v569
  %v1453 = vpop.f32.mrf.mxu0
  %v1454 = vadd.f32 0.0, %v1453
  %1455 = vmatmul.f32.gmra.mxu0 %v572
  %v1456 = vpop.f32.mrf.mxu0
  %v1457 = vadd.f32 0.0, %v1456
  %1458 = vmatmul.f32.gmra.mxu0 %v575
  %v1459 = vpop.f32.mrf.mxu0
  %v1460 = vadd.f32 0.0, %v1459
  %1461 = vmatmul.f32.gmra.mxu0 %v578
  %v1462 = vpop.f32.mrf.mxu0
  %v1463 = vadd.f32 0.0, %v1462
  %1464 = vmatmul.f32.gmra.mxu0 %v581
  %v1465 = vpop.f32.mrf.mxu0
  %v1466 = vadd.f32 0.0, %v1465
  %1467 = vmatmul.f32.gmra.mxu0 %v584
  %v1468 = vpop.f32.mrf.mxu0
  %v1469 = vadd.f32 0.0, %v1468
  %1470 = vmatmul.f32.gmra.mxu0 %v587
  %v1471 = vpop.f32.mrf.mxu0
  %v1472 = vadd.f32 0.0, %v1471
  %1473 = vmatmul.f32.gmra.mxu0 %v590
  %v1474 = vpop.f32.mrf.mxu0
  %v1475 = vadd.f32 0.0, %v1474
  %1476 = vmatmul.f32.gmra.mxu0 %v593
  %v1477 = vpop.f32.mrf.mxu0
  %v1478 = vadd.f32 0.0, %v1477
  %1479 = vmatmul.f32.gmra.mxu0 %v596
  %v1480 = vpop.f32.mrf.mxu0
  %v1481 = vadd.f32 0.0, %v1480
  %1482 = vmatmul.f32.gmra.mxu0 %v599
  %v1483 = vpop.f32.mrf.mxu0
  %v1484 = vadd.f32 0.0, %v1483
  %1485 = vmatmul.f32.gmra.mxu0 %v602
  %v1486 = vpop.f32.mrf.mxu0
  %v1487 = vadd.f32 0.0, %v1486
  %1488 = vmatmul.f32.gmra.mxu0 %v605
  %v1489 = vpop.f32.mrf.mxu0
  %v1490 = vadd.f32 0.0, %v1489
  %1491 = vmatmul.f32.gmra.mxu0 %v608
  %v1492 = vpop.f32.mrf.mxu0
  %v1493 = vadd.f32 0.0, %v1492
  %1494 = vmatmul.f32.gmra.mxu0 %v611
  %v1495 = vpop.f32.mrf.mxu0
  %v1496 = vadd.f32 0.0, %v1495
  %1497 = vmatmul.f32.gmra.mxu0 %v614
  %v1498 = vpop.f32.mrf.mxu0
  %v1499 = vadd.f32 0.0, %v1498
  %1500 = vmatmul.f32.gmra.mxu0 %v617
  %v1501 = vpop.f32.mrf.mxu0
  %v1502 = vadd.f32 0.0, %v1501
  %1503 = vmatmul.f32.gmra.mxu0 %v620
  %v1504 = vpop.f32.mrf.mxu0
  %v1505 = vadd.f32 0.0, %v1504
  %1506 = vmatmul.f32.gmra.mxu0 %v623
  %v1507 = vpop.f32.mrf.mxu0
  %v1508 = vadd.f32 0.0, %v1507
  %1509 = vmatmul.f32.gmra.mxu0 %v626
  %v1510 = vpop.f32.mrf.mxu0
  %v1511 = vadd.f32 0.0, %v1510
  %1512 = vmatmul.f32.gmra.mxu0 %v629
  %v1513 = vpop.f32.mrf.mxu0
  %v1514 = vadd.f32 0.0, %v1513
  %1515 = vmatmul.f32.gmra.mxu0 %v632
  %v1516 = vpop.f32.mrf.mxu0
  %v1517 = vadd.f32 0.0, %v1516
  %1518 = vmatmul.f32.gmra.mxu0 %v635
  %v1519 = vpop.f32.mrf.mxu0
  %v1520 = vadd.f32 0.0, %v1519
  %1521 = vmatmul.f32.gmra.mxu0 %v638
  %v1522 = vpop.f32.mrf.mxu0
  %v1523 = vadd.f32 0.0, %v1522
  %1524 = vmatmul.f32.gmra.mxu0 %v641
  %v1525 = vpop.f32.mrf.mxu0
  %v1526 = vadd.f32 0.0, %v1525
  %1527 = vmatmul.f32.gmra.mxu0 %v644
  %v1528 = vpop.f32.mrf.mxu0
  %v1529 = vadd.f32 0.0, %v1528
  %1530 = vmatmul.f32.gmra.mxu0 %v647
  %v1531 = vpop.f32.mrf.mxu0
  %v1532 = vadd.f32 0.0, %v1531
  %1533 = vmatmul.f32.gmra.mxu0 %v650
  %v1534 = vpop.f32.mrf.mxu0
  %v1535 = vadd.f32 0.0, %v1534
  %1536 = vmatmul.f32.gmra.mxu0 %v653
  %v1537 = vpop.f32.mrf.mxu0
  %v1538 = vadd.f32 0.0, %v1537
  %1539 = vmatmul.f32.gmra.mxu0 %v656
  %v1540 = vpop.f32.mrf.mxu0
  %v1541 = vadd.f32 0.0, %v1540
  %1542 = vmatmul.f32.gmra.mxu0 %v659
  %v1543 = vpop.f32.mrf.mxu0
  %v1544 = vadd.f32 0.0, %v1543
  %1545 = vmatmul.f32.gmra.mxu0 %v662
  %v1546 = vpop.f32.mrf.mxu0
  %v1547 = vadd.f32 0.0, %v1546
  %1548 = vmatmul.f32.gmra.mxu0 %v665
  %v1549 = vpop.f32.mrf.mxu0
  %v1550 = vadd.f32 0.0, %v1549
  %1551 = vmatmul.f32.gmra.mxu0 %v668
  %v1552 = vpop.f32.mrf.mxu0
  %v1553 = vadd.f32 0.0, %v1552
  %1554 = vmatmul.f32.gmra.mxu0 %v671
  %v1555 = vpop.f32.mrf.mxu0
  %v1556 = vadd.f32 0.0, %v1555
  %1557 = vmatmul.f32.gmra.mxu0 %v674
  %v1558 = vpop.f32.mrf.mxu0
  %v1559 = vadd.f32 0.0, %v1558
  %1560 = vmatmul.f32.gmra.mxu0 %v677
  %v1561 = vpop.f32.mrf.mxu0
  %v1562 = vadd.f32 0.0, %v1561
  %1563 = vmatmul.f32.gmra.mxu0 %v680
  %v1564 = vpop.f32.mrf.mxu0
  %v1565 = vadd.f32 0.0, %v1564
  %1566 = vmatmul.f32.gmra.mxu0 %v683
  %v1567 = vpop.f32.mrf.mxu0
  %v1568 = vadd.f32 0.0, %v1567
  %1569 = vmatmul.f32.gmra.mxu0 %v686
  %v1570 = vpop.f32.mrf.mxu0
  %v1571 = vadd.f32 0.0, %v1570
  %1572 = vmatmul.f32.gmra.mxu0 %v689
  %v1573 = vpop.f32.mrf.mxu0
  %v1574 = vadd.f32 0.0, %v1573
  %1575 = vmatmul.f32.gmra.mxu0 %v692
  %v1576 = vpop.f32.mrf.mxu0
  %v1577 = vadd.f32 0.0, %v1576
  %1578 = vmatmul.f32.gmra.mxu0 %v695
  %v1579 = vpop.f32.mrf.mxu0
  %v1580 = vadd.f32 0.0, %v1579
  %1581 = vmatmul.f32.gmra.mxu0 %v698
  %v1582 = vpop.f32.mrf.mxu0
  %v1583 = vadd.f32 0.0, %v1582
  %1584 = vmatmul.f32.gmra.mxu0 %v701
  %v1585 = vpop.f32.mrf.mxu0
  %v1586 = vadd.f32 0.0, %v1585
  %1587 = vmatmul.f32.gmra.mxu0 %v704
  %v1588 = vpop.f32.mrf.mxu0
  %v1589 = vadd.f32 0.0, %v1588
  %1590 = vmatmul.f32.gmra.mxu0 %v707
  %v1591 = vpop.f32.mrf.mxu0
  %v1592 = vadd.f32 0.0, %v1591
  %1593 = vmatmul.f32.gmra.mxu0 %v710
  %v1594 = vpop.f32.mrf.mxu0
  %v1595 = vadd.f32 0.0, %v1594
  %1596 = vmatmul.f32.gmra.mxu0 %v713
  %v1597 = vpop.f32.mrf.mxu0
  %v1598 = vadd.f32 0.0, %v1597
  %1599 = vmatmul.f32.gmra.mxu0 %v716
  %v1600 = vpop.f32.mrf.mxu0
  %v1601 = vadd.f32 0.0, %v1600
  %1602 = vmatmul.f32.gmra.mxu0 %v719
  %v1603 = vpop.f32.mrf.mxu0
  %v1604 = vadd.f32 0.0, %v1603
  %1605 = vmatmul.f32.gmra.mxu0 %v722
  %v1606 = vpop.f32.mrf.mxu0
  %v1607 = vadd.f32 0.0, %v1606
  %1608 = vmatmul.f32.gmra.mxu0 %v725
  %v1609 = vpop.f32.mrf.mxu0
  %v1610 = vadd.f32 0.0, %v1609
  %1611 = vmatmul.f32.gmra.mxu0 %v728
  %v1612 = vpop.f32.mrf.mxu0
  %v1613 = vadd.f32 0.0, %v1612
  %1614 = vmatmul.f32.gmra.mxu0 %v731
  %v1615 = vpop.f32.mrf.mxu0
  %v1616 = vadd.f32 0.0, %v1615
  %1617 = vmatmul.f32.gmra.mxu0 %v734
  %v1618 = vpop.f32.mrf.mxu0
  %v1619 = vadd.f32 0.0, %v1618
  %1620 = vmatmul.f32.gmra.mxu0 %v737
  %v1621 = vpop.f32.mrf.mxu0
  %v1622 = vadd.f32 0.0, %v1621
  %1623 = vmatmul.f32.gmra.mxu0 %v740
  %v1624 = vpop.f32.mrf.mxu0
  %v1625 = vadd.f32 0.0, %v1624
  %1626 = vmatmul.f32.gmra.mxu0 %v743
  %v1627 = vpop.f32.mrf.mxu0
  %v1628 = vadd.f32 0.0, %v1627
  %1629 = vmatmul.f32.gmra.mxu0 %v746
  %v1630 = vpop.f32.mrf.mxu0
  %v1631 = vadd.f32 0.0, %v1630
  %1632 = vmatmul.f32.gmra.mxu0 %v749
  %v1633 = vpop.f32.mrf.mxu0
  %v1634 = vadd.f32 0.0, %v1633
  %1635 = vmatmul.f32.gmra.mxu0 %v752
  %v1636 = vpop.f32.mrf.mxu0
  %v1637 = vadd.f32 0.0, %v1636
  %1638 = vmatmul.f32.gmra.mxu0 %v755
  %v1639 = vpop.f32.mrf.mxu0
  %v1640 = vadd.f32 0.0, %v1639
  %1641 = vmatmul.f32.gmra.mxu0 %v758
  %v1642 = vpop.f32.mrf.mxu0
  %v1643 = vadd.f32 0.0, %v1642
  %1644 = vmatmul.f32.gmra.mxu0 %v761
  %v1645 = vpop.f32.mrf.mxu0
  %v1646 = vadd.f32 0.0, %v1645
  %1647 = vmatmul.f32.gmra.mxu0 %v764
  %v1648 = vpop.f32.mrf.mxu0
  %v1649 = vadd.f32 0.0, %v1648
  %1650 = vmatmul.f32.gmra.mxu0 %v767
  %v1651 = vpop.f32.mrf.mxu0
  %v1652 = vadd.f32 0.0, %v1651
  %1653 = vmatmul.f32.gmra.mxu0 %v770
  %v1654 = vpop.f32.mrf.mxu0
  %v1655 = vadd.f32 0.0, %v1654
  %1656 = vmatmul.f32.gmra.mxu0 %v773
  %v1657 = vpop.f32.mrf.mxu0
  %v1658 = vadd.f32 0.0, %v1657
  %1659 = vmatmul.f32.gmra.mxu0 %v776
  %v1660 = vpop.f32.mrf.mxu0
  %v1661 = vadd.f32 0.0, %v1660
  %1662 = vmatmul.f32.gmra.mxu0 %v779
  %v1663 = vpop.f32.mrf.mxu0
  %v1664 = vadd.f32 0.0, %v1663
  %1665 = vmatmul.f32.gmra.mxu0 %v782
  %v1666 = vpop.f32.mrf.mxu0
  %v1667 = vadd.f32 0.0, %v1666
  %1668 = vmatmul.f32.gmra.mxu0 %v785
  %v1669 = vpop.f32.mrf.mxu0
  %v1670 = vadd.f32 0.0, %v1669
  %1671 = vmatmul.f32.gmra.mxu0 %v788
  %v1672 = vpop.f32.mrf.mxu0
  %v1673 = vadd.f32 0.0, %v1672
  %1674 = vmatmul.f32.gmra.mxu0 %v791
  %v1675 = vpop.f32.mrf.mxu0
  %v1676 = vadd.f32 0.0, %v1675
  %1677 = vmatmul.f32.gmra.mxu0 %v794
  %v1678 = vpop.f32.mrf.mxu0
  %v1679 = vadd.f32 0.0, %v1678
  %1680 = vmatmul.f32.gmra.mxu0 %v797
  %v1681 = vpop.f32.mrf.mxu0
  %v1682 = vadd.f32 0.0, %v1681
  %1683 = vmatmul.f32.gmra.mxu0 %v800
  %v1684 = vpop.f32.mrf.mxu0
  %v1685 = vadd.f32 0.0, %v1684
  %1686 = vmatmul.f32.gmra.mxu0 %v803
  %v1687 = vpop.f32.mrf.mxu0
  %v1688 = vadd.f32 0.0, %v1687
  %1689 = vmatmul.f32.gmra.mxu0 %v806
  %v1690 = vpop.f32.mrf.mxu0
  %v1691 = vadd.f32 0.0, %v1690
  %1692 = vmatmul.f32.gmra.mxu0 %v809
  %v1693 = vpop.f32.mrf.mxu0
  %v1694 = vadd.f32 0.0, %v1693
  %1695 = vmatmul.f32.gmra.mxu0 %v812
  %v1696 = vpop.f32.mrf.mxu0
  %v1697 = vadd.f32 0.0, %v1696
  %1698 = vmatmul.f32.gmra.mxu0 %v815
  %v1699 = vpop.f32.mrf.mxu0
  %v1700 = vadd.f32 0.0, %v1699
  %1701 = vmatmul.f32.gmra.mxu0 %v818
  %v1702 = vpop.f32.mrf.mxu0
  %v1703 = vadd.f32 0.0, %v1702
  %1704 = vmatmul.f32.gmra.mxu0 %v821
  %v1705 = vpop.f32.mrf.mxu0
  %v1706 = vadd.f32 0.0, %v1705
  %1707 = vmatmul.f32.gmra.mxu0 %v824
  %v1708 = vpop.f32.mrf.mxu0
  %v1709 = vadd.f32 0.0, %v1708
  %1710 = vmatmul.f32.gmra.mxu0 %v827
  %v1711 = vpop.f32.mrf.mxu0
  %v1712 = vadd.f32 0.0, %v1711
  %1713 = vmatmul.f32.gmra.mxu0 %v830
  %v1714 = vpop.f32.mrf.mxu0
  %v1715 = vadd.f32 0.0, %v1714
  %1716 = vmatmul.f32.gmra.mxu0 %v833
  %v1717 = vpop.f32.mrf.mxu0
  %v1718 = vadd.f32 0.0, %v1717
  %1719 = vmatmul.f32.gmra.mxu0 %v836
  %v1720 = vpop.f32.mrf.mxu0
  %v1721 = vadd.f32 0.0, %v1720
  %1722 = vmatmul.f32.gmra.mxu0 %v839
  %v1723 = vpop.f32.mrf.mxu0
  %v1724 = vadd.f32 0.0, %v1723
  %1725 = vmatmul.f32.gmra.mxu0 %v842
  %v1726 = vpop.f32.mrf.mxu0
  %v1727 = vadd.f32 0.0, %v1726
  %1728 = vmatmul.f32.gmra.mxu0 %v845
  %v1729 = vpop.f32.mrf.mxu0
  %v1730 = vadd.f32 0.0, %v1729
  %1731 = vmatmul.f32.gmra.mxu0 %v848
  %v1732 = vpop.f32.mrf.mxu0
  %v1733 = vadd.f32 0.0, %v1732
  %1734 = vmatmul.f32.gmra.mxu0 %v851
  %v1735 = vpop.f32.mrf.mxu0
  %v1736 = vadd.f32 0.0, %v1735
  %1737 = vmatmul.f32.gmra.mxu0 %v854
  %v1738 = vpop.f32.mrf.mxu0
  %v1739 = vadd.f32 0.0, %v1738
  %1740 = vmatmul.f32.gmra.mxu0 %v857
  %v1741 = vpop.f32.mrf.mxu0
  %v1742 = vadd.f32 0.0, %v1741
  %1743 = vmatmul.f32.gmra.mxu0 %v860
  %v1744 = vpop.f32.mrf.mxu0
  %v1745 = vadd.f32 0.0, %v1744
  %1746 = vmatmul.f32.gmra.mxu0 %v863
  %v1747 = vpop.f32.mrf.mxu0
  %v1748 = vadd.f32 0.0, %v1747
  %1749 = vmatmul.f32.gmra.mxu0 %v866
  %v1750 = vpop.f32.mrf.mxu0
  %v1751 = vadd.f32 0.0, %v1750
  %1752 = vmatmul.f32.gmra.mxu0 %v869
  %v1753 = vpop.f32.mrf.mxu0
  %v1754 = vadd.f32 0.0, %v1753
  %1755 = vmatmul.f32.gmra.mxu0 %v872
  %v1756 = vpop.f32.mrf.mxu0
  %v1757 = vadd.f32 0.0, %v1756
  %1758 = vmatmul.f32.gmra.mxu0 %v875
  %v1759 = vpop.f32.mrf.mxu0
  %v1760 = vadd.f32 0.0, %v1759
  %1761 = vmatmul.f32.gmra.mxu0 %v878
  %v1762 = vpop.f32.mrf.mxu0
  %v1763 = vadd.f32 0.0, %v1762
  %1764 = vmatmul.f32.gmra.mxu0 %v881
  %v1765 = vpop.f32.mrf.mxu0
  %v1766 = vadd.f32 0.0, %v1765
  %1767 = vmatmul.f32.gmra.mxu0 %v884
  %v1768 = vpop.f32.mrf.mxu0
  %v1769 = vadd.f32 0.0, %v1768
  %1770 = vmatmul.f32.gmra.mxu0 %v887
  %v1771 = vpop.f32.mrf.mxu0
  %v1772 = vadd.f32 0.0, %v1771
  %1773 = vmatmul.f32.gmra.mxu0 %v890
  %v1774 = vpop.f32.mrf.mxu0
  %v1775 = vadd.f32 0.0, %v1774
  %1776 = vmatmul.f32.gmra.mxu0 %v893
  %v1777 = vpop.f32.mrf.mxu0
  %v1778 = vadd.f32 0.0, %v1777
  %1779 = vmatmul.f32.gmra.mxu0 %v896
  %v1780 = vpop.f32.mrf.mxu0
  %v1781 = vadd.f32 0.0, %v1780
  %1782 = vmatmul.f32.gmra.mxu0 %v899
  %v1783 = vpop.f32.mrf.mxu0
  %v1784 = vadd.f32 0.0, %v1783
  %1785 = vmatmul.f32.gmra.mxu0 %v902
  %v1786 = vpop.f32.mrf.mxu0
  %v1787 = vadd.f32 0.0, %v1786
  %1788 = vmatmul.f32.gmra.mxu0 %v905
  %v1789 = vpop.f32.mrf.mxu0
  %v1790 = vadd.f32 0.0, %v1789
  %1791 = vmatmul.f32.gmra.mxu0 %v908
  %v1792 = vpop.f32.mrf.mxu0
  %v1793 = vadd.f32 0.0, %v1792
  %1794 = vmatmul.f32.gmra.mxu0 %v911
  %v1795 = vpop.f32.mrf.mxu0
  %v1796 = vadd.f32 0.0, %v1795
  %1797 = vmatmul.f32.gmra.mxu0 %v914
  %v1798 = vpop.f32.mrf.mxu0
  %v1799 = vadd.f32 0.0, %v1798
  %1800 = vmatmul.f32.gmra.mxu0 %v917
  %v1801 = vpop.f32.mrf.mxu0
  %v1802 = vadd.f32 0.0, %v1801
  %1803 = vmatmul.f32.gmra.mxu0 %v920
  %v1804 = vpop.f32.mrf.mxu0
  %v1805 = vadd.f32 0.0, %v1804
  %1806 = vmatmul.f32.gmra.mxu0 %v923
  %v1807 = vpop.f32.mrf.mxu0
  %v1808 = vadd.f32 0.0, %v1807
  %1809 = vmatmul.f32.gmra.mxu0 %v926
  %v1810 = vpop.f32.mrf.mxu0
  %v1811 = vadd.f32 0.0, %v1810
  %1812 = vmatmul.f32.gmra.mxu0 %v929
  %v1813 = vpop.f32.mrf.mxu0
  %v1814 = vadd.f32 0.0, %v1813
  %1815 = vmatmul.f32.gmra.mxu0 %v932
  %v1816 = vpop.f32.mrf.mxu0
  %v1817 = vadd.f32 0.0, %v1816
  %1818 = vmatmul.f32.gmra.mxu0 %v935
  %v1819 = vpop.f32.mrf.mxu0
  %v1820 = vadd.f32 0.0, %v1819
  %1821 = vmatmul.f32.gmra.mxu0 %v938
  %v1822 = vpop.f32.mrf.mxu0
  %v1823 = vadd.f32 0.0, %v1822
  %1824 = vmatmul.f32.gmra.mxu0 %v941
  %v1825 = vpop.f32.mrf.mxu0
  %v1826 = vadd.f32 0.0, %v1825
  %1827 = vmatmul.f32.gmra.mxu0 %v944
  %v1828 = vpop.f32.mrf.mxu0
  %v1829 = vadd.f32 0.0, %v1828
  %1830 = vmatmul.f32.gmra.mxu0 %v947
  %v1831 = vpop.f32.mrf.mxu0
  %v1832 = vadd.f32 0.0, %v1831
  %1833 = vmatmul.f32.gmra.mxu0 %v950
  %v1834 = vpop.f32.mrf.mxu0
  %v1835 = vadd.f32 0.0, %v1834
  %1836 = vmatmul.f32.gmra.mxu0 %v953
  %v1837 = vpop.f32.mrf.mxu0
  %v1838 = vadd.f32 0.0, %v1837
  %1839 = vmatmul.f32.gmra.mxu0 %v956
  %v1840 = vpop.f32.mrf.mxu0
  %v1841 = vadd.f32 0.0, %v1840
  %1842 = vmatmul.f32.gmra.mxu0 %v959
  %v1843 = vpop.f32.mrf.mxu0
  %v1844 = vadd.f32 0.0, %v1843
  %1845 = vmatmul.f32.gmra.mxu0 %v962
  %v1846 = vpop.f32.mrf.mxu0
  %v1847 = vadd.f32 0.0, %v1846
  %1848 = vmatmul.f32.gmra.mxu0 %v965
  %v1849 = vpop.f32.mrf.mxu0
  %v1850 = vadd.f32 0.0, %v1849
  %1851 = vmatmul.f32.gmra.mxu0 %v968
  %v1852 = vpop.f32.mrf.mxu0
  %v1853 = vadd.f32 0.0, %v1852
  %1854 = vmatmul.f32.gmra.mxu0 %v971
  %v1855 = vpop.f32.mrf.mxu0
  %v1856 = vadd.f32 0.0, %v1855
  %1857 = vmatmul.f32.gmra.mxu0 %v974
  %v1858 = vpop.f32.mrf.mxu0
  %v1859 = vadd.f32 0.0, %v1858
  %1860 = vmatmul.f32.gmra.mxu0 %v977
  %v1861 = vpop.f32.mrf.mxu0
  %v1862 = vadd.f32 0.0, %v1861
  %1863 = vmatmul.f32.gmra.mxu0 %v980
  %v1864 = vpop.f32.mrf.mxu0
  %v1865 = vadd.f32 0.0, %v1864
  %1866 = vmatmul.f32.gmra.mxu0 %v983
  %v1867 = vpop.f32.mrf.mxu0
  %v1868 = vadd.f32 0.0, %v1867
  %1869 = vmatmul.f32.gmra.mxu0 %v986
  %v1870 = vpop.f32.mrf.mxu0
  %v1871 = vadd.f32 0.0, %v1870
  %1872 = vmatmul.f32.gmra.mxu0 %v989
  %v1873 = vpop.f32.mrf.mxu0
  %v1874 = vadd.f32 0.0, %v1873
  %1875 = vmatmul.f32.gmra.mxu0 %v992
  %v1876 = vpop.f32.mrf.mxu0
  %v1877 = vadd.f32 0.0, %v1876
  %1878 = vmatmul.f32.gmra.mxu0 %v995
  %v1879 = vpop.f32.mrf.mxu0
  %v1880 = vadd.f32 0.0, %v1879
  %1881 = vmatmul.f32.gmra.mxu0 %v998
  %v1882 = vpop.f32.mrf.mxu0
  %v1883 = vadd.f32 0.0, %v1882
  %1884 = vmatmul.f32.gmra.mxu0 %v1001
  %v1885 = vpop.f32.mrf.mxu0
  %v1886 = vadd.f32 0.0, %v1885
  %1887 = vmatmul.f32.gmra.mxu0 %v1004
  %v1888 = vpop.f32.mrf.mxu0
  %v1889 = vadd.f32 0.0, %v1888
  %1890 = vmatmul.f32.gmra.mxu0 %v1007
  %v1891 = vpop.f32.mrf.mxu0
  %v1892 = vadd.f32 0.0, %v1891
  %1893 = vmatmul.f32.gmra.mxu0 %v1010
  %v1894 = vpop.f32.mrf.mxu0
  %v1895 = vadd.f32 0.0, %v1894
  %1896 = vmatmul.f32.gmra.mxu0 %v1013
  %v1897 = vpop.f32.mrf.mxu0
  %v1898 = vadd.f32 0.0, %v1897
  %1899 = vmatmul.f32.gmra.mxu0 %v1016
  %v1900 = vpop.f32.mrf.mxu0
  %v1901 = vadd.f32 0.0, %v1900
  %1902 = vmatmul.f32.gmra.mxu0 %v1019
  %v1903 = vpop.f32.mrf.mxu0
  %v1904 = vadd.f32 0.0, %v1903
  %1905 = vmatmul.f32.gmra.mxu0 %v1022
  %v1906 = vpop.f32.mrf.mxu0
  %v1907 = vadd.f32 0.0, %v1906
  %1908 = vmatmul.f32.gmra.mxu0 %v1025
  %v1909 = vpop.f32.mrf.mxu0
  %v1910 = vadd.f32 0.0, %v1909
  %1911 = vmatmul.f32.gmra.mxu0 %v1028
  %v1912 = vpop.f32.mrf.mxu0
  %v1913 = vadd.f32 0.0, %v1912
  %1914 = vmatmul.f32.gmra.mxu0 %v1031
  %v1915 = vpop.f32.mrf.mxu0
  %v1916 = vadd.f32 0.0, %v1915
  %1917 = vmatmul.f32.gmra.mxu0 %v1034
  %v1918 = vpop.f32.mrf.mxu0
  %v1919 = vadd.f32 0.0, %v1918
  %1920 = vmatmul.f32.gmra.mxu0 %v1037
  %v1921 = vpop.f32.mrf.mxu0
  %v1922 = vadd.f32 0.0, %v1921
  %1923 = vmatmul.f32.gmra.mxu0 %v1040
  %v1924 = vpop.f32.mrf.mxu0
  %v1925 = vadd.f32 0.0, %v1924
  %1926 = vmatmul.f32.gmra.mxu0 %v1043
  %v1927 = vpop.f32.mrf.mxu0
  %v1928 = vadd.f32 0.0, %v1927
  %1929 = vmatmul.f32.gmra.mxu0 %v1046
  %v1930 = vpop.f32.mrf.mxu0
  %v1931 = vadd.f32 0.0, %v1930
  %1932 = vmatmul.f32.gmra.mxu0 %v1049
  %v1933 = vpop.f32.mrf.mxu0
  %v1934 = vadd.f32 0.0, %v1933
  %1935 = vmatmul.f32.gmra.mxu0 %v1052
  %v1936 = vpop.f32.mrf.mxu0
  %v1937 = vadd.f32 0.0, %v1936
  %1938 = vmatmul.f32.gmra.mxu0 %v1055
  %v1939 = vpop.f32.mrf.mxu0
  %v1940 = vadd.f32 0.0, %v1939
  %1941 = vmatmul.f32.gmra.mxu0 %v1058
  %v1942 = vpop.f32.mrf.mxu0
  %v1943 = vadd.f32 0.0, %v1942
  %1944 = vmatmul.f32.gmra.mxu0 %v1061
  %v1945 = vpop.f32.mrf.mxu0
  %v1946 = vadd.f32 0.0, %v1945
  %1947 = vmatmul.f32.gmra.mxu0 %v1064
  %v1948 = vpop.f32.mrf.mxu0
  %v1949 = vadd.f32 0.0, %v1948
  %1950 = vmatmul.f32.gmra.mxu0 %v1067
  %v1951 = vpop.f32.mrf.mxu0
  %v1952 = vadd.f32 0.0, %v1951
  %1953 = vmatmul.f32.gmra.mxu0 %v1070
  %v1954 = vpop.f32.mrf.mxu0
  %v1955 = vadd.f32 0.0, %v1954
  %1956 = vmatmul.f32.gmra.mxu0 %v1073
  %v1957 = vpop.f32.mrf.mxu0
  %v1958 = vadd.f32 0.0, %v1957
  %1959 = vmatmul.f32.gmra.mxu0 %v1076
  %v1960 = vpop.f32.mrf.mxu0
  %v1961 = vadd.f32 0.0, %v1960
  %1962 = vmatmul.f32.gmra.mxu0 %v1079
  %v1963 = vpop.f32.mrf.mxu0
  %v1964 = vadd.f32 0.0, %v1963
  %1965 = vmatmul.f32.gmra.mxu0 %v1082
  %v1966 = vpop.f32.mrf.mxu0
  %v1967 = vadd.f32 0.0, %v1966
  %1968 = vmatmul.f32.gmra.mxu0 %v1085
  %v1969 = vpop.f32.mrf.mxu0
  %v1970 = vadd.f32 0.0, %v1969
  %1971 = vmatmul.f32.gmra.mxu0 %v1088
  %v1972 = vpop.f32.mrf.mxu0
  %v1973 = vadd.f32 0.0, %v1972
  %1974 = vmatmul.f32.gmra.mxu0 %v1091
  %v1975 = vpop.f32.mrf.mxu0
  %v1976 = vadd.f32 0.0, %v1975
  %1977 = vmatmul.f32.gmra.mxu0 %v1094
  %v1978 = vpop.f32.mrf.mxu0
  %v1979 = vadd.f32 0.0, %v1978
  %1980 = vmatmul.f32.gmra.mxu0 %v1097
  %v1981 = vpop.f32.mrf.mxu0
  %v1982 = vadd.f32 0.0, %v1981
  %1983 = vmatmul.f32.gmra.mxu0 %v1100
  %v1984 = vpop.f32.mrf.mxu0
  %v1985 = vadd.f32 0.0, %v1984
  %1986 = vmatmul.f32.gmra.mxu0 %v1103
  %v1987 = vpop.f32.mrf.mxu0
  %v1988 = vadd.f32 0.0, %v1987
  %1989 = vmatmul.f32.gmra.mxu0 %v1106
  %v1990 = vpop.f32.mrf.mxu0
  %v1991 = vadd.f32 0.0, %v1990
  %1992 = vmatmul.f32.gmra.mxu0 %v1109
  %v1993 = vpop.f32.mrf.mxu0
  %v1994 = vadd.f32 0.0, %v1993
  %1995 = vmatmul.f32.gmra.mxu0 %v1112
  %v1996 = vpop.f32.mrf.mxu0
  %v1997 = vadd.f32 0.0, %v1996
  %1998 = vmatmul.f32.gmra.mxu0 %v1115
  %v1999 = vpop.f32.mrf.mxu0
  %v2000 = vadd.f32 0.0, %v1999
  %2001 = vmatmul.f32.gmra.mxu0 %v1118
  %v2002 = vpop.f32.mrf.mxu0
  %v2003 = vadd.f32 0.0, %v2002
  %2004 = vmatmul.f32.gmra.mxu0 %v1121
  %v2005 = vpop.f32.mrf.mxu0
  %v2006 = vadd.f32 0.0, %v2005
  %2007 = vmatmul.f32.gmra.mxu0 %v1124
  %v2008 = vpop.f32.mrf.mxu0
  %v2009 = vadd.f32 0.0, %v2008
  %2010 = vmatmul.f32.gmra.mxu0 %v1127
  %v2011 = vpop.f32.mrf.mxu0
  %v2012 = vadd.f32 0.0, %v2011
  %2013 = vmatmul.f32.gmra.mxu0 %v1130
  %v2014 = vpop.f32.mrf.mxu0
  %v2015 = vadd.f32 0.0, %v2014
  %2016 = vmatmul.f32.gmra.mxu0 %v1133
  %v2017 = vpop.f32.mrf.mxu0
  %v2018 = vadd.f32 0.0, %v2017
  %2019 = vmatmul.f32.gmra.mxu0 %v1136
  %v2020 = vpop.f32.mrf.mxu0
  %v2021 = vadd.f32 0.0, %v2020
  %2022 = vmatmul.f32.gmra.mxu0 %v1139
  %v2023 = vpop.f32.mrf.mxu0
  %v2024 = vadd.f32 0.0, %v2023
  %2025 = vmatmul.f32.gmra.mxu0 %v1142
  %v2026 = vpop.f32.mrf.mxu0
  %v2027 = vadd.f32 0.0, %v2026
  %2028 = vmatmul.f32.gmra.mxu0 %v1145
  %v2029 = vpop.f32.mrf.mxu0
  %v2030 = vadd.f32 0.0, %v2029
  %2031 = vmatmul.f32.gmra.mxu0 %v1148
  %v2032 = vpop.f32.mrf.mxu0
  %v2033 = vadd.f32 0.0, %v2032
  %2034 = vmatmul.f32.gmra.mxu0 %v1151
  %v2035 = vpop.f32.mrf.mxu0
  %v2036 = vadd.f32 0.0, %v2035
  %2037 = vmatmul.f32.gmra.mxu0 %v1154
  %v2038 = vpop.f32.mrf.mxu0
  %v2039 = vadd.f32 0.0, %v2038
  %2040 = vmatmul.f32.gmra.mxu0 %v1157
  %v2041 = vpop.f32.mrf.mxu0
  %v2042 = vadd.f32 0.0, %v2041
  %2043 = vmatmul.f32.gmra.mxu0 %v1160
  %v2044 = vpop.f32.mrf.mxu0
  %v2045 = vadd.f32 0.0, %v2044
  %2046 = vmatmul.f32.gmra.mxu0 %v1163
  %v2047 = vpop.f32.mrf.mxu0
  %v2048 = vadd.f32 0.0, %v2047
  %2049 = vmatmul.f32.gmra.mxu0 %v1166
  %v2050 = vpop.f32.mrf.mxu0
  %v2051 = vadd.f32 0.0, %v2050
  %2052 = vmatmul.f32.gmra.mxu0 %v1169
  %v2053 = vpop.f32.mrf.mxu0
  %v2054 = vadd.f32 0.0, %v2053
  %2055 = vdwg.mxu0
  %v2056 = vmax.f32 %v1193, %v1409
  %v2057 = vmax.f32 %v1196, %v1412
  %v2058 = vmax.f32 %v1199, %v1415
  %v2059 = vmax.f32 %v1202, %v1418
  %v2060 = vmax.f32 %v1205, %v1421
  %v2061 = vmax.f32 %v1208, %v1424
  %v2062 = vmax.f32 %v1211, %v1427
  %v2063 = vmax.f32 %v1214, %v1430
  %v2064 = vmax.f32 %v1217, %v1433
  %v2065 = vmax.f32 %v1220, %v1436
  %v2066 = vmax.f32 %v1223, %v1439
  %v2067 = vmax.f32 %v1226, %v1442
  %v2068 = vmax.f32 %v1229, %v1445
  %v2069 = vmax.f32 %v1232, %v1448
  %v2070 = vmax.f32 %v1235, %v1451
  %v2071 = vmax.f32 %v1238, %v1454
  %v2072 = vmax.f32 %v1241, %v1457
  %v2073 = vmax.f32 %v1244, %v1460
  %v2074 = vmax.f32 %v1247, %v1463
  %v2075 = vmax.f32 %v1250, %v1466
  %v2076 = vmax.f32 %v1253, %v1469
  %v2077 = vmax.f32 %v1256, %v1472
  %v2078 = vmax.f32 %v1259, %v1475
  %v2079 = vmax.f32 %v1262, %v1478
  %v2080 = vmax.f32 %v1265, %v1481
  %v2081 = vmax.f32 %v1268, %v1484
  %v2082 = vmax.f32 %v1271, %v1487
  %v2083 = vmax.f32 %v1274, %v1490
  %v2084 = vmax.f32 %v1277, %v1493
  %v2085 = vmax.f32 %v1280, %v1496
  %v2086 = vmax.f32 %v1283, %v1499
  %v2087 = vmax.f32 %v1286, %v1502
  %v2088 = vmax.f32 %v1289, %v1505
  %v2089 = vmax.f32 %v1292, %v1508
  %v2090 = vmax.f32 %v1295, %v1511
  %v2091 = vmax.f32 %v1298, %v1514
  %v2092 = vmax.f32 %v1301, %v1517
  %v2093 = vmax.f32 %v1304, %v1520
  %v2094 = vmax.f32 %v1307, %v1523
  %v2095 = vmax.f32 %v1310, %v1526
  %v2096 = vmax.f32 %v1313, %v1529
  %v2097 = vmax.f32 %v1316, %v1532
  %v2098 = vmax.f32 %v1319, %v1535
  %v2099 = vmax.f32 %v1322, %v1538
  %v2100 = vmax.f32 %v1325, %v1541
  %v2101 = vmax.f32 %v1328, %v1544
  %v2102 = vmax.f32 %v1331, %v1547
  %v2103 = vmax.f32 %v1334, %v1550
  %v2104 = vmax.f32 %v1337, %v1553
  %v2105 = vmax.f32 %v1340, %v1556
  %v2106 = vmax.f32 %v1343, %v1559
  %v2107 = vmax.f32 %v1346, %v1562
  %v2108 = vmax.f32 %v1349, %v1565
  %v2109 = vmax.f32 %v1352, %v1568
  %v2110 = vmax.f32 %v1355, %v1571
  %v2111 = vmax.f32 %v1358, %v1574
  %v2112 = vmax.f32 %v1361, %v1577
  %v2113 = vmax.f32 %v1364, %v1580
  %v2114 = vmax.f32 %v1367, %v1583
  %v2115 = vmax.f32 %v1370, %v1586
  %v2116 = vmax.f32 %v1373, %v1589
  %v2117 = vmax.f32 %v1376, %v1592
  %v2118 = vmax.f32 %v1379, %v1595
  %v2119 = vmax.f32 %v1382, %v1598
  %v2120 = vmax.f32 %v1385, %v1601
  %v2121 = vmax.f32 %v1388, %v1604
  %v2122 = vmax.f32 %v1391, %v1607
  %v2123 = vmax.f32 %v1394, %v1610
  %v2124 = vmax.f32 %v1397, %v1613
  %v2125 = vmax.f32 %v1400, %v1616
  %v2126 = vmax.f32 %v1403, %v1619
  %v2127 = vmax.f32 %v1406, %v1622
  %v2128 = vmax.f32 %v1625, %v1841
  %v2129 = vmax.f32 %v1628, %v1844
  %v2130 = vmax.f32 %v1631, %v1847
  %v2131 = vmax.f32 %v1634, %v1850
  %v2132 = vmax.f32 %v1637, %v1853
  %v2133 = vmax.f32 %v1640, %v1856
  %v2134 = vmax.f32 %v1643, %v1859
  %v2135 = vmax.f32 %v1646, %v1862
  %v2136 = vmax.f32 %v1649, %v1865
  %v2137 = vmax.f32 %v1652, %v1868
  %v2138 = vmax.f32 %v1655, %v1871
  %v2139 = vmax.f32 %v1658, %v1874
  %v2140 = vmax.f32 %v1661, %v1877
  %v2141 = vmax.f32 %v1664, %v1880
  %v2142 = vmax.f32 %v1667, %v1883
  %v2143 = vmax.f32 %v1670, %v1886
  %v2144 = vmax.f32 %v1673, %v1889
  %v2145 = vmax.f32 %v1676, %v1892
  %v2146 = vmax.f32 %v1679, %v1895
  %v2147 = vmax.f32 %v1682, %v1898
  %v2148 = vmax.f32 %v1685, %v1901
  %v2149 = vmax.f32 %v1688, %v1904
  %v2150 = vmax.f32 %v1691, %v1907
  %v2151 = vmax.f32 %v1694, %v1910
  %v2152 = vmax.f32 %v1697, %v1913
  %v2153 = vmax.f32 %v1700, %v1916
  %v2154 = vmax.f32 %v1703, %v1919
  %v2155 = vmax.f32 %v1706, %v1922
  %v2156 = vmax.f32 %v1709, %v1925
  %v2157 = vmax.f32 %v1712, %v1928
  %v2158 = vmax.f32 %v1715, %v1931
  %v2159 = vmax.f32 %v1718, %v1934
  %v2160 = vmax.f32 %v1721, %v1937
  %v2161 = vmax.f32 %v1724, %v1940
  %v2162 = vmax.f32 %v1727, %v1943
  %v2163 = vmax.f32 %v1730, %v1946
  %v2164 = vmax.f32 %v1733, %v1949
  %v2165 = vmax.f32 %v1736, %v1952
  %v2166 = vmax.f32 %v1739, %v1955
  %v2167 = vmax.f32 %v1742, %v1958
  %v2168 = vmax.f32 %v1745, %v1961
  %v2169 = vmax.f32 %v1748, %v1964
  %v2170 = vmax.f32 %v1751, %v1967
  %v2171 = vmax.f32 %v1754, %v1970
  %v2172 = vmax.f32 %v1757, %v1973
  %v2173 = vmax.f32 %v1760, %v1976
  %v2174 = vmax.f32 %v1763, %v1979
  %v2175 = vmax.f32 %v1766, %v1982
  %v2176 = vmax.f32 %v1769, %v1985
  %v2177 = vmax.f32 %v1772, %v1988
  %v2178 = vmax.f32 %v1775, %v1991
  %v2179 = vmax.f32 %v1778, %v1994
  %v2180 = vmax.f32 %v1781, %v1997
  %v2181 = vmax.f32 %v1784, %v2000
  %v2182 = vmax.f32 %v1787, %v2003
  %v2183 = vmax.f32 %v1790, %v2006
  %v2184 = vmax.f32 %v1793, %v2009
  %v2185 = vmax.f32 %v1796, %v2012
  %v2186 = vmax.f32 %v1799, %v2015
  %v2187 = vmax.f32 %v1802, %v2018
  %v2188 = vmax.f32 %v1805, %v2021
  %v2189 = vmax.f32 %v1808, %v2024
  %v2190 = vmax.f32 %v1811, %v2027
  %v2191 = vmax.f32 %v1814, %v2030
  %v2192 = vmax.f32 %v1817, %v2033
  %v2193 = vmax.f32 %v1820, %v2036
  %v2194 = vmax.f32 %v1823, %v2039
  %v2195 = vmax.f32 %v1826, %v2042
  %v2196 = vmax.f32 %v1829, %v2045
  %v2197 = vmax.f32 %v1832, %v2048
  %v2198 = vmax.f32 %v1835, %v2051
  %v2199 = vmax.f32 %v1838, %v2054
  %v2200 = vmax.f32 %v2056, %v2128
  %v2201 = vmax.f32 %v2057, %v2129
  %v2202 = vmax.f32 %v2058, %v2130
  %v2203 = vmax.f32 %v2059, %v2131
  %v2204 = vmax.f32 %v2060, %v2132
  %v2205 = vmax.f32 %v2061, %v2133
  %v2206 = vmax.f32 %v2062, %v2134
  %v2207 = vmax.f32 %v2063, %v2135
  %v2208 = vmax.f32 %v2064, %v2136
  %v2209 = vmax.f32 %v2065, %v2137
  %v2210 = vmax.f32 %v2066, %v2138
  %v2211 = vmax.f32 %v2067, %v2139
  %v2212 = vmax.f32 %v2068, %v2140
  %v2213 = vmax.f32 %v2069, %v2141
  %v2214 = vmax.f32 %v2070, %v2142
  %v2215 = vmax.f32 %v2071, %v2143
  %v2216 = vmax.f32 %v2072, %v2144
  %v2217 = vmax.f32 %v2073, %v2145
  %v2218 = vmax.f32 %v2074, %v2146
  %v2219 = vmax.f32 %v2075, %v2147
  %v2220 = vmax.f32 %v2076, %v2148
  %v2221 = vmax.f32 %v2077, %v2149
  %v2222 = vmax.f32 %v2078, %v2150
  %v2223 = vmax.f32 %v2079, %v2151
  %v2224 = vmax.f32 %v2080, %v2152
  %v2225 = vmax.f32 %v2081, %v2153
  %v2226 = vmax.f32 %v2082, %v2154
  %v2227 = vmax.f32 %v2083, %v2155
  %v2228 = vmax.f32 %v2084, %v2156
  %v2229 = vmax.f32 %v2085, %v2157
  %v2230 = vmax.f32 %v2086, %v2158
  %v2231 = vmax.f32 %v2087, %v2159
  %v2232 = vmax.f32 %v2088, %v2160
  %v2233 = vmax.f32 %v2089, %v2161
  %v2234 = vmax.f32 %v2090, %v2162
  %v2235 = vmax.f32 %v2091, %v2163
  %v2236 = vmax.f32 %v2092, %v2164
  %v2237 = vmax.f32 %v2093, %v2165
  %v2238 = vmax.f32 %v2094, %v2166
  %v2239 = vmax.f32 %v2095, %v2167
  %v2240 = vmax.f32 %v2096, %v2168
  %v2241 = vmax.f32 %v2097, %v2169
  %v2242 = vmax.f32 %v2098, %v2170
  %v2243 = vmax.f32 %v2099, %v2171
  %v2244 = vmax.f32 %v2100, %v2172
  %v2245 = vmax.f32 %v2101, %v2173
  %v2246 = vmax.f32 %v2102, %v2174
  %v2247 = vmax.f32 %v2103, %v2175
  %v2248 = vmax.f32 %v2104, %v2176
  %v2249 = vmax.f32 %v2105, %v2177
  %v2250 = vmax.f32 %v2106, %v2178
  %v2251 = vmax.f32 %v2107, %v2179
  %v2252 = vmax.f32 %v2108, %v2180
  %v2253 = vmax.f32 %v2109, %v2181
  %v2254 = vmax.f32 %v2110, %v2182
  %v2255 = vmax.f32 %v2111, %v2183
  %v2256 = vmax.f32 %v2112, %v2184
  %v2257 = vmax.f32 %v2113, %v2185
  %v2258 = vmax.f32 %v2114, %v2186
  %v2259 = vmax.f32 %v2115, %v2187
  %v2260 = vmax.f32 %v2116, %v2188
  %v2261 = vmax.f32 %v2117, %v2189
  %v2262 = vmax.f32 %v2118, %v2190
  %v2263 = vmax.f32 %v2119, %v2191
  %v2264 = vmax.f32 %v2120, %v2192
  %v2265 = vmax.f32 %v2121, %v2193
  %v2266 = vmax.f32 %v2122, %v2194
  %v2267 = vmax.f32 %v2123, %v2195
  %v2268 = vmax.f32 %v2124, %v2196
  %v2269 = vmax.f32 %v2125, %v2197
  %v2270 = vmax.f32 %v2126, %v2198
  %v2271 = vmax.f32 %v2127, %v2199
  %v2272 = vld [vmem:[%s2] sm:$0x1]
  %v2274 = vperm.slane %v2272, 0
  %v2276 = vadd.f32 %v2200, %v2274
  %v2277 = vadd.f32 %v2201, %v2274
  %v2278 = vadd.f32 %v2202, %v2274
  %v2279 = vadd.f32 %v2203, %v2274
  %v2280 = vadd.f32 %v2204, %v2274
  %v2281 = vadd.f32 %v2205, %v2274
  %v2282 = vadd.f32 %v2206, %v2274
  %v2283 = vadd.f32 %v2207, %v2274
  %v2284 = vadd.f32 %v2208, %v2274
  %v2285 = vadd.f32 %v2209, %v2274
  %v2286 = vadd.f32 %v2210, %v2274
  %v2287 = vadd.f32 %v2211, %v2274
  %v2288 = vadd.f32 %v2212, %v2274
  %v2289 = vadd.f32 %v2213, %v2274
  %v2290 = vadd.f32 %v2214, %v2274
  %v2291 = vadd.f32 %v2215, %v2274
  %v2292 = vadd.f32 %v2216, %v2274
  %v2293 = vadd.f32 %v2217, %v2274
  %v2294 = vadd.f32 %v2218, %v2274
  %v2295 = vadd.f32 %v2219, %v2274
  %v2296 = vadd.f32 %v2220, %v2274
  %v2297 = vadd.f32 %v2221, %v2274
  %v2298 = vadd.f32 %v2222, %v2274
  %v2299 = vadd.f32 %v2223, %v2274
  %v2300 = vadd.f32 %v2224, %v2274
  %v2301 = vadd.f32 %v2225, %v2274
  %v2302 = vadd.f32 %v2226, %v2274
  %v2303 = vadd.f32 %v2227, %v2274
  %v2304 = vadd.f32 %v2228, %v2274
  %v2305 = vadd.f32 %v2229, %v2274
  %v2306 = vadd.f32 %v2230, %v2274
  %v2307 = vadd.f32 %v2231, %v2274
  %v2308 = vadd.f32 %v2232, %v2274
  %v2309 = vadd.f32 %v2233, %v2274
  %v2310 = vadd.f32 %v2234, %v2274
  %v2311 = vadd.f32 %v2235, %v2274
  %v2312 = vadd.f32 %v2236, %v2274
  %v2313 = vadd.f32 %v2237, %v2274
  %v2314 = vadd.f32 %v2238, %v2274
  %v2315 = vadd.f32 %v2239, %v2274
  %v2316 = vadd.f32 %v2240, %v2274
  %v2317 = vadd.f32 %v2241, %v2274
  %v2318 = vadd.f32 %v2242, %v2274
  %v2319 = vadd.f32 %v2243, %v2274
  %v2320 = vadd.f32 %v2244, %v2274
  %v2321 = vadd.f32 %v2245, %v2274
  %v2322 = vadd.f32 %v2246, %v2274
  %v2323 = vadd.f32 %v2247, %v2274
  %v2324 = vadd.f32 %v2248, %v2274
  %v2325 = vadd.f32 %v2249, %v2274
  %v2326 = vadd.f32 %v2250, %v2274
  %v2327 = vadd.f32 %v2251, %v2274
  %v2328 = vadd.f32 %v2252, %v2274
  %v2329 = vadd.f32 %v2253, %v2274
  %v2330 = vadd.f32 %v2254, %v2274
  %v2331 = vadd.f32 %v2255, %v2274
  %v2332 = vadd.f32 %v2256, %v2274
  %v2333 = vadd.f32 %v2257, %v2274
  %v2334 = vadd.f32 %v2258, %v2274
  %v2335 = vadd.f32 %v2259, %v2274
  %v2336 = vadd.f32 %v2260, %v2274
  %v2337 = vadd.f32 %v2261, %v2274
  %v2338 = vadd.f32 %v2262, %v2274
  %v2339 = vadd.f32 %v2263, %v2274
  %v2340 = vadd.f32 %v2264, %v2274
  %v2341 = vadd.f32 %v2265, %v2274
  %v2342 = vadd.f32 %v2266, %v2274
  %v2343 = vadd.f32 %v2267, %v2274
  %v2344 = vadd.f32 %v2268, %v2274
  %v2345 = vadd.f32 %v2269, %v2274
  %v2346 = vadd.f32 %v2270, %v2274
  %v2347 = vadd.f32 %v2271, %v2274
  %v2348 = vmax.f32 %v2276, 0.0
  %v2349 = vmax.f32 %v2277, 0.0
  %v2350 = vmax.f32 %v2278, 0.0
  %v2351 = vmax.f32 %v2279, 0.0
  %v2352 = vmax.f32 %v2280, 0.0
  %v2353 = vmax.f32 %v2281, 0.0
  %v2354 = vmax.f32 %v2282, 0.0
  %v2355 = vmax.f32 %v2283, 0.0
  %v2356 = vmax.f32 %v2284, 0.0
  %v2357 = vmax.f32 %v2285, 0.0
  %v2358 = vmax.f32 %v2286, 0.0
  %v2359 = vmax.f32 %v2287, 0.0
  %v2360 = vmax.f32 %v2288, 0.0
  %v2361 = vmax.f32 %v2289, 0.0
  %v2362 = vmax.f32 %v2290, 0.0
  %v2363 = vmax.f32 %v2291, 0.0
  %v2364 = vmax.f32 %v2292, 0.0
  %v2365 = vmax.f32 %v2293, 0.0
  %v2366 = vmax.f32 %v2294, 0.0
  %v2367 = vmax.f32 %v2295, 0.0
  %v2368 = vmax.f32 %v2296, 0.0
  %v2369 = vmax.f32 %v2297, 0.0
  %v2370 = vmax.f32 %v2298, 0.0
  %v2371 = vmax.f32 %v2299, 0.0
  %v2372 = vmax.f32 %v2300, 0.0
  %v2373 = vmax.f32 %v2301, 0.0
  %v2374 = vmax.f32 %v2302, 0.0
  %v2375 = vmax.f32 %v2303, 0.0
  %v2376 = vmax.f32 %v2304, 0.0
  %v2377 = vmax.f32 %v2305, 0.0
  %v2378 = vmax.f32 %v2306, 0.0
  %v2379 = vmax.f32 %v2307, 0.0
  %v2380 = vmax.f32 %v2308, 0.0
  %v2381 = vmax.f32 %v2309, 0.0
  %v2382 = vmax.f32 %v2310, 0.0
  %v2383 = vmax.f32 %v2311, 0.0
  %v2384 = vmax.f32 %v2312, 0.0
  %v2385 = vmax.f32 %v2313, 0.0
  %v2386 = vmax.f32 %v2314, 0.0
  %v2387 = vmax.f32 %v2315, 0.0
  %v2388 = vmax.f32 %v2316, 0.0
  %v2389 = vmax.f32 %v2317, 0.0
  %v2390 = vmax.f32 %v2318, 0.0
  %v2391 = vmax.f32 %v2319, 0.0
  %v2392 = vmax.f32 %v2320, 0.0
  %v2393 = vmax.f32 %v2321, 0.0
  %v2394 = vmax.f32 %v2322, 0.0
  %v2395 = vmax.f32 %v2323, 0.0
  %v2396 = vmax.f32 %v2324, 0.0
  %v2397 = vmax.f32 %v2325, 0.0
  %v2398 = vmax.f32 %v2326, 0.0
  %v2399 = vmax.f32 %v2327, 0.0
  %v2400 = vmax.f32 %v2328, 0.0
  %v2401 = vmax.f32 %v2329, 0.0
  %v2402 = vmax.f32 %v2330, 0.0
  %v2403 = vmax.f32 %v2331, 0.0
  %v2404 = vmax.f32 %v2332, 0.0
  %v2405 = vmax.f32 %v2333, 0.0
  %v2406 = vmax.f32 %v2334, 0.0
  %v2407 = vmax.f32 %v2335, 0.0
  %v2408 = vmax.f32 %v2336, 0.0
  %v2409 = vmax.f32 %v2337, 0.0
  %v2410 = vmax.f32 %v2338, 0.0
  %v2411 = vmax.f32 %v2339, 0.0
  %v2412 = vmax.f32 %v2340, 0.0
  %v2413 = vmax.f32 %v2341, 0.0
  %v2414 = vmax.f32 %v2342, 0.0
  %v2415 = vmax.f32 %v2343, 0.0
  %v2416 = vmax.f32 %v2344, 0.0
  %v2417 = vmax.f32 %v2345, 0.0
  %v2418 = vmax.f32 %v2346, 0.0
  %v2419 = vmax.f32 %v2347, 0.0
  %vm2420 = vcmask 48128
  %2421 = vst.msk [vmem:[%s3] sm:$0xff] %vm2420, %v2348
  %2422 = vst.msk [vmem:[%s3 + $0x8] sm:$0xff] %vm2420, %v2349
  %2423 = vst.msk [vmem:[%s3 + $0x10] sm:$0xff] %vm2420, %v2350
  %2424 = vst.msk [vmem:[%s3 + $0x18] sm:$0xff] %vm2420, %v2351
  %2425 = vst.msk [vmem:[%s3 + $0x20] sm:$0xff] %vm2420, %v2352
  %2426 = vst.msk [vmem:[%s3 + $0x28] sm:$0xff] %vm2420, %v2353
  %2427 = vst.msk [vmem:[%s3 + $0x30] sm:$0xff] %vm2420, %v2354
  %2428 = vst.msk [vmem:[%s3 + $0x38] sm:$0xff] %vm2420, %v2355
  %2429 = vst.msk [vmem:[%s3 + $0x40] sm:$0xff] %vm2420, %v2356
  %2430 = vst.msk [vmem:[%s3 + $0x48] sm:$0xff] %vm2420, %v2357
  %2431 = vst.msk [vmem:[%s3 + $0x50] sm:$0xff] %vm2420, %v2358
  %2432 = vst.msk [vmem:[%s3 + $0x58] sm:$0xff] %vm2420, %v2359
  %2433 = vst.msk [vmem:[%s3 + $0x60] sm:$0xff] %vm2420, %v2360
  %2434 = vst.msk [vmem:[%s3 + $0x68] sm:$0xff] %vm2420, %v2361
  %2435 = vst.msk [vmem:[%s3 + $0x70] sm:$0xff] %vm2420, %v2362
  %2436 = vst.msk [vmem:[%s3 + $0x78] sm:$0xff] %vm2420, %v2363
  %2437 = vst.msk [vmem:[%s3 + $0x80] sm:$0xff] %vm2420, %v2364
  %2438 = vst.msk [vmem:[%s3 + $0x88] sm:$0xff] %vm2420, %v2365
  %2439 = vst.msk [vmem:[%s3 + $0x90] sm:$0xff] %vm2420, %v2366
  %2440 = vst.msk [vmem:[%s3 + $0x98] sm:$0xff] %vm2420, %v2367
  %2441 = vst.msk [vmem:[%s3 + $0xa0] sm:$0xff] %vm2420, %v2368
  %2442 = vst.msk [vmem:[%s3 + $0xa8] sm:$0xff] %vm2420, %v2369
  %2443 = vst.msk [vmem:[%s3 + $0xb0] sm:$0xff] %vm2420, %v2370
  %2444 = vst.msk [vmem:[%s3 + $0xb8] sm:$0xff] %vm2420, %v2371
  %2445 = vst.msk [vmem:[%s3 + $0xc0] sm:$0xff] %vm2420, %v2372
  %2446 = vst.msk [vmem:[%s3 + $0xc8] sm:$0xff] %vm2420, %v2373
  %2447 = vst.msk [vmem:[%s3 + $0xd0] sm:$0xff] %vm2420, %v2374
  %2448 = vst.msk [vmem:[%s3 + $0xd8] sm:$0xff] %vm2420, %v2375
  %2449 = vst.msk [vmem:[%s3 + $0xe0] sm:$0xff] %vm2420, %v2376
  %2450 = vst.msk [vmem:[%s3 + $0xe8] sm:$0xff] %vm2420, %v2377
  %2451 = vst.msk [vmem:[%s3 + $0xf0] sm:$0xff] %vm2420, %v2378
  %2452 = vst.msk [vmem:[%s3 + $0xf8] sm:$0xff] %vm2420, %v2379
  %2453 = vst.msk [vmem:[%s3 + $0x100] sm:$0xff] %vm2420, %v2380
  %2454 = vst.msk [vmem:[%s3 + $0x108] sm:$0xff] %vm2420, %v2381
  %2455 = vst.msk [vmem:[%s3 + $0x110] sm:$0xff] %vm2420, %v2382
  %2456 = vst.msk [vmem:[%s3 + $0x118] sm:$0xff] %vm2420, %v2383
  %2457 = vst.msk [vmem:[%s3 + $0x120] sm:$0xff] %vm2420, %v2384
  %2458 = vst.msk [vmem:[%s3 + $0x128] sm:$0xff] %vm2420, %v2385
  %2459 = vst.msk [vmem:[%s3 + $0x130] sm:$0xff] %vm2420, %v2386
  %2460 = vst.msk [vmem:[%s3 + $0x138] sm:$0xff] %vm2420, %v2387
  %2461 = vst.msk [vmem:[%s3 + $0x140] sm:$0xff] %vm2420, %v2388
  %2462 = vst.msk [vmem:[%s3 + $0x148] sm:$0xff] %vm2420, %v2389
  %2463 = vst.msk [vmem:[%s3 + $0x150] sm:$0xff] %vm2420, %v2390
  %2464 = vst.msk [vmem:[%s3 + $0x158] sm:$0xff] %vm2420, %v2391
  %2465 = vst.msk [vmem:[%s3 + $0x160] sm:$0xff] %vm2420, %v2392
  %2466 = vst.msk [vmem:[%s3 + $0x168] sm:$0xff] %vm2420, %v2393
  %2467 = vst.msk [vmem:[%s3 + $0x170] sm:$0xff] %vm2420, %v2394
  %2468 = vst.msk [vmem:[%s3 + $0x178] sm:$0xff] %vm2420, %v2395
  %2469 = vst.msk [vmem:[%s3 + $0x180] sm:$0xff] %vm2420, %v2396
  %2470 = vst.msk [vmem:[%s3 + $0x188] sm:$0xff] %vm2420, %v2397
  %2471 = vst.msk [vmem:[%s3 + $0x190] sm:$0xff] %vm2420, %v2398
  %2472 = vst.msk [vmem:[%s3 + $0x198] sm:$0xff] %vm2420, %v2399
  %2473 = vst.msk [vmem:[%s3 + $0x1a0] sm:$0xff] %vm2420, %v2400
  %2474 = vst.msk [vmem:[%s3 + $0x1a8] sm:$0xff] %vm2420, %v2401
  %2475 = vst.msk [vmem:[%s3 + $0x1b0] sm:$0xff] %vm2420, %v2402
  %2476 = vst.msk [vmem:[%s3 + $0x1b8] sm:$0xff] %vm2420, %v2403
  %2477 = vst.msk [vmem:[%s3 + $0x1c0] sm:$0xff] %vm2420, %v2404
  %2478 = vst.msk [vmem:[%s3 + $0x1c8] sm:$0xff] %vm2420, %v2405
  %2479 = vst.msk [vmem:[%s3 + $0x1d0] sm:$0xff] %vm2420, %v2406
  %2480 = vst.msk [vmem:[%s3 + $0x1d8] sm:$0xff] %vm2420, %v2407
  %2481 = vst.msk [vmem:[%s3 + $0x1e0] sm:$0xff] %vm2420, %v2408
  %2482 = vst.msk [vmem:[%s3 + $0x1e8] sm:$0xff] %vm2420, %v2409
  %2483 = vst.msk [vmem:[%s3 + $0x1f0] sm:$0xff] %vm2420, %v2410
  %2484 = vst.msk [vmem:[%s3 + $0x1f8] sm:$0xff] %vm2420, %v2411
  %2485 = vst.msk [vmem:[%s3 + $0x200] sm:$0xff] %vm2420, %v2412
  %2486 = vst.msk [vmem:[%s3 + $0x208] sm:$0xff] %vm2420, %v2413
  %2487 = vst.msk [vmem:[%s3 + $0x210] sm:$0xff] %vm2420, %v2414
  %2488 = vst.msk [vmem:[%s3 + $0x218] sm:$0xff] %vm2420, %v2415
  %2489 = vst.msk [vmem:[%s3 + $0x220] sm:$0xff] %vm2420, %v2416
  %2490 = vst.msk [vmem:[%s3 + $0x228] sm:$0xff] %vm2420, %v2417
  %2491 = vst.msk [vmem:[%s3 + $0x230] sm:$0xff] %vm2420, %v2418
  %2492 = vst.msk [vmem:[%s3 + $0x238] sm:$0xff] %vm2420, %v2419
  // Predicated region
  $region14: #{mnist_net_forward.5} parent=0 // pred_check
    _
  $region15: #{mnist_net_forward.5} parent=0 // pred_check_branch
    %2494 = sbr.rel (0) target = $region17
  $region16: #{mnist_net_forward.5} parent=0 // pred_region
    _
  $region17: #{mnist_net_forward.5} parent=0 // pred_fallthru
    _
  // Predicated region
  $region18: #{mnist_net_forward.5} parent=0 // pred_check
    _
  $region19: #{mnist_net_forward.5} parent=0 // pred_check_branch
    %2496 = sbr.rel (0) target = $region21
  $region20: #{mnist_net_forward.5} parent=0 // pred_region
    _
  $region21: #{mnist_net_forward.5} parent=0 // pred_fallthru
    _

// kernel: mnist_net_forward.6
$region0: #{mnist_net_forward.6}
  #allocation0 [shape = 'u32[]', space=smem, size = 0x4, offset = 0x4, fixed_abs, tag = 'smem constant byte address 0x4 - core index']
  #allocation1 [shape = 'u32[72,128]{1,0:T(1,128)}', space=vmem, size = 0x9000, scoped, tag = 'internal scratch']
  %s0 = inlined_call_operand.vmem [shape: f32[256,150], index: 0, kind: input, shape index: {}]
  %s1 = inlined_call_operand.vmem [shape: f32[150,16], index: 1, kind: input, shape index: {}]
  %s2 = inlined_call_operand.vmem [shape: f32[1,16], index: 2, kind: input, shape index: {}]
  %s3 = inlined_call_operand.vmem [shape: f32[64,16], index: 3, kind: output, shape index: {}]
  %s4 = sld [smem:[#allocation0]]
  $region22: #{mnist_net_forward.6} parent=0
    _
  %s6 = ssub.s32 1, %s4
  %s7 = scalar_select 0, %s6, %s4
  // Predicated region
  $region2: #{mnist_net_forward.6} parent=0 // pred_check
    _
  $region3: #{mnist_net_forward.6} parent=0 // pred_check_branch
    %9 = sbr.rel (0) target = $region5
  $region4: #{mnist_net_forward.6} parent=0 // pred_region
    _
  $region5: #{mnist_net_forward.6} parent=0 // pred_fallthru
    _
  // Predicated region
  $region6: #{mnist_net_forward.6} parent=0 // pred_check
    _
  $region7: #{mnist_net_forward.6} parent=0 // pred_check_branch
    %11 = sbr.rel (0) target = $region9
  $region8: #{mnist_net_forward.6} parent=0 // pred_region
    _
  $region9: #{mnist_net_forward.6} parent=0 // pred_fallthru
    _
  // Predicated region
  $region10: #{mnist_net_forward.6} parent=0 // pred_check
    _
  $region11: #{mnist_net_forward.6} parent=0 // pred_check_branch
    %13 = sbr.rel (0) target = $region13
  $region12: #{mnist_net_forward.6} parent=0 // pred_region
    _
  $region13: #{mnist_net_forward.6} parent=0 // pred_fallthru
    _
  %v14 = vld [vmem:[%s0] sm:$0xff]
  %v15 = vld [vmem:[%s0 + $0x8] sm:$0xff]
  %v16 = vld [vmem:[%s0 + $0x10] sm:$0xff]
  %v17 = vld [vmem:[%s0 + $0x18] sm:$0xff]
  %v18 = vld [vmem:[%s0 + $0x20] sm:$0xff]
  %v19 = vld [vmem:[%s0 + $0x28] sm:$0xff]
  %v20 = vld [vmem:[%s0 + $0x30] sm:$0xff]
  %v21 = vld [vmem:[%s0 + $0x38] sm:$0xff]
  %v22 = vld [vmem:[%s0 + $0x40] sm:$0xff]
  %v23 = vld [vmem:[%s0 + $0x48] sm:$0xff]
  %v24 = vld [vmem:[%s0 + $0x50] sm:$0xff]
  %v25 = vld [vmem:[%s0 + $0x58] sm:$0xff]
  %v26 = vld [vmem:[%s0 + $0x60] sm:$0xff]
  %v27 = vld [vmem:[%s0 + $0x68] sm:$0xff]
  %v28 = vld [vmem:[%s0 + $0x70] sm:$0xff]
  %v29 = vld [vmem:[%s0 + $0x78] sm:$0xff]
  %v30 = vld [vmem:[%s0 + $0x80] sm:$0xff]
  %v31 = vld [vmem:[%s0 + $0x88] sm:$0xff]
  %v32 = vld [vmem:[%s0 + $0x90] sm:$0xff]
  %v33 = vld [vmem:[%s0 + $0x98] sm:$0xff]
  %v34 = vld [vmem:[%s0 + $0xa0] sm:$0xff]
  %v35 = vld [vmem:[%s0 + $0xa8] sm:$0xff]
  %v36 = vld [vmem:[%s0 + $0xb0] sm:$0xff]
  %v37 = vld [vmem:[%s0 + $0xb8] sm:$0xff]
  %v38 = vld [vmem:[%s0 + $0xc0] sm:$0xff]
  %v39 = vld [vmem:[%s0 + $0xc8] sm:$0xff]
  %v40 = vld [vmem:[%s0 + $0xd0] sm:$0xff]
  %v41 = vld [vmem:[%s0 + $0xd8] sm:$0xff]
  %v42 = vld [vmem:[%s0 + $0xe0] sm:$0xff]
  %v43 = vld [vmem:[%s0 + $0xe8] sm:$0xff]
  %v44 = vld [vmem:[%s0 + $0xf0] sm:$0xff]
  %v45 = vld [vmem:[%s0 + $0xf8] sm:$0xff]
  %v46 = vld [vmem:[%s0 + $0x100] sm:$0xff]
  %v47 = vld [vmem:[%s0 + $0x108] sm:$0xff]
  %v48 = vld [vmem:[%s0 + $0x110] sm:$0xff]
  %v49 = vld [vmem:[%s0 + $0x118] sm:$0xff]
  %v50 = vld [vmem:[%s0 + $0x120] sm:$0xff]
  %v51 = vld [vmem:[%s0 + $0x128] sm:$0xff]
  %v52 = vld [vmem:[%s0 + $0x130] sm:$0xff]
  %v53 = vld [vmem:[%s0 + $0x138] sm:$0xff]
  %v54 = vld [vmem:[%s0 + $0x140] sm:$0xff]
  %v55 = vld [vmem:[%s0 + $0x148] sm:$0xff]
  %v56 = vld [vmem:[%s0 + $0x150] sm:$0xff]
  %v57 = vld [vmem:[%s0 + $0x158] sm:$0xff]
  %v58 = vld [vmem:[%s0 + $0x160] sm:$0xff]
  %v59 = vld [vmem:[%s0 + $0x168] sm:$0xff]
  %v60 = vld [vmem:[%s0 + $0x170] sm:$0xff]
  %v61 = vld [vmem:[%s0 + $0x178] sm:$0xff]
  %v62 = vld [vmem:[%s0 + $0x180] sm:$0xff]
  %v63 = vld [vmem:[%s0 + $0x188] sm:$0xff]
  %v64 = vld [vmem:[%s0 + $0x190] sm:$0xff]
  %v65 = vld [vmem:[%s0 + $0x198] sm:$0xff]
  %v66 = vld [vmem:[%s0 + $0x1a0] sm:$0xff]
  %v67 = vld [vmem:[%s0 + $0x1a8] sm:$0xff]
  %v68 = vld [vmem:[%s0 + $0x1b0] sm:$0xff]
  %v69 = vld [vmem:[%s0 + $0x1b8] sm:$0xff]
  %v70 = vld [vmem:[%s0 + $0x1c0] sm:$0xff]
  %v71 = vld [vmem:[%s0 + $0x1c8] sm:$0xff]
  %v72 = vld [vmem:[%s0 + $0x1d0] sm:$0xff]
  %v73 = vld [vmem:[%s0 + $0x1d8] sm:$0xff]
  %v74 = vld [vmem:[%s0 + $0x1e0] sm:$0xff]
  %v75 = vld [vmem:[%s0 + $0x1e8] sm:$0xff]
  %v76 = vld [vmem:[%s0 + $0x1f0] sm:$0xff]
  %v77 = vld [vmem:[%s0 + $0x1f8] sm:$0xff]
  %v78 = vld [vmem:[%s1] sm:$0xff]
  %v79 = vld [vmem:[%s1 + $0x8] sm:$0xff]
  %v80 = vld [vmem:[%s1 + $0x10] sm:$0xff]
  %v81 = vld [vmem:[%s1 + $0x18] sm:$0xff]
  %v82 = vld [vmem:[%s1 + $0x20] sm:$0xff]
  %v83 = vld [vmem:[%s1 + $0x28] sm:$0xff]
  %v84 = vld [vmem:[%s1 + $0x30] sm:$0xff]
  %v85 = vld [vmem:[%s1 + $0x38] sm:$0xff]
  %v86 = vld [vmem:[%s1 + $0x40] sm:$0xff]
  %v87 = vld [vmem:[%s1 + $0x48] sm:$0xff]
  %v88 = vld [vmem:[%s1 + $0x50] sm:$0xff]
  %v89 = vld [vmem:[%s1 + $0x58] sm:$0xff]
  %v90 = vld [vmem:[%s1 + $0x60] sm:$0xff]
  %v91 = vld [vmem:[%s1 + $0x68] sm:$0xff]
  %v92 = vld [vmem:[%s1 + $0x70] sm:$0xff]
  %v93 = vld [vmem:[%s1 + $0x78] sm:$0xff]
  %v94 = vld [vmem:[%s1 + $0x80] sm:$0xff]
  %v95 = vld [vmem:[%s1 + $0x88] sm:$0xff]
  %v96 = vld [vmem:[%s1 + $0x90] sm:$0x3f]
  %vm97 = vcmask 179200
  %v99 = vsel %vm97, %v15, 0
  %v102 = vsel %vm97, %v17, 0
  %v105 = vsel %vm97, %v19, 0
  %v108 = vsel %vm97, %v21, 0
  %v111 = vsel %vm97, %v23, 0
  %v114 = vsel %vm97, %v25, 0
  %v117 = vsel %vm97, %v27, 0
  %v120 = vsel %vm97, %v29, 0
  %v123 = vsel %vm97, %v31, 0
  %v126 = vsel %vm97, %v33, 0
  %v129 = vsel %vm97, %v35, 0
  %v132 = vsel %vm97, %v37, 0
  %v135 = vsel %vm97, %v39, 0
  %v138 = vsel %vm97, %v41, 0
  %v141 = vsel %vm97, %v43, 0
  %v144 = vsel %vm97, %v45, 0
  %v147 = vsel %vm97, %v47, 0
  %v150 = vsel %vm97, %v49, 0
  %v153 = vsel %vm97, %v51, 0
  %v156 = vsel %vm97, %v53, 0
  %v159 = vsel %vm97, %v55, 0
  %v162 = vsel %vm97, %v57, 0
  %v165 = vsel %vm97, %v59, 0
  %v168 = vsel %vm97, %v61, 0
  %v171 = vsel %vm97, %v63, 0
  %v174 = vsel %vm97, %v65, 0
  %v177 = vsel %vm97, %v67, 0
  %v180 = vsel %vm97, %v69, 0
  %v183 = vsel %vm97, %v71, 0
  %v186 = vsel %vm97, %v73, 0
  %v189 = vsel %vm97, %v75, 0
  %v192 = vsel %vm97, %v77, 0
  %vm194 = vcmask 1045504
  %v196 = vsel %vm194, %v96, 0
  %198 = vmatpush.msra.mxu0 %v93
  %199 = vmatpush.msra.mxu0 %v92
  %200 = vmatpush.msra.mxu0 %v91
  %201 = vmatpush.msra.mxu0 %v90
  %202 = vmatpush.msra.mxu0 %v89
  %203 = vmatpush.msra.mxu0 %v88
  %204 = vmatpush.msra.mxu0 %v87
  %205 = vmatpush.msra.mxu0 %v86
  %206 = vmatpush.msra.mxu0 %v85
  %207 = vmatpush.msra.mxu0 %v84
  %208 = vmatpush.msra.mxu0 %v83
  %209 = vmatpush.msra.mxu0 %v82
  %210 = vmatpush.msra.mxu0 %v81
  %211 = vmatpush.msra.mxu0 %v80
  %212 = vmatpush.msra.mxu0 %v79
  %213 = vmatpush.msra.mxu0 %v78
  %214 = vmatmul.f32.gmra.mxu0 %v14
  %v215 = vpop.f32.mrf.mxu0
  %v216 = vadd.f32 0.0, %v215
  %217 = vmatmul.f32.gmra.mxu0 %v16
  %v218 = vpop.f32.mrf.mxu0
  %v219 = vadd.f32 0.0, %v218
  %220 = vmatmul.f32.gmra.mxu0 %v18
  %v221 = vpop.f32.mrf.mxu0
  %v222 = vadd.f32 0.0, %v221
  %223 = vmatmul.f32.gmra.mxu0 %v20
  %v224 = vpop.f32.mrf.mxu0
  %v225 = vadd.f32 0.0, %v224
  %226 = vmatmul.f32.gmra.mxu0 %v22
  %v227 = vpop.f32.mrf.mxu0
  %v228 = vadd.f32 0.0, %v227
  %229 = vmatmul.f32.gmra.mxu0 %v24
  %v230 = vpop.f32.mrf.mxu0
  %v231 = vadd.f32 0.0, %v230
  %232 = vmatmul.f32.gmra.mxu0 %v26
  %v233 = vpop.f32.mrf.mxu0
  %v234 = vadd.f32 0.0, %v233
  %235 = vmatmul.f32.gmra.mxu0 %v28
  %v236 = vpop.f32.mrf.mxu0
  %v237 = vadd.f32 0.0, %v236
  %238 = vmatmul.f32.gmra.mxu0 %v30
  %v239 = vpop.f32.mrf.mxu0
  %v240 = vadd.f32 0.0, %v239
  %241 = vmatmul.f32.gmra.mxu0 %v32
  %v242 = vpop.f32.mrf.mxu0
  %v243 = vadd.f32 0.0, %v242
  %244 = vmatmul.f32.gmra.mxu0 %v34
  %v245 = vpop.f32.mrf.mxu0
  %v246 = vadd.f32 0.0, %v245
  %247 = vmatmul.f32.gmra.mxu0 %v36
  %v248 = vpop.f32.mrf.mxu0
  %v249 = vadd.f32 0.0, %v248
  %250 = vmatmul.f32.gmra.mxu0 %v38
  %v251 = vpop.f32.mrf.mxu0
  %v252 = vadd.f32 0.0, %v251
  %253 = vmatmul.f32.gmra.mxu0 %v40
  %v254 = vpop.f32.mrf.mxu0
  %v255 = vadd.f32 0.0, %v254
  %256 = vmatmul.f32.gmra.mxu0 %v42
  %v257 = vpop.f32.mrf.mxu0
  %v258 = vadd.f32 0.0, %v257
  %259 = vmatmul.f32.gmra.mxu0 %v44
  %v260 = vpop.f32.mrf.mxu0
  %v261 = vadd.f32 0.0, %v260
  %262 = vmatmul.f32.gmra.mxu0 %v46
  %v263 = vpop.f32.mrf.mxu0
  %v264 = vadd.f32 0.0, %v263
  %265 = vmatmul.f32.gmra.mxu0 %v48
  %v266 = vpop.f32.mrf.mxu0
  %v267 = vadd.f32 0.0, %v266
  %268 = vmatmul.f32.gmra.mxu0 %v50
  %v269 = vpop.f32.mrf.mxu0
  %v270 = vadd.f32 0.0, %v269
  %271 = vmatmul.f32.gmra.mxu0 %v52
  %v272 = vpop.f32.mrf.mxu0
  %v273 = vadd.f32 0.0, %v272
  %274 = vmatmul.f32.gmra.mxu0 %v54
  %v275 = vpop.f32.mrf.mxu0
  %v276 = vadd.f32 0.0, %v275
  %277 = vmatmul.f32.gmra.mxu0 %v56
  %v278 = vpop.f32.mrf.mxu0
  %v279 = vadd.f32 0.0, %v278
  %280 = vmatmul.f32.gmra.mxu0 %v58
  %v281 = vpop.f32.mrf.mxu0
  %v282 = vadd.f32 0.0, %v281
  %283 = vmatmul.f32.gmra.mxu0 %v60
  %v284 = vpop.f32.mrf.mxu0
  %v285 = vadd.f32 0.0, %v284
  %286 = vmatmul.f32.gmra.mxu0 %v62
  %v287 = vpop.f32.mrf.mxu0
  %v288 = vadd.f32 0.0, %v287
  %289 = vmatmul.f32.gmra.mxu0 %v64
  %v290 = vpop.f32.mrf.mxu0
  %v291 = vadd.f32 0.0, %v290
  %292 = vmatmul.f32.gmra.mxu0 %v66
  %v293 = vpop.f32.mrf.mxu0
  %v294 = vadd.f32 0.0, %v293
  %295 = vmatmul.f32.gmra.mxu0 %v68
  %v296 = vpop.f32.mrf.mxu0
  %v297 = vadd.f32 0.0, %v296
  %298 = vmatmul.f32.gmra.mxu0 %v70
  %v299 = vpop.f32.mrf.mxu0
  %v300 = vadd.f32 0.0, %v299
  %301 = vmatmul.f32.gmra.mxu0 %v72
  %v302 = vpop.f32.mrf.mxu0
  %v303 = vadd.f32 0.0, %v302
  %304 = vmatmul.f32.gmra.mxu0 %v74
  %v305 = vpop.f32.mrf.mxu0
  %v306 = vadd.f32 0.0, %v305
  %307 = vmatmul.f32.gmra.mxu0 %v76
  %v308 = vpop.f32.mrf.mxu0
  %v309 = vadd.f32 0.0, %v308
  %310 = vdwg.mxu0
  %311 = vmatpush.msra.mxu0 0.0
  %312 = vmatpush.msra.mxu0 0.0
  %313 = vmatpush.msra.mxu0 0.0
  %314 = vmatpush.msra.mxu0 0.0
  %315 = vmatpush.msra.mxu0 0.0
  %316 = vmatpush.msra.mxu0 0.0
  %317 = vmatpush.msra.mxu0 0.0
  %318 = vmatpush.msra.mxu0 0.0
  %319 = vmatpush.msra.mxu0 0.0
  %320 = vmatpush.msra.mxu0 0.0
  %321 = vmatpush.msra.mxu0 0.0
  %322 = vmatpush.msra.mxu0 0.0
  %323 = vmatpush.msra.mxu0 0.0
  %324 = vmatpush.msra.mxu0 %v196
  %325 = vmatpush.msra.mxu0 %v95
  %326 = vmatpush.msra.mxu0 %v94
  %327 = vmatmul.f32.gmra.mxu0 %v99
  %v328 = vpop.f32.mrf.mxu0
  %v329 = vadd.f32 %v216, %v328
  %330 = vmatmul.f32.gmra.mxu0 %v102
  %v331 = vpop.f32.mrf.mxu0
  %v332 = vadd.f32 %v219, %v331
  %333 = vmatmul.f32.gmra.mxu0 %v105
  %v334 = vpop.f32.mrf.mxu0
  %v335 = vadd.f32 %v222, %v334
  %336 = vmatmul.f32.gmra.mxu0 %v108
  %v337 = vpop.f32.mrf.mxu0
  %v338 = vadd.f32 %v225, %v337
  %339 = vmatmul.f32.gmra.mxu0 %v111
  %v340 = vpop.f32.mrf.mxu0
  %v341 = vadd.f32 %v228, %v340
  %342 = vmatmul.f32.gmra.mxu0 %v114
  %v343 = vpop.f32.mrf.mxu0
  %v344 = vadd.f32 %v231, %v343
  %345 = vmatmul.f32.gmra.mxu0 %v117
  %v346 = vpop.f32.mrf.mxu0
  %v347 = vadd.f32 %v234, %v346
  %348 = vmatmul.f32.gmra.mxu0 %v120
  %v349 = vpop.f32.mrf.mxu0
  %v350 = vadd.f32 %v237, %v349
  %351 = vmatmul.f32.gmra.mxu0 %v123
  %v352 = vpop.f32.mrf.mxu0
  %v353 = vadd.f32 %v240, %v352
  %354 = vmatmul.f32.gmra.mxu0 %v126
  %v355 = vpop.f32.mrf.mxu0
  %v356 = vadd.f32 %v243, %v355
  %357 = vmatmul.f32.gmra.mxu0 %v129
  %v358 = vpop.f32.mrf.mxu0
  %v359 = vadd.f32 %v246, %v358
  %360 = vmatmul.f32.gmra.mxu0 %v132
  %v361 = vpop.f32.mrf.mxu0
  %v362 = vadd.f32 %v249, %v361
  %363 = vmatmul.f32.gmra.mxu0 %v135
  %v364 = vpop.f32.mrf.mxu0
  %v365 = vadd.f32 %v252, %v364
  %366 = vmatmul.f32.gmra.mxu0 %v138
  %v367 = vpop.f32.mrf.mxu0
  %v368 = vadd.f32 %v255, %v367
  %369 = vmatmul.f32.gmra.mxu0 %v141
  %v370 = vpop.f32.mrf.mxu0
  %v371 = vadd.f32 %v258, %v370
  %372 = vmatmul.f32.gmra.mxu0 %v144
  %v373 = vpop.f32.mrf.mxu0
  %v374 = vadd.f32 %v261, %v373
  %375 = vmatmul.f32.gmra.mxu0 %v147
  %v376 = vpop.f32.mrf.mxu0
  %v377 = vadd.f32 %v264, %v376
  %378 = vmatmul.f32.gmra.mxu0 %v150
  %v379 = vpop.f32.mrf.mxu0
  %v380 = vadd.f32 %v267, %v379
  %381 = vmatmul.f32.gmra.mxu0 %v153
  %v382 = vpop.f32.mrf.mxu0
  %v383 = vadd.f32 %v270, %v382
  %384 = vmatmul.f32.gmra.mxu0 %v156
  %v385 = vpop.f32.mrf.mxu0
  %v386 = vadd.f32 %v273, %v385
  %387 = vmatmul.f32.gmra.mxu0 %v159
  %v388 = vpop.f32.mrf.mxu0
  %v389 = vadd.f32 %v276, %v388
  %390 = vmatmul.f32.gmra.mxu0 %v162
  %v391 = vpop.f32.mrf.mxu0
  %v392 = vadd.f32 %v279, %v391
  %393 = vmatmul.f32.gmra.mxu0 %v165
  %v394 = vpop.f32.mrf.mxu0
  %v395 = vadd.f32 %v282, %v394
  %396 = vmatmul.f32.gmra.mxu0 %v168
  %v397 = vpop.f32.mrf.mxu0
  %v398 = vadd.f32 %v285, %v397
  %399 = vmatmul.f32.gmra.mxu0 %v171
  %v400 = vpop.f32.mrf.mxu0
  %v401 = vadd.f32 %v288, %v400
  %402 = vmatmul.f32.gmra.mxu0 %v174
  %v403 = vpop.f32.mrf.mxu0
  %v404 = vadd.f32 %v291, %v403
  %405 = vmatmul.f32.gmra.mxu0 %v177
  %v406 = vpop.f32.mrf.mxu0
  %v407 = vadd.f32 %v294, %v406
  %408 = vmatmul.f32.gmra.mxu0 %v180
  %v409 = vpop.f32.mrf.mxu0
  %v410 = vadd.f32 %v297, %v409
  %411 = vmatmul.f32.gmra.mxu0 %v183
  %v412 = vpop.f32.mrf.mxu0
  %v413 = vadd.f32 %v300, %v412
  %414 = vmatmul.f32.gmra.mxu0 %v186
  %v415 = vpop.f32.mrf.mxu0
  %v416 = vadd.f32 %v303, %v415
  %417 = vmatmul.f32.gmra.mxu0 %v189
  %v418 = vpop.f32.mrf.mxu0
  %v419 = vadd.f32 %v306, %v418
  %420 = vmatmul.f32.gmra.mxu0 %v192
  %v421 = vpop.f32.mrf.mxu0
  %v422 = vadd.f32 %v309, %v421
  %423 = vdwg.mxu0
  %v424 = vmax.f32 %v329, %v353
  %v425 = vmax.f32 %v332, %v356
  %v426 = vmax.f32 %v335, %v359
  %v427 = vmax.f32 %v338, %v362
  %v428 = vmax.f32 %v341, %v365
  %v429 = vmax.f32 %v344, %v368
  %v430 = vmax.f32 %v347, %v371
  %v431 = vmax.f32 %v350, %v374
  %v432 = vmax.f32 %v377, %v401
  %v433 = vmax.f32 %v380, %v404
  %v434 = vmax.f32 %v383, %v407
  %v435 = vmax.f32 %v386, %v410
  %v436 = vmax.f32 %v389, %v413
  %v437 = vmax.f32 %v392, %v416
  %v438 = vmax.f32 %v395, %v419
  %v439 = vmax.f32 %v398, %v422
  %v440 = vmax.f32 %v424, %v432
  %v441 = vmax.f32 %v425, %v433
  %v442 = vmax.f32 %v426, %v434
  %v443 = vmax.f32 %v427, %v435
  %v444 = vmax.f32 %v428, %v436
  %v445 = vmax.f32 %v429, %v437
  %v446 = vmax.f32 %v430, %v438
  %v447 = vmax.f32 %v431, %v439
  %v448 = vld [vmem:[%s2] sm:$0x1]
  %v450 = vperm.slane %v448, 0
  %v452 = vadd.f32 %v440, %v450
  %v453 = vadd.f32 %v441, %v450
  %v454 = vadd.f32 %v442, %v450
  %v455 = vadd.f32 %v443, %v450
  %v456 = vadd.f32 %v444, %v450
  %v457 = vadd.f32 %v445, %v450
  %v458 = vadd.f32 %v446, %v450
  %v459 = vadd.f32 %v447, %v450
  %v460 = vmax.f32 %v452, 0.0
  %v461 = vmax.f32 %v453, 0.0
  %v462 = vmax.f32 %v454, 0.0
  %v463 = vmax.f32 %v455, 0.0
  %v464 = vmax.f32 %v456, 0.0
  %v465 = vmax.f32 %v457, 0.0
  %v466 = vmax.f32 %v458, 0.0
  %v467 = vmax.f32 %v459, 0.0
  %vm468 = vcmask 130048
  %469 = vst.msk [vmem:[%s3] sm:$0xff] %vm468, %v460
  %470 = vst.msk [vmem:[%s3 + $0x8] sm:$0xff] %vm468, %v461
  %471 = vst.msk [vmem:[%s3 + $0x10] sm:$0xff] %vm468, %v462
  %472 = vst.msk [vmem:[%s3 + $0x18] sm:$0xff] %vm468, %v463
  %473 = vst.msk [vmem:[%s3 + $0x20] sm:$0xff] %vm468, %v464
  %474 = vst.msk [vmem:[%s3 + $0x28] sm:$0xff] %vm468, %v465
  %475 = vst.msk [vmem:[%s3 + $0x30] sm:$0xff] %vm468, %v466
  %476 = vst.msk [vmem:[%s3 + $0x38] sm:$0xff] %vm468, %v467
  // Predicated region
  $region14: #{mnist_net_forward.6} parent=0 // pred_check
    _
  $region15: #{mnist_net_forward.6} parent=0 // pred_check_branch
    %478 = sbr.rel (0) target = $region17
  $region16: #{mnist_net_forward.6} parent=0 // pred_region
    _
  $region17: #{mnist_net_forward.6} parent=0 // pred_fallthru
    _
  // Predicated region
  $region18: #{mnist_net_forward.6} parent=0 // pred_check
    _
  $region19: #{mnist_net_forward.6} parent=0 // pred_check_branch
    %480 = sbr.rel (0) target = $region21
  $region20: #{mnist_net_forward.6} parent=0 // pred_region
    _
  $region21: #{mnist_net_forward.6} parent=0 // pred_fallthru
    _

// kernel: mnist_net_forward.7
$region0: #{mnist_net_forward.7}
  #allocation0 [shape = 'u32[]', space=smem, size = 0x4, offset = 0x4, fixed_abs, tag = 'smem constant byte address 0x4 - core index']
  #allocation1 [shape = 'u32[72,128]{1,0:T(1,128)}', space=vmem, size = 0x9000, scoped, tag = 'internal scratch']
  %s0 = inlined_call_operand.vmem [shape: f32[4,256], index: 0, kind: input, shape index: {}]
  %s1 = inlined_call_operand.vmem [shape: f32[4,19], index: 1, kind: input, shape index: {}]
  %s2 = inlined_call_operand.vmem [shape: f32[4,1], index: 2, kind: input, shape index: {}]
  %s3 = inlined_call_operand.vmem [shape: f32[256,120], index: 3, kind: input, shape index: {}]
  %s4 = inlined_call_operand.vmem [shape: f32[1,120], index: 4, kind: input, shape index: {}]
  %s5 = inlined_call_operand.vmem [shape: f32[120,84], index: 5, kind: input, shape index: {}]
  %s6 = inlined_call_operand.vmem [shape: f32[1,84], index: 6, kind: input, shape index: {}]
  %s7 = inlined_call_operand.vmem [shape: f32[84,84], index: 7, kind: input, shape index: {}]
  %s8 = inlined_call_operand.vmem [shape: f32[1,84], index: 8, kind: input, shape index: {}]
  %s9 = inlined_call_operand.vmem [shape: f32[19,84], index: 9, kind: input, shape index: {}]
  %s10 = inlined_call_operand.vmem [shape: f32[84,19], index: 10, kind: input, shape index: {}]
  %s11 = inlined_call_operand.vmem [shape: f32[84,168], index: 11, kind: input, shape index: {}]
  %s12 = inlined_call_operand.vmem [shape: f32[84,168], index: 12, kind: input, shape index: {}]
  %s13 = inlined_call_operand.vmem [shape: f32[1,168], index: 13, kind: input, shape index: {}]
  %s14 = inlined_call_operand.vmem [shape: f32[168,84], index: 14, kind: input, shape index: {}]
  %s15 = inlined_call_operand.vmem [shape: f32[1,84], index: 15, kind: input, shape index: {}]
  %s16 = inlined_call_operand.hbm [shape: f32[2,19], index: 16, kind: output, shape index: {}]
  %s17 = sld [smem:[#allocation0]]
  $region74: #{mnist_net_forward.7} parent=0
    _
  %s19 = ssub.s32 1, %s17
  %s20 = scalar_select 0, %s19, %s17
  $region1: #{mnist_net_forward.7} parent=0
    #allocation2 [shape = 'u8[1024]{0}', space=vmem, size = 0x400, scoped, tag = 'output window, operand 0, single buffered']
    #allocation3 [shape = 's32[1]{0}', space=sflag, size = 0x4, scoped, tag = 'scoped memory for mnist_net_forward.7']
    %21 = vsyncpa [#allocation3], 0
    // Predicated region
    $region2: #{mnist_net_forward.7} parent=1 // pred_check
      _
    $region3: #{mnist_net_forward.7} parent=1 // pred_check_branch
      %23 = sbr.rel (0) target = $region5
    $region4: #{mnist_net_forward.7} parent=1 // pred_region
      _
    $region5: #{mnist_net_forward.7} parent=1 // pred_fallthru
      _
    // Predicated region
    $region6: #{mnist_net_forward.7} parent=1 // pred_check
      _
    $region7: #{mnist_net_forward.7} parent=1 // pred_check_branch
      %25 = sbr.rel (0) target = $region9
    $region8: #{mnist_net_forward.7} parent=1 // pred_region
      _
    $region9: #{mnist_net_forward.7} parent=1 // pred_fallthru
      _
    // Predicated region
    $region10: #{mnist_net_forward.7} parent=1 // pred_check
      _
    $region11: #{mnist_net_forward.7} parent=1 // pred_check_branch
      %27 = sbr.rel (0) target = $region13
    $region12: #{mnist_net_forward.7} parent=1 // pred_region
      _
    $region13: #{mnist_net_forward.7} parent=1 // pred_fallthru
      _
    // Predicated region
    $region14: #{mnist_net_forward.7} parent=1 // pred_check
      _
    $region15: #{mnist_net_forward.7} parent=1 // pred_check_branch
      %29 = sbr.rel (0) target = $region17
    $region16: #{mnist_net_forward.7} parent=1 // pred_region
      _
    $region17: #{mnist_net_forward.7} parent=1 // pred_fallthru
      _
    // Predicated region
    $region18: #{mnist_net_forward.7} parent=1 // pred_check
      _
    $region19: #{mnist_net_forward.7} parent=1 // pred_check_branch
      %31 = sbr.rel (0) target = $region21
    $region20: #{mnist_net_forward.7} parent=1 // pred_region
      _
    $region21: #{mnist_net_forward.7} parent=1 // pred_fallthru
      _
    // Predicated region
    $region22: #{mnist_net_forward.7} parent=1 // pred_check
      _
    $region23: #{mnist_net_forward.7} parent=1 // pred_check_branch
      %33 = sbr.rel (0) target = $region25
    $region24: #{mnist_net_forward.7} parent=1 // pred_region
      _
    $region25: #{mnist_net_forward.7} parent=1 // pred_fallthru
      _
    // Predicated region
    $region26: #{mnist_net_forward.7} parent=1 // pred_check
      _
    $region27: #{mnist_net_forward.7} parent=1 // pred_check_branch
      %35 = sbr.rel (0) target = $region29
    $region28: #{mnist_net_forward.7} parent=1 // pred_region
      _
    $region29: #{mnist_net_forward.7} parent=1 // pred_fallthru
      _
    // Predicated region
    $region30: #{mnist_net_forward.7} parent=1 // pred_check
      _
    $region31: #{mnist_net_forward.7} parent=1 // pred_check_branch
      %37 = sbr.rel (0) target = $region33
    $region32: #{mnist_net_forward.7} parent=1 // pred_region
      _
    $region33: #{mnist_net_forward.7} parent=1 // pred_fallthru
      _
    // Predicated region
    $region34: #{mnist_net_forward.7} parent=1 // pred_check
      _
    $region35: #{mnist_net_forward.7} parent=1 // pred_check_branch
      %39 = sbr.rel (0) target = $region37
    $region36: #{mnist_net_forward.7} parent=1 // pred_region
      _
    $region37: #{mnist_net_forward.7} parent=1 // pred_fallthru
      _
    // Predicated region
    $region38: #{mnist_net_forward.7} parent=1 // pred_check
      _
    $region39: #{mnist_net_forward.7} parent=1 // pred_check_branch
      %41 = sbr.rel (0) target = $region41
    $region40: #{mnist_net_forward.7} parent=1 // pred_region
      _
    $region41: #{mnist_net_forward.7} parent=1 // pred_fallthru
      _
    // Predicated region
    $region42: #{mnist_net_forward.7} parent=1 // pred_check
      _
    $region43: #{mnist_net_forward.7} parent=1 // pred_check_branch
      %43 = sbr.rel (0) target = $region45
    $region44: #{mnist_net_forward.7} parent=1 // pred_region
      _
    $region45: #{mnist_net_forward.7} parent=1 // pred_fallthru
      _
    // Predicated region
    $region46: #{mnist_net_forward.7} parent=1 // pred_check
      _
    $region47: #{mnist_net_forward.7} parent=1 // pred_check_branch
      %45 = sbr.rel (0) target = $region49
    $region48: #{mnist_net_forward.7} parent=1 // pred_region
      _
    $region49: #{mnist_net_forward.7} parent=1 // pred_fallthru
      _
    // Predicated region
    $region50: #{mnist_net_forward.7} parent=1 // pred_check
      _
    $region51: #{mnist_net_forward.7} parent=1 // pred_check_branch
      %47 = sbr.rel (0) target = $region53
    $region52: #{mnist_net_forward.7} parent=1 // pred_region
      _
    $region53: #{mnist_net_forward.7} parent=1 // pred_fallthru
      _
    // Predicated region
    $region54: #{mnist_net_forward.7} parent=1 // pred_check
      _
    $region55: #{mnist_net_forward.7} parent=1 // pred_check_branch
      %49 = sbr.rel (0) target = $region57
    $region56: #{mnist_net_forward.7} parent=1 // pred_region
      _
    $region57: #{mnist_net_forward.7} parent=1 // pred_fallthru
      _
    // Predicated region
    $region58: #{mnist_net_forward.7} parent=1 // pred_check
      _
    $region59: #{mnist_net_forward.7} parent=1 // pred_check_branch
      %51 = sbr.rel (0) target = $region61
    $region60: #{mnist_net_forward.7} parent=1 // pred_region
      _
    $region61: #{mnist_net_forward.7} parent=1 // pred_fallthru
      _
    // Predicated region
    $region62: #{mnist_net_forward.7} parent=1 // pred_check
      _
    $region63: #{mnist_net_forward.7} parent=1 // pred_check_branch
      %53 = sbr.rel (0) target = $region65
    $region64: #{mnist_net_forward.7} parent=1 // pred_region
      _
    $region65: #{mnist_net_forward.7} parent=1 // pred_fallthru
      _
    %v54 = vld [vmem:[%s0] sm:$0xff]
    %v55 = vld [vmem:[%s3] sm:$0xff]
    %v56 = vld [vmem:[%s3 + $0x8] sm:$0xff]
    %v57 = vld [vmem:[%s3 + $0x10] sm:$0xff]
    %v58 = vld [vmem:[%s3 + $0x18] sm:$0xff]
    %v59 = vld [vmem:[%s3 + $0x20] sm:$0xff]
    %v60 = vld [vmem:[%s3 + $0x28] sm:$0xff]
    %v61 = vld [vmem:[%s3 + $0x30] sm:$0xff]
    %v62 = vld [vmem:[%s3 + $0x38] sm:$0xff]
    %v63 = vld [vmem:[%s3 + $0x40] sm:$0xff]
    %v64 = vld [vmem:[%s3 + $0x48] sm:$0xff]
    %v65 = vld [vmem:[%s3 + $0x50] sm:$0xff]
    %v66 = vld [vmem:[%s3 + $0x58] sm:$0xff]
    %v67 = vld [vmem:[%s3 + $0x60] sm:$0xff]
    %v68 = vld [vmem:[%s3 + $0x68] sm:$0xff]
    %v69 = vld [vmem:[%s3 + $0x70] sm:$0xff]
    %v70 = vld [vmem:[%s3 + $0x78] sm:$0xff]
    %v71 = vld [vmem:[%s3 + $0x80] sm:$0xff]
    %v72 = vld [vmem:[%s3 + $0x88] sm:$0xff]
    %v73 = vld [vmem:[%s3 + $0x90] sm:$0xff]
    %v74 = vld [vmem:[%s3 + $0x98] sm:$0xff]
    %v75 = vld [vmem:[%s3 + $0xa0] sm:$0xff]
    %v76 = vld [vmem:[%s3 + $0xa8] sm:$0xff]
    %v77 = vld [vmem:[%s3 + $0xb0] sm:$0xff]
    %v78 = vld [vmem:[%s3 + $0xb8] sm:$0xff]
    %v79 = vld [vmem:[%s3 + $0xc0] sm:$0xff]
    %v80 = vld [vmem:[%s3 + $0xc8] sm:$0xff]
    %v81 = vld [vmem:[%s3 + $0xd0] sm:$0xff]
    %v82 = vld [vmem:[%s3 + $0xd8] sm:$0xff]
    %v83 = vld [vmem:[%s3 + $0xe0] sm:$0xff]
    %v84 = vld [vmem:[%s3 + $0xe8] sm:$0xff]
    %v85 = vld [vmem:[%s3 + $0xf0] sm:$0xff]
    %v86 = vld [vmem:[%s3 + $0xf8] sm:$0xff]
    %v87 = vld [vmem:[%s4] sm:$0x1]
    %v89 = vperm.slane %v87, 0
    %92 = vst [vmem:[#allocation1] ss:$2 sm:$0xff] %v54
    %v93 = vld.sshfl [vmem:[#allocation1] sm:$0xff pattern:$0x75316420]
    %v94 = vld.sshfl [vmem:[#allocation1 + $0x8] sm:$0xff pattern:$0x75316420]
    %97 = vmatpush.msra.mxu0 %v70
    %98 = vmatpush.msra.mxu0 %v69
    %99 = vmatpush.msra.mxu0 %v68
    %100 = vmatpush.msra.mxu0 %v67
    %101 = vmatpush.msra.mxu0 %v66
    %102 = vmatpush.msra.mxu0 %v65
    %103 = vmatpush.msra.mxu0 %v64
    %104 = vmatpush.msra.mxu0 %v63
    %105 = vmatpush.msra.mxu0 %v62
    %106 = vmatpush.msra.mxu0 %v61
    %107 = vmatpush.msra.mxu0 %v60
    %108 = vmatpush.msra.mxu0 %v59
    %109 = vmatpush.msra.mxu0 %v58
    %110 = vmatpush.msra.mxu0 %v57
    %111 = vmatpush.msra.mxu0 %v56
    %112 = vmatpush.msra.mxu0 %v55
    %113 = vmatmul.f32.gmra.mxu0 %v93
    %v114 = vpop.f32.mrf.mxu0
    %v115 = vadd.f32 %v89, %v114
    %116 = vdwg.mxu0
    %117 = vmatpush.msra.mxu0 %v86
    %118 = vmatpush.msra.mxu0 %v85
    %119 = vmatpush.msra.mxu0 %v84
    %120 = vmatpush.msra.mxu0 %v83
    %121 = vmatpush.msra.mxu0 %v82
    %122 = vmatpush.msra.mxu0 %v81
    %123 = vmatpush.msra.mxu0 %v80
    %124 = vmatpush.msra.mxu0 %v79
    %125 = vmatpush.msra.mxu0 %v78
    %126 = vmatpush.msra.mxu0 %v77
    %127 = vmatpush.msra.mxu0 %v76
    %128 = vmatpush.msra.mxu0 %v75
    %129 = vmatpush.msra.mxu0 %v74
    %130 = vmatpush.msra.mxu0 %v73
    %131 = vmatpush.msra.mxu0 %v72
    %132 = vmatpush.msra.mxu0 %v71
    %133 = vmatmul.f32.gmra.mxu0 %v94
    %v134 = vpop.f32.mrf.mxu0
    %v135 = vadd.f32 %v115, %v134
    %136 = vdwg.mxu0
    %v137 = vmax.f32 %v135, 0.0
    %v138 = vld [vmem:[%s5] sm:$0xff]
    %v139 = vld [vmem:[%s5 + $0x8] sm:$0xff]
    %v140 = vld [vmem:[%s5 + $0x10] sm:$0xff]
    %v141 = vld [vmem:[%s5 + $0x18] sm:$0xff]
    %v142 = vld [vmem:[%s5 + $0x20] sm:$0xff]
    %v143 = vld [vmem:[%s5 + $0x28] sm:$0xff]
    %v144 = vld [vmem:[%s5 + $0x30] sm:$0xff]
    %v145 = vld [vmem:[%s5 + $0x38] sm:$0xff]
    %v146 = vld [vmem:[%s5 + $0x40] sm:$0xff]
    %v147 = vld [vmem:[%s5 + $0x48] sm:$0xff]
    %v148 = vld [vmem:[%s5 + $0x50] sm:$0xff]
    %v149 = vld [vmem:[%s5 + $0x58] sm:$0xff]
    %v150 = vld [vmem:[%s5 + $0x60] sm:$0xff]
    %v151 = vld [vmem:[%s5 + $0x68] sm:$0xff]
    %v152 = vld [vmem:[%s5 + $0x70] sm:$0xff]
    %v153 = vld [vmem:[%s6] sm:$0x1]
    %v155 = vperm.slane %v153, 0
    %vm157 = vcmask 982016
    %v159 = vsel %vm157, %v137, 0
    %161 = vmatpush.msra.mxu0 0.0
    %162 = vmatpush.msra.mxu0 %v152
    %163 = vmatpush.msra.mxu0 %v151
    %164 = vmatpush.msra.mxu0 %v150
    %165 = vmatpush.msra.mxu0 %v149
    %166 = vmatpush.msra.mxu0 %v148
    %167 = vmatpush.msra.mxu0 %v147
    %168 = vmatpush.msra.mxu0 %v146
    %169 = vmatpush.msra.mxu0 %v145
    %170 = vmatpush.msra.mxu0 %v144
    %171 = vmatpush.msra.mxu0 %v143
    %172 = vmatpush.msra.mxu0 %v142
    %173 = vmatpush.msra.mxu0 %v141
    %174 = vmatpush.msra.mxu0 %v140
    %175 = vmatpush.msra.mxu0 %v139
    %176 = vmatpush.msra.mxu0 %v138
    %177 = vmatmul.f32.gmra.mxu0 %v159
    %v178 = vpop.f32.mrf.mxu0
    %v179 = vadd.f32 %v155, %v178
    %180 = vdwg.mxu0
    %v181 = vmax.f32 %v179, 0.0
    %v182 = vld [vmem:[%s7] sm:$0xff]
    %v183 = vld [vmem:[%s7 + $0x8] sm:$0xff]
    %v184 = vld [vmem:[%s7 + $0x10] sm:$0xff]
    %v185 = vld [vmem:[%s7 + $0x18] sm:$0xff]
    %v186 = vld [vmem:[%s7 + $0x20] sm:$0xff]
    %v187 = vld [vmem:[%s7 + $0x28] sm:$0xff]
    %v188 = vld [vmem:[%s7 + $0x30] sm:$0xff]
    %v189 = vld [vmem:[%s7 + $0x38] sm:$0xff]
    %v190 = vld [vmem:[%s7 + $0x40] sm:$0xff]
    %v191 = vld [vmem:[%s7 + $0x48] sm:$0xff]
    %v192 = vld [vmem:[%s7 + $0x50] sm:$0xf]
    %v193 = vld [vmem:[%s8] sm:$0x1]
    %v195 = vperm.slane %v193, 0
    %vm197 = vcmask 687104
    %v199 = vsel %vm197, %v181, 0
    %vm201 = vcmask 1043456
    %v203 = vsel %vm201, %v192, 0
    %205 = vmatpush.msra.mxu0 0.0
    %206 = vmatpush.msra.mxu0 0.0
    %207 = vmatpush.msra.mxu0 0.0
    %208 = vmatpush.msra.mxu0 0.0
    %209 = vmatpush.msra.mxu0 0.0
    %210 = vmatpush.msra.mxu0 %v203
    %211 = vmatpush.msra.mxu0 %v191
    %212 = vmatpush.msra.mxu0 %v190
    %213 = vmatpush.msra.mxu0 %v189
    %214 = vmatpush.msra.mxu0 %v188
    %215 = vmatpush.msra.mxu0 %v187
    %216 = vmatpush.msra.mxu0 %v186
    %217 = vmatpush.msra.mxu0 %v185
    %218 = vmatpush.msra.mxu0 %v184
    %219 = vmatpush.msra.mxu0 %v183
    %220 = vmatpush.msra.mxu0 %v182
    %221 = vmatmul.f32.gmra.mxu0 %v199
    %v222 = vpop.f32.mrf.mxu0
    %v223 = vadd.f32 %v195, %v222
    %224 = vdwg.mxu0
    %v225 = vld [vmem:[%s10] sm:$0xff]
    %v226 = vld [vmem:[%s10 + $0x8] sm:$0xff]
    %v227 = vld [vmem:[%s10 + $0x10] sm:$0xff]
    %v228 = vld [vmem:[%s10 + $0x18] sm:$0xff]
    %v229 = vld [vmem:[%s10 + $0x20] sm:$0xff]
    %v230 = vld [vmem:[%s10 + $0x28] sm:$0xff]
    %v231 = vld [vmem:[%s10 + $0x30] sm:$0xff]
    %v232 = vld [vmem:[%s10 + $0x38] sm:$0xff]
    %v233 = vld [vmem:[%s10 + $0x40] sm:$0xff]
    %v234 = vld [vmem:[%s10 + $0x48] sm:$0xff]
    %v235 = vld [vmem:[%s10 + $0x50] sm:$0xf]
    %v236 = vld [vmem:[%s1] sm:$0xf]
    %v238 = vsel %vm197, %v223, 0
    %v241 = vsel %vm201, %v235, 0
    %243 = vmatpush.msra.mxu0 0.0
    %244 = vmatpush.msra.mxu0 0.0
    %245 = vmatpush.msra.mxu0 0.0
    %246 = vmatpush.msra.mxu0 0.0
    %247 = vmatpush.msra.mxu0 0.0
    %248 = vmatpush.msra.mxu0 %v241
    %249 = vmatpush.msra.mxu0 %v234
    %250 = vmatpush.msra.mxu0 %v233
    %251 = vmatpush.msra.mxu0 %v232
    %252 = vmatpush.msra.mxu0 %v231
    %253 = vmatpush.msra.mxu0 %v230
    %254 = vmatpush.msra.mxu0 %v229
    %255 = vmatpush.msra.mxu0 %v228
    %256 = vmatpush.msra.mxu0 %v227
    %257 = vmatpush.msra.mxu0 %v226
    %258 = vmatpush.msra.mxu0 %v225
    %259 = vmatmul.f32.gmra.mxu0 %v238
    %v260 = vpop.f32.mrf.mxu0
    %v261 = vadd.f32 %v236, %v260
    %262 = vdwg.mxu0
    %vm263 = vcmask 150528
    %v264 = vsel %vm263, %v261, -inf
    %265 = vmax.xlane.f32.xlu0 %v264
    %v266 = vpop.xlane.xlu0 %265
    %v267 = vsub.f32 %v261, %v266
    %v268 = vmul.f32 %v267, 1.442695
    %v269 = vpow.pop %v268
    %v270 = vsel %vm263, %v269, 0.0
    %271 = vadd.xlane.f32.xlu0 %v270
    %v272 = vpop.xlane.xlu0 %271
    %v273 = vrcp.pop %v272
    %v274 = vmul.f32 %v272, %v273
    %v275 = vsub.f32 1.0, %v274
    %v276 = vmul.f32 %v273, %v275
    %v277 = vadd.f32 %v273, %v276
    %vm278 = vweird.f32 %v272
    %vm279 = vweird.f32 %v273
    %vm280 = vmor %vm278, %vm279
    %v281 = vsel %vm280, %v273, %v277
    %v282 = vand.u32 2147483647, %v272
    %vm283 = vcmp.eq.f32.partialorder %v282, 8.507059e+37
    %v284 = vand.u32 %v272, 2147483648
    %v285 = vor.u32 1.1754944e-38, %v284
    %v286 = vsel %vm283, %v285, %v281
    %v287 = vmul.f32 %v269, %v286
    %v288 = vld [vmem:[%s9] sm:$0xff]
    %v289 = vld [vmem:[%s9 + $0x8] sm:$0xff]
    %v290 = vld [vmem:[%s9 + $0x10] sm:$0x7]
    %vm291 = vcmask 154624
    %v293 = vsel %vm291, %v287, 0
    %vm295 = vcmask 1042432
    %v297 = vsel %vm295, %v290, 0
    %299 = vmatpush.msra.mxu0 0.0
    %300 = vmatpush.msra.mxu0 0.0
    %301 = vmatpush.msra.mxu0 0.0
    %302 = vmatpush.msra.mxu0 0.0
    %303 = vmatpush.msra.mxu0 0.0
    %304 = vmatpush.msra.mxu0 0.0
    %305 = vmatpush.msra.mxu0 0.0
    %306 = vmatpush.msra.mxu0 0.0
    %307 = vmatpush.msra.mxu0 0.0
    %308 = vmatpush.msra.mxu0 0.0
    %309 = vmatpush.msra.mxu0 0.0
    %310 = vmatpush.msra.mxu0 0.0
    %311 = vmatpush.msra.mxu0 0.0
    %312 = vmatpush.msra.mxu0 %v297
    %313 = vmatpush.msra.mxu0 %v289
    %314 = vmatpush.msra.mxu0 %v288
    %315 = vmatmul.f32.gmra.mxu0 %v293
    %v316 = vpop.f32.mrf.mxu0
    %v317 = vadd.f32 0.0, %v316
    %318 = vdwg.mxu0
    %v319 = vld [vmem:[%s2] sm:$0xf]
    %321 = vset.pattern.permute.xlu0 0
    %322 = vperm.xlu0 %321, %v319
    %v323 = vpop.permute.xlu0 %322
    %v325 = vmul.f32 %v323, %v223
    %v326 = vadd.f32 %v325, %v317
    %v327 = vld [vmem:[%s11] sm:$0xff]
    %v328 = vld [vmem:[%s11 + $0x8] sm:$0xff]
    %v329 = vld [vmem:[%s11 + $0x10] sm:$0xff]
    %v330 = vld [vmem:[%s11 + $0x18] sm:$0xff]
    %v331 = vld [vmem:[%s11 + $0x20] sm:$0xff]
    %v332 = vld [vmem:[%s11 + $0x28] sm:$0xff]
    %v333 = vld [vmem:[%s11 + $0x30] sm:$0xff]
    %v334 = vld [vmem:[%s11 + $0x38] sm:$0xff]
    %v335 = vld [vmem:[%s11 + $0x40] sm:$0xff]
    %v336 = vld [vmem:[%s11 + $0x48] sm:$0xff]
    %v337 = vld [vmem:[%s11 + $0x50] sm:$0xff]
    %v338 = vld [vmem:[%s11 + $0x58] sm:$0xff]
    %v339 = vld [vmem:[%s11 + $0x60] sm:$0xff]
    %v340 = vld [vmem:[%s11 + $0x68] sm:$0xff]
    %v341 = vld [vmem:[%s11 + $0x70] sm:$0xff]
    %v342 = vld [vmem:[%s11 + $0x78] sm:$0xff]
    %v343 = vld [vmem:[%s11 + $0x80] sm:$0xff]
    %v344 = vld [vmem:[%s11 + $0x88] sm:$0xff]
    %v345 = vld [vmem:[%s11 + $0x90] sm:$0xff]
    %v346 = vld [vmem:[%s11 + $0x98] sm:$0xff]
    %v347 = vld [vmem:[%s11 + $0xa0] sm:$0xf]
    %v348 = vld [vmem:[%s11 + $0xa8] sm:$0xf]
    %v349 = vld [vmem:[%s12] sm:$0xff]
    %v350 = vld [vmem:[%s12 + $0x8] sm:$0xff]
    %v351 = vld [vmem:[%s12 + $0x10] sm:$0xff]
    %v352 = vld [vmem:[%s12 + $0x18] sm:$0xff]
    %v353 = vld [vmem:[%s12 + $0x20] sm:$0xff]
    %v354 = vld [vmem:[%s12 + $0x28] sm:$0xff]
    %v355 = vld [vmem:[%s12 + $0x30] sm:$0xff]
    %v356 = vld [vmem:[%s12 + $0x38] sm:$0xff]
    %v357 = vld [vmem:[%s12 + $0x40] sm:$0xff]
    %v358 = vld [vmem:[%s12 + $0x48] sm:$0xff]
    %v359 = vld [vmem:[%s12 + $0x50] sm:$0xff]
    %v360 = vld [vmem:[%s12 + $0x58] sm:$0xff]
    %v361 = vld [vmem:[%s12 + $0x60] sm:$0xff]
    %v362 = vld [vmem:[%s12 + $0x68] sm:$0xff]
    %v363 = vld [vmem:[%s12 + $0x70] sm:$0xff]
    %v364 = vld [vmem:[%s12 + $0x78] sm:$0xff]
    %v365 = vld [vmem:[%s12 + $0x80] sm:$0xff]
    %v366 = vld [vmem:[%s12 + $0x88] sm:$0xff]
    %v367 = vld [vmem:[%s12 + $0x90] sm:$0xff]
    %v368 = vld [vmem:[%s12 + $0x98] sm:$0xff]
    %v369 = vld [vmem:[%s12 + $0xa0] sm:$0xf]
    %v370 = vld [vmem:[%s12 + $0xa8] sm:$0xf]
    %v372 = vrot.slane %v326, 2
    %v373 = vsel %vm197, %v372, 0
    %v376 = vsel %vm201, %v369, 0
    %v379 = vsel %vm201, %v370, 0
    %381 = vmatpush.msra.mxu0 0.0
    %382 = vmatpush.msra.mxu0 0.0
    %383 = vmatpush.msra.mxu0 0.0
    %384 = vmatpush.msra.mxu0 0.0
    %385 = vmatpush.msra.mxu0 0.0
    %386 = vmatpush.msra.mxu0 %v376
    %387 = vmatpush.msra.mxu0 %v367
    %388 = vmatpush.msra.mxu0 %v365
    %389 = vmatpush.msra.mxu0 %v363
    %390 = vmatpush.msra.mxu0 %v361
    %391 = vmatpush.msra.mxu0 %v359
    %392 = vmatpush.msra.mxu0 %v357
    %393 = vmatpush.msra.mxu0 %v355
    %394 = vmatpush.msra.mxu0 %v353
    %395 = vmatpush.msra.mxu0 %v351
    %396 = vmatpush.msra.mxu0 %v349
    %397 = vmatmul.f32.gmra.mxu0 %v373
    %v398 = vpop.f32.mrf.mxu0
    %v399 = vadd.f32 0.0, %v398
    %400 = vdwg.mxu0
    %401 = vmatpush.msra.mxu0 0.0
    %402 = vmatpush.msra.mxu0 0.0
    %403 = vmatpush.msra.mxu0 0.0
    %404 = vmatpush.msra.mxu0 0.0
    %405 = vmatpush.msra.mxu0 0.0
    %406 = vmatpush.msra.mxu0 %v379
    %407 = vmatpush.msra.mxu0 %v368
    %408 = vmatpush.msra.mxu0 %v366
    %409 = vmatpush.msra.mxu0 %v364
    %410 = vmatpush.msra.mxu0 %v362
    %411 = vmatpush.msra.mxu0 %v360
    %412 = vmatpush.msra.mxu0 %v358
    %413 = vmatpush.msra.mxu0 %v356
    %414 = vmatpush.msra.mxu0 %v354
    %415 = vmatpush.msra.mxu0 %v352
    %416 = vmatpush.msra.mxu0 %v350
    %417 = vmatmul.f32.gmra.mxu0 %v373
    %v418 = vpop.f32.mrf.mxu0
    %v419 = vadd.f32 0.0, %v418
    %420 = vdwg.mxu0
    %v421 = vsel %vm197, %v326, 0
    %v424 = vsel %vm201, %v347, 0
    %v427 = vsel %vm201, %v348, 0
    %429 = vmatpush.msra.mxu0 0.0
    %430 = vmatpush.msra.mxu0 0.0
    %431 = vmatpush.msra.mxu0 0.0
    %432 = vmatpush.msra.mxu0 0.0
    %433 = vmatpush.msra.mxu0 0.0
    %434 = vmatpush.msra.mxu0 %v424
    %435 = vmatpush.msra.mxu0 %v345
    %436 = vmatpush.msra.mxu0 %v343
    %437 = vmatpush.msra.mxu0 %v341
    %438 = vmatpush.msra.mxu0 %v339
    %439 = vmatpush.msra.mxu0 %v337
    %440 = vmatpush.msra.mxu0 %v335
    %441 = vmatpush.msra.mxu0 %v333
    %442 = vmatpush.msra.mxu0 %v331
    %443 = vmatpush.msra.mxu0 %v329
    %444 = vmatpush.msra.mxu0 %v327
    %445 = vmatmul.f32.gmra.mxu0 %v421
    %v446 = vpop.f32.mrf.mxu0
    %v447 = vadd.f32 %v399, %v446
    %448 = vdwg.mxu0
    %449 = vmatpush.msra.mxu0 0.0
    %450 = vmatpush.msra.mxu0 0.0
    %451 = vmatpush.msra.mxu0 0.0
    %452 = vmatpush.msra.mxu0 0.0
    %453 = vmatpush.msra.mxu0 0.0
    %454 = vmatpush.msra.mxu0 %v427
    %455 = vmatpush.msra.mxu0 %v346
    %456 = vmatpush.msra.mxu0 %v344
    %457 = vmatpush.msra.mxu0 %v342
    %458 = vmatpush.msra.mxu0 %v340
    %459 = vmatpush.msra.mxu0 %v338
    %460 = vmatpush.msra.mxu0 %v336
    %461 = vmatpush.msra.mxu0 %v334
    %462 = vmatpush.msra.mxu0 %v332
    %463 = vmatpush.msra.mxu0 %v330
    %464 = vmatpush.msra.mxu0 %v328
    %465 = vmatmul.f32.gmra.mxu0 %v421
    %v466 = vpop.f32.mrf.mxu0
    %v467 = vadd.f32 %v419, %v466
    %468 = vdwg.mxu0
    %v469 = vld [vmem:[%s13] sm:$0x3]
    %v471 = vperm.slane %v469, 0
    %v472 = vperm.slane %v469, 1
    %v475 = vadd.f32 %v447, %v471
    %v476 = vadd.f32 %v467, %v472
    %v477 = vmax.f32 %v475, 0.0
    %v478 = vmax.f32 %v476, 0.0
    %v479 = vld [vmem:[%s14] sm:$0xff]
    %v480 = vld [vmem:[%s14 + $0x8] sm:$0xff]
    %v481 = vld [vmem:[%s14 + $0x10] sm:$0xff]
    %v482 = vld [vmem:[%s14 + $0x18] sm:$0xff]
    %v483 = vld [vmem:[%s14 + $0x20] sm:$0xff]
    %v484 = vld [vmem:[%s14 + $0x28] sm:$0xff]
    %v485 = vld [vmem:[%s14 + $0x30] sm:$0xff]
    %v486 = vld [vmem:[%s14 + $0x38] sm:$0xff]
    %v487 = vld [vmem:[%s14 + $0x40] sm:$0xff]
    %v488 = vld [vmem:[%s14 + $0x48] sm:$0xff]
    %v489 = vld [vmem:[%s14 + $0x50] sm:$0xff]
    %v490 = vld [vmem:[%s14 + $0x58] sm:$0xff]
    %v491 = vld [vmem:[%s14 + $0x60] sm:$0xff]
    %v492 = vld [vmem:[%s14 + $0x68] sm:$0xff]
    %v493 = vld [vmem:[%s14 + $0x70] sm:$0xff]
    %v494 = vld [vmem:[%s14 + $0x78] sm:$0xff]
    %v495 = vld [vmem:[%s14 + $0x80] sm:$0xff]
    %v496 = vld [vmem:[%s14 + $0x88] sm:$0xff]
    %v497 = vld [vmem:[%s14 + $0x90] sm:$0xff]
    %v498 = vld [vmem:[%s14 + $0x98] sm:$0xff]
    %v499 = vld [vmem:[%s14 + $0xa0] sm:$0xff]
    %v500 = vld [vmem:[%s15] sm:$0x1]
    %v502 = vperm.slane %v500, 0
    %vm504 = vcmask 326656
    %v506 = vsel %vm504, %v478, 0
    %508 = vmatpush.msra.mxu0 %v494
    %509 = vmatpush.msra.mxu0 %v493
    %510 = vmatpush.msra.mxu0 %v492
    %511 = vmatpush.msra.mxu0 %v491
    %512 = vmatpush.msra.mxu0 %v490
    %513 = vmatpush.msra.mxu0 %v489
    %514 = vmatpush.msra.mxu0 %v488
    %515 = vmatpush.msra.mxu0 %v487
    %516 = vmatpush.msra.mxu0 %v486
    %517 = vmatpush.msra.mxu0 %v485
    %518 = vmatpush.msra.mxu0 %v484
    %519 = vmatpush.msra.mxu0 %v483
    %520 = vmatpush.msra.mxu0 %v482
    %521 = vmatpush.msra.mxu0 %v481
    %522 = vmatpush.msra.mxu0 %v480
    %523 = vmatpush.msra.mxu0 %v479
    %524 = vmatmul.f32.gmra.mxu0 %v477
    %v525 = vpop.f32.mrf.mxu0
    %v526 = vadd.f32 %v502, %v525
    %527 = vdwg.mxu0
    %528 = vmatpush.msra.mxu0 0.0
    %529 = vmatpush.msra.mxu0 0.0
    %530 = vmatpush.msra.mxu0 0.0
    %531 = vmatpush.msra.mxu0 0.0
    %532 = vmatpush.msra.mxu0 0.0
    %533 = vmatpush.msra.mxu0 0.0
    %534 = vmatpush.msra.mxu0 0.0
    %535 = vmatpush.msra.mxu0 0.0
    %536 = vmatpush.msra.mxu0 0.0
    %537 = vmatpush.msra.mxu0 0.0
    %538 = vmatpush.msra.mxu0 0.0
    %539 = vmatpush.msra.mxu0 %v499
    %540 = vmatpush.msra.mxu0 %v498
    %541 = vmatpush.msra.mxu0 %v497
    %542 = vmatpush.msra.mxu0 %v496
    %543 = vmatpush.msra.mxu0 %v495
    %544 = vmatmul.f32.gmra.mxu0 %v506
    %v545 = vpop.f32.mrf.mxu0
    %v546 = vadd.f32 %v526, %v545
    %547 = vdwg.mxu0
    %v548 = vmax.f32 %v546, 0.0
    %v550 = vsel %vm197, %v548, 0
    %552 = vmatpush.msra.mxu0 0.0
    %553 = vmatpush.msra.mxu0 0.0
    %554 = vmatpush.msra.mxu0 0.0
    %555 = vmatpush.msra.mxu0 0.0
    %556 = vmatpush.msra.mxu0 0.0
    %557 = vmatpush.msra.mxu0 %v241
    %558 = vmatpush.msra.mxu0 %v234
    %559 = vmatpush.msra.mxu0 %v233
    %560 = vmatpush.msra.mxu0 %v232
    %561 = vmatpush.msra.mxu0 %v231
    %562 = vmatpush.msra.mxu0 %v230
    %563 = vmatpush.msra.mxu0 %v229
    %564 = vmatpush.msra.mxu0 %v228
    %565 = vmatpush.msra.mxu0 %v227
    %566 = vmatpush.msra.mxu0 %v226
    %567 = vmatpush.msra.mxu0 %v225
    %568 = vmatmul.f32.gmra.mxu0 %v550
    %v569 = vpop.f32.mrf.mxu0
    %v570 = vadd.f32 0.0, %v569
    %571 = vdwg.mxu0
    %vm572 = vcmask 148480
    %v573 = vsel %vm572, %v570, -inf
    %574 = vmax.xlane.f32.xlu0 %v573
    %v575 = vpop.xlane.xlu0 %574
    %v576 = vsub.f32 %v570, %v575
    %v577 = vmul.f32 %v576, 1.442695
    %v578 = vpow.pop %v577
    %v579 = vsel %vm572, %v578, 0.0
    %580 = vadd.xlane.f32.xlu0 %v579
    %v581 = vpop.xlane.xlu0 %580
    %v582 = vlog2.pop %v581
    %v583 = vmul.f32 %v582, 0.6931472
    %v584 = vsub.f32 %v576, %v583
    %585 = vst.msk [vmem:[#allocation2] sm:$0x3] %vm572, %v584
    // Predicated region
    $region66: #{mnist_net_forward.7} parent=1 // pred_check
      _
    $region67: #{mnist_net_forward.7} parent=1 // pred_check_branch
      %587 = sbr.rel (0) target = $region69
    $region68: #{mnist_net_forward.7} parent=1 // pred_region
      %589 = vsyncadd [#allocation3], 0
      %s591 = sshll.u32 [#allocation2], 4
      %s592 = int_to_ptr.vmem [resolvable:$true] %s591
      %s593 = sshll.u32 %s16, 4
      %s594 = int_to_ptr.hbm [resolvable:$true] %s593
      %596 = dma.vmem_to_hbm [thread:$0]  %s592, 32, %s594, [#allocation3]
    $region69: #{mnist_net_forward.7} parent=1 // pred_fallthru
      _
    // Predicated region
    $region70: #{mnist_net_forward.7} parent=1 // pred_check
      _
    $region71: #{mnist_net_forward.7} parent=1 // pred_check_branch
      %598 = sbr.rel (0) target = $region73
    $region72: #{mnist_net_forward.7} parent=1 // pred_region
      %600 = dma.done [#allocation3], 32
    $region73: #{mnist_net_forward.7} parent=1 // pred_fallthru
      _
    %601 = vsyncpa [#allocation3], 1

</llo_original>
